<compile_context>
chip_gen: v7x
topology: tpu7x:2x2x1
jax: 0.10.0
libtpu: 0.0.40
codegen_flags: <defaults>
</compile_context>

<pallas_src>
import functools

import jax
import jax.numpy as jnp
from jax import lax
from jax.experimental import pallas as pl
from jax.experimental.pallas import tpu as pltpu


# ---------------------------------------------------------------------------
# Pallas kernel: all heads of one (group, batch) attention computation
# ---------------------------------------------------------------------------
def _mhsa_group_batch_kernel(x_ref, wqkv_ref, bqkv_ref, pos_ref, o_ref, *,
                             heads, d):
    # x_ref   : (1, 1, Ch, HW)  channel-first activations (one group, one batch)
    # wqkv_ref: (1, 3*Ch, Ch)   fused [Wq; Wk; Wv] 1x1-conv weights for this group
    # bqkv_ref: (1, 3*Ch, 1)    fused [bq; bk; bv] biases
    # pos_ref : (1, Ch, HW)     (rel_h + rel_w), heads stacked along rows
    # o_ref   : (1, 1, Ch, HW)  output block (channel-first, lane-dense)
    ch = heads * d
    x = x_ref[0, 0]                      # (Ch, HW)
    wqkv = wqkv_ref[0]                   # (3Ch, Ch)
    bqkv = bqkv_ref[0]                   # (3Ch, 1)
    pos = pos_ref[0]                     # (Ch, HW)

    # Fused Q/K/V projection: one MXU matmul (1x1 conv == matmul over channels)
    qkv = lax.dot_general(wqkv, x, (((1,), (0,)), ((), ())),
                          preferred_element_type=jnp.float32) + bqkv   # (3Ch, HW)

    dn_energy = (((0,), (0,)), ((), ()))    # contract the (2d) depth axis
    dn_out = (((1,), (1,)), ((), ()))       # contract the HW (key) axis

    outs = []
    for h in range(heads):                  # heads fused: static unrolled loop
        lo = h * d
        q_h = qkv[lo:lo + d]                        # (d, HW)
        k_h = qkv[ch + lo:ch + lo + d]              # (d, HW)
        v_h = qkv[2 * ch + lo:2 * ch + lo + d]      # (d, HW)
        pos_h = pos[lo:lo + d]                      # (d, HW)

        # energy[p, q] = <q_h[:,p], k_h[:,q]> + <pos_h[:,p], q_h[:,q]>
        # -> a single depth-2d contraction (cc and cp fused in one MXU op).
        lhs = jnp.concatenate([q_h, pos_h], axis=0)   # (2d, HW)
        rhs = jnp.concatenate([k_h, q_h], axis=0)     # (2d, HW)
        energy = lax.dot_general(lhs, rhs, dn_energy,
                                 preferred_element_type=jnp.float32)   # (HW, HW)

        # numerically stable softmax over keys, f32 math (EUP exp + approx vrcp)
        m = jnp.max(energy, axis=-1, keepdims=True)
        p = jnp.exp(energy - m)
        att = p * pl.reciprocal(jnp.sum(p, axis=-1, keepdims=True), approx=True)

        # out_h[c, p] = sum_q v_h[c, q] * att[p, q]
        outs.append(lax.dot_general(v_h, att, dn_out,
                                    preferred_element_type=jnp.float32))  # (d, HW)

    # single full-tile, lane-dense (Ch, HW) store
    o_ref[0, 0] = jnp.concatenate(outs, axis=0).astype(o_ref.dtype)


# ---------------------------------------------------------------------------
# Wrapper: parameter fusion + pallas_call (no layout transposes around kernel)
# ---------------------------------------------------------------------------
def mhsa_2g_forward(x, params):
    """x: (B, C, W, H) float32 NCHW; params: dict from make_params."""
    B, C, W, H = x.shape
    heads = params["heads"]
    Ch = C // 2
    d = Ch // heads
    HW = W * H

    # Channel-first lane-dense layout: pure reshape of NCHW, no transpose.
    xg = x.reshape(B, 2, Ch, HW).astype(jnp.float32)           # (B, 2, Ch, HW)

    # Fuse Q/K/V weights & biases (constant-folded under jit since params are
    # closed-over constants).
    wqkv = jnp.concatenate([params["wq"], params["wk"], params["wv"]], axis=1)  # (2, 3Ch, Ch)
    bqkv = jnp.concatenate([params["bq"], params["bk"], params["bv"]], axis=1)  # (2, 3Ch)
    bqkv = bqkv.reshape(2, 3 * Ch, 1)

    # (rel_h + rel_w) -> (2, heads, d, W, H) -> (2, Ch, HW)  (free reshape)
    pos = (params["rel_h"] + params["rel_w"]).reshape(2, Ch, HW)

    kernel = functools.partial(_mhsa_group_batch_kernel, heads=heads, d=d)

    out = pl.pallas_call(
        kernel,
        out_shape=jax.ShapeDtypeStruct((B, 2, Ch, HW), jnp.float32),
        grid=(2, B),  # group leads (maps to v7x's 2 TCs); batch innermost so
                      # per-group weight/pos blocks stay resident across B.
        in_specs=[
            pl.BlockSpec((1, 1, Ch, HW), lambda g, b: (b, g, 0, 0)),   # x
            pl.BlockSpec((1, 3 * Ch, Ch), lambda g, b: (g, 0, 0)),     # wqkv
            pl.BlockSpec((1, 3 * Ch, 1), lambda g, b: (g, 0, 0)),      # bqkv
            pl.BlockSpec((1, Ch, HW), lambda g, b: (g, 0, 0)),         # pos
        ],
        out_specs=pl.BlockSpec((1, 1, Ch, HW), lambda g, b: (b, g, 0, 0)),
        compiler_params=pltpu.CompilerParams(
            dimension_semantics=("parallel", "parallel")),
    )(xg, wqkv, bqkv, pos)

    # (B, 2, Ch, HW) -> (B, C, W, H): pure reshape, groups already concatenated
    # in channel order (group 0 = channels [0, Ch), group 1 = [Ch, 2Ch)).
    return out.reshape(B, C, W, H)


# ---------------------------------------------------------------------------
# Deterministic synthetic parameters (shapes per MHSA_2G.__init__)
# ---------------------------------------------------------------------------
def make_params(key, c_out, resolution, heads):
    Ch = c_out // 2
    d = Ch // heads
    W, H = resolution
    ks = jax.random.split(key, 8)
    scale = 1.0 / jnp.sqrt(Ch)
    return {
        "heads": heads,
        # stacked over the two MHSA groups (index 0 = MHSA_1, 1 = MHSA_2)
        "wq": scale * jax.random.normal(ks[0], (2, Ch, Ch), jnp.float32),
        "wk": scale * jax.random.normal(ks[1], (2, Ch, Ch), jnp.float32),
        "wv": scale * jax.random.normal(ks[2], (2, Ch, Ch), jnp.float32),
        "bq": 0.1 * jax.random.normal(ks[3], (2, Ch), jnp.float32),
        "bk": 0.1 * jax.random.normal(ks[4], (2, Ch), jnp.float32),
        "bv": 0.1 * jax.random.normal(ks[5], (2, Ch), jnp.float32),
        "rel_h": jax.random.normal(ks[6], (2, heads, d, 1, H), jnp.float32),
        "rel_w": jax.random.normal(ks[7], (2, heads, d, W, 1), jnp.float32),
    }


# ---------------------------------------------------------------------------
# Pure-JAX reference (mirrors the PyTorch forward) for verification
# ---------------------------------------------------------------------------
def _mhsa_ref_group(x_g, wq, bq, wk, bk, wv, bv, rel_h, rel_w, heads):
    B, C, W, H = x_g.shape
    d = C // heads
    HW = W * H

    def conv1x1(x, w, b):
        return jnp.einsum("oc,bcwh->bowh", w, x) + b[None, :, None, None]

    q = conv1x1(x_g, wq, bq).reshape(B, heads, d, HW)
    k = conv1x1(x_g, wk, bk).reshape(B, heads, d, HW)
    v = conv1x1(x_g, wv, bv).reshape(B, heads, d, HW)
    cc = jnp.einsum("bhdp,bhdq->bhpq", q, k)
    pos = (rel_h + rel_w).reshape(heads, d, HW)
    cp = jnp.einsum("hdp,bhdq->bhpq", pos, q)
    att = jax.nn.softmax(cc + cp, axis=-1)
    out = jnp.einsum("bhdq,bhpq->bhdp", v, att)
    return out.reshape(B, C, W, H)


def mhsa_2g_ref(x, params):
    C = x.shape[1]
    Ch = C // 2
    outs = []
    for g, xs in enumerate([x[:, :Ch], x[:, Ch:]]):
        outs.append(_mhsa_ref_group(
            xs, params["wq"][g], params["bq"][g], params["wk"][g], params["bk"][g],
            params["wv"][g], params["bv"][g], params["rel_h"][g], params["rel_w"][g],
            params["heads"]))
    return jnp.concatenate(outs, axis=1)


if __name__ == "__main__":
    B, c_out, heads = 2, 16, 4
    resolution = (16, 16)           # MHSA requires spatial == resolution
    key = jax.random.PRNGKey(0)
    kx, kp = jax.random.split(key)

    x = jax.random.normal(kx, (B, c_out, resolution[0], resolution[1]), jnp.float32)
    params = make_params(kp, c_out, resolution, heads)

    fwd = jax.jit(functools.partial(mhsa_2g_forward, params=params))
    out = jax.block_until_ready(fwd(x))

    ref = jax.block_until_ready(mhsa_2g_ref(x, params))
    assert out.shape == (B, c_out, resolution[0], resolution[1])
    # 1e-3 tolerance: matmul/softmax math is f32; the only approximation vs the
    # reference is pl.reciprocal(approx=True) (~2^-12 relative on the softmax
    # denominator), which real bugs would exceed by orders of magnitude.
    if not jnp.allclose(out, ref, rtol=1e-3, atol=1e-3):
        raise AssertionError("Pallas kernel output mismatch vs JAX reference")

    print("KERNEL_OK")
</pallas_src>

<mosaic_0001>
module attributes {stable_mosaic.version = 11 : i64} {
  func.func @_mhsa_group_batch_kernel(%arg0: i32, %arg1: i32, %arg2: memref<1x1x8x256xf32, #tpu.memory_space<vmem>>, %arg3: memref<1x24x8xf32, #tpu.memory_space<vmem>>, %arg4: memref<1x24x1xf32, #tpu.memory_space<vmem>>, %arg5: memref<1x8x256xf32, #tpu.memory_space<vmem>>, %arg6: memref<1x1x8x256xf32, #tpu.memory_space<vmem>>) attributes {dimension_semantics = [#tpu.dimension_semantics<parallel>, #tpu.dimension_semantics<parallel>], iteration_bounds = array<i64: 2, 2>, scalar_prefetch = 0 : i64, scratch_operands = 0 : i64, tpu.core_type = #tpu.core_type<tc>, window_params = [{transform_indices = @transform_0, window_bounds = array<i64: 1, 1, 8, 256>}, {transform_indices = @transform_1, window_bounds = array<i64: 1, 24, 8>}, {transform_indices = @transform_2, window_bounds = array<i64: 1, 24, 1>}, {transform_indices = @transform_3, window_bounds = array<i64: 1, 8, 256>}, {transform_indices = @transform_4, window_bounds = array<i64: 1, 1, 8, 256>}]} {
    %c0 = arith.constant 0 : index
    %c0_0 = arith.constant 0 : index
    %c0_1 = arith.constant 0 : index
    %c0_2 = arith.constant 0 : index
    %0 = vector.load %arg2[%c0, %c0_0, %c0_1, %c0_2] : memref<1x1x8x256xf32, #tpu.memory_space<vmem>>, vector<1x1x8x256xf32>
    %1 = vector.shape_cast %0 : vector<1x1x8x256xf32> to vector<8x256xf32>
    %c0_3 = arith.constant 0 : index
    %c0_4 = arith.constant 0 : index
    %c0_5 = arith.constant 0 : index
    %2 = vector.load %arg3[%c0_3, %c0_4, %c0_5] : memref<1x24x8xf32, #tpu.memory_space<vmem>>, vector<1x24x8xf32>
    %3 = vector.shape_cast %2 : vector<1x24x8xf32> to vector<24x8xf32>
    %c0_6 = arith.constant 0 : index
    %c0_7 = arith.constant 0 : index
    %c0_8 = arith.constant 0 : index
    %4 = vector.load %arg4[%c0_6, %c0_7, %c0_8] : memref<1x24x1xf32, #tpu.memory_space<vmem>>, vector<1x24x1xf32>
    %5 = vector.shape_cast %4 : vector<1x24x1xf32> to vector<24x1xf32>
    %c0_9 = arith.constant 0 : index
    %c0_10 = arith.constant 0 : index
    %c0_11 = arith.constant 0 : index
    %6 = vector.load %arg5[%c0_9, %c0_10, %c0_11] : memref<1x8x256xf32, #tpu.memory_space<vmem>>, vector<1x8x256xf32>
    %7 = vector.shape_cast %6 : vector<1x8x256xf32> to vector<8x256xf32>
    %cst = arith.constant dense<0.000000e+00> : vector<24x256xf32>
    %8 = tpu.matmul %3, %1, %cst {dimension_numbers = #tpu.dot_dimension_numbers<[1], [0], [0], [1], [0, 0, 1, 1], [], []>} : vector<24x8xf32>, vector<8x256xf32>, vector<24x256xf32> -> vector<24x256xf32>
    %9 = vector.broadcast %5 : vector<24x1xf32> to vector<24x256xf32>
    %10 = arith.addf %8, %9 : vector<24x256xf32>
    %11 = vector.extract_strided_slice %10 {offsets = [0, 0], sizes = [2, 256], strides = [1, 1]} : vector<24x256xf32> to vector<2x256xf32>
    %12 = vector.extract_strided_slice %10 {offsets = [8, 0], sizes = [2, 256], strides = [1, 1]} : vector<24x256xf32> to vector<2x256xf32>
    %13 = vector.extract_strided_slice %10 {offsets = [16, 0], sizes = [2, 256], strides = [1, 1]} : vector<24x256xf32> to vector<2x256xf32>
    %14 = vector.extract_strided_slice %7 {offsets = [0, 0], sizes = [2, 256], strides = [1, 1]} : vector<8x256xf32> to vector<2x256xf32>
    %15 = tpu.concatenate %11, %14 in 0 : vector<2x256xf32>, vector<2x256xf32> -> vector<4x256xf32>
    %16 = tpu.concatenate %12, %11 in 0 : vector<2x256xf32>, vector<2x256xf32> -> vector<4x256xf32>
    %cst_12 = arith.constant dense<0.000000e+00> : vector<256x256xf32>
    %17 = tpu.matmul %15, %16, %cst_12 {dimension_numbers = #tpu.dot_dimension_numbers<[0], [0], [1], [1], [0, 1, 1, 1], [], []>} : vector<4x256xf32>, vector<4x256xf32>, vector<256x256xf32> -> vector<256x256xf32>
    %cst_13 = arith.constant dense<0xFF800000> : vector<256xf32>
    %18 = vector.multi_reduction <maximumf>, %17, %cst_13 [1] : vector<256x256xf32> to vector<256xf32>
    %19 = vector.shape_cast %18 : vector<256xf32> to vector<256x1xf32>
    %20 = vector.broadcast %19 : vector<256x1xf32> to vector<256x256xf32>
    %21 = arith.subf %17, %20 : vector<256x256xf32>
    %22 = math.exp %21 : vector<256x256xf32>
    %cst_14 = arith.constant dense<0.000000e+00> : vector<256xf32>
    %23 = vector.multi_reduction <add>, %22, %cst_14 [1] : vector<256x256xf32> to vector<256xf32>
    %24 = vector.shape_cast %23 : vector<256xf32> to vector<256x1xf32>
    %25 = tpu.reciprocal %24 {approx = true} : vector<256x1xf32> -> vector<256x1xf32>
    %26 = vector.broadcast %25 : vector<256x1xf32> to vector<256x256xf32>
    %27 = arith.mulf %22, %26 : vector<256x256xf32>
    %cst_15 = arith.constant dense<0.000000e+00> : vector<2x256xf32>
    %28 = tpu.matmul %13, %27, %cst_15 {dimension_numbers = #tpu.dot_dimension_numbers<[1], [1], [0], [0], [0, 0, 1, 0], [], []>} : vector<2x256xf32>, vector<256x256xf32>, vector<2x256xf32> -> vector<2x256xf32>
    %29 = vector.extract_strided_slice %10 {offsets = [2, 0], sizes = [2, 256], strides = [1, 1]} : vector<24x256xf32> to vector<2x256xf32>
    %30 = vector.extract_strided_slice %10 {offsets = [10, 0], sizes = [2, 256], strides = [1, 1]} : vector<24x256xf32> to vector<2x256xf32>
    %31 = vector.extract_strided_slice %10 {offsets = [18, 0], sizes = [2, 256], strides = [1, 1]} : vector<24x256xf32> to vector<2x256xf32>
    %32 = vector.extract_strided_slice %7 {offsets = [2, 0], sizes = [2, 256], strides = [1, 1]} : vector<8x256xf32> to vector<2x256xf32>
    %33 = tpu.concatenate %29, %32 in 0 : vector<2x256xf32>, vector<2x256xf32> -> vector<4x256xf32>
    %34 = tpu.concatenate %30, %29 in 0 : vector<2x256xf32>, vector<2x256xf32> -> vector<4x256xf32>
    %cst_16 = arith.constant dense<0.000000e+00> : vector<256x256xf32>
    %35 = tpu.matmul %33, %34, %cst_16 {dimension_numbers = #tpu.dot_dimension_numbers<[0], [0], [1], [1], [0, 1, 1, 1], [], []>} : vector<4x256xf32>, vector<4x256xf32>, vector<256x256xf32> -> vector<256x256xf32>
    %cst_17 = arith.constant dense<0xFF800000> : vector<256xf32>
    %36 = vector.multi_reduction <maximumf>, %35, %cst_17 [1] : vector<256x256xf32> to vector<256xf32>
    %37 = vector.shape_cast %36 : vector<256xf32> to vector<256x1xf32>
    %38 = vector.broadcast %37 : vector<256x1xf32> to vector<256x256xf32>
    %39 = arith.subf %35, %38 : vector<256x256xf32>
    %40 = math.exp %39 : vector<256x256xf32>
    %cst_18 = arith.constant dense<0.000000e+00> : vector<256xf32>
    %41 = vector.multi_reduction <add>, %40, %cst_18 [1] : vector<256x256xf32> to vector<256xf32>
    %42 = vector.shape_cast %41 : vector<256xf32> to vector<256x1xf32>
    %43 = tpu.reciprocal %42 {approx = true} : vector<256x1xf32> -> vector<256x1xf32>
    %44 = vector.broadcast %43 : vector<256x1xf32> to vector<256x256xf32>
    %45 = arith.mulf %40, %44 : vector<256x256xf32>
    %cst_19 = arith.constant dense<0.000000e+00> : vector<2x256xf32>
    %46 = tpu.matmul %31, %45, %cst_19 {dimension_numbers = #tpu.dot_dimension_numbers<[1], [1], [0], [0], [0, 0, 1, 0], [], []>} : vector<2x256xf32>, vector<256x256xf32>, vector<2x256xf32> -> vector<2x256xf32>
    %47 = vector.extract_strided_slice %10 {offsets = [4, 0], sizes = [2, 256], strides = [1, 1]} : vector<24x256xf32> to vector<2x256xf32>
    %48 = vector.extract_strided_slice %10 {offsets = [12, 0], sizes = [2, 256], strides = [1, 1]} : vector<24x256xf32> to vector<2x256xf32>
    %49 = vector.extract_strided_slice %10 {offsets = [20, 0], sizes = [2, 256], strides = [1, 1]} : vector<24x256xf32> to vector<2x256xf32>
    %50 = vector.extract_strided_slice %7 {offsets = [4, 0], sizes = [2, 256], strides = [1, 1]} : vector<8x256xf32> to vector<2x256xf32>
    %51 = tpu.concatenate %47, %50 in 0 : vector<2x256xf32>, vector<2x256xf32> -> vector<4x256xf32>
    %52 = tpu.concatenate %48, %47 in 0 : vector<2x256xf32>, vector<2x256xf32> -> vector<4x256xf32>
    %cst_20 = arith.constant dense<0.000000e+00> : vector<256x256xf32>
    %53 = tpu.matmul %51, %52, %cst_20 {dimension_numbers = #tpu.dot_dimension_numbers<[0], [0], [1], [1], [0, 1, 1, 1], [], []>} : vector<4x256xf32>, vector<4x256xf32>, vector<256x256xf32> -> vector<256x256xf32>
    %cst_21 = arith.constant dense<0xFF800000> : vector<256xf32>
    %54 = vector.multi_reduction <maximumf>, %53, %cst_21 [1] : vector<256x256xf32> to vector<256xf32>
    %55 = vector.shape_cast %54 : vector<256xf32> to vector<256x1xf32>
    %56 = vector.broadcast %55 : vector<256x1xf32> to vector<256x256xf32>
    %57 = arith.subf %53, %56 : vector<256x256xf32>
    %58 = math.exp %57 : vector<256x256xf32>
    %cst_22 = arith.constant dense<0.000000e+00> : vector<256xf32>
    %59 = vector.multi_reduction <add>, %58, %cst_22 [1] : vector<256x256xf32> to vector<256xf32>
    %60 = vector.shape_cast %59 : vector<256xf32> to vector<256x1xf32>
    %61 = tpu.reciprocal %60 {approx = true} : vector<256x1xf32> -> vector<256x1xf32>
    %62 = vector.broadcast %61 : vector<256x1xf32> to vector<256x256xf32>
    %63 = arith.mulf %58, %62 : vector<256x256xf32>
    %cst_23 = arith.constant dense<0.000000e+00> : vector<2x256xf32>
    %64 = tpu.matmul %49, %63, %cst_23 {dimension_numbers = #tpu.dot_dimension_numbers<[1], [1], [0], [0], [0, 0, 1, 0], [], []>} : vector<2x256xf32>, vector<256x256xf32>, vector<2x256xf32> -> vector<2x256xf32>
    %65 = vector.extract_strided_slice %10 {offsets = [6, 0], sizes = [2, 256], strides = [1, 1]} : vector<24x256xf32> to vector<2x256xf32>
    %66 = vector.extract_strided_slice %10 {offsets = [14, 0], sizes = [2, 256], strides = [1, 1]} : vector<24x256xf32> to vector<2x256xf32>
    %67 = vector.extract_strided_slice %10 {offsets = [22, 0], sizes = [2, 256], strides = [1, 1]} : vector<24x256xf32> to vector<2x256xf32>
    %68 = vector.extract_strided_slice %7 {offsets = [6, 0], sizes = [2, 256], strides = [1, 1]} : vector<8x256xf32> to vector<2x256xf32>
    %69 = tpu.concatenate %65, %68 in 0 : vector<2x256xf32>, vector<2x256xf32> -> vector<4x256xf32>
    %70 = tpu.concatenate %66, %65 in 0 : vector<2x256xf32>, vector<2x256xf32> -> vector<4x256xf32>
    %cst_24 = arith.constant dense<0.000000e+00> : vector<256x256xf32>
    %71 = tpu.matmul %69, %70, %cst_24 {dimension_numbers = #tpu.dot_dimension_numbers<[0], [0], [1], [1], [0, 1, 1, 1], [], []>} : vector<4x256xf32>, vector<4x256xf32>, vector<256x256xf32> -> vector<256x256xf32>
    %cst_25 = arith.constant dense<0xFF800000> : vector<256xf32>
    %72 = vector.multi_reduction <maximumf>, %71, %cst_25 [1] : vector<256x256xf32> to vector<256xf32>
    %73 = vector.shape_cast %72 : vector<256xf32> to vector<256x1xf32>
    %74 = vector.broadcast %73 : vector<256x1xf32> to vector<256x256xf32>
    %75 = arith.subf %71, %74 : vector<256x256xf32>
    %76 = math.exp %75 : vector<256x256xf32>
    %cst_26 = arith.constant dense<0.000000e+00> : vector<256xf32>
    %77 = vector.multi_reduction <add>, %76, %cst_26 [1] : vector<256x256xf32> to vector<256xf32>
    %78 = vector.shape_cast %77 : vector<256xf32> to vector<256x1xf32>
    %79 = tpu.reciprocal %78 {approx = true} : vector<256x1xf32> -> vector<256x1xf32>
    %80 = vector.broadcast %79 : vector<256x1xf32> to vector<256x256xf32>
    %81 = arith.mulf %76, %80 : vector<256x256xf32>
    %cst_27 = arith.constant dense<0.000000e+00> : vector<2x256xf32>
    %82 = tpu.matmul %67, %81, %cst_27 {dimension_numbers = #tpu.dot_dimension_numbers<[1], [1], [0], [0], [0, 0, 1, 0], [], []>} : vector<2x256xf32>, vector<256x256xf32>, vector<2x256xf32> -> vector<2x256xf32>
    %83 = tpu.concatenate %28, %46, %64, %82 in 0 : vector<2x256xf32>, vector<2x256xf32>, vector<2x256xf32>, vector<2x256xf32> -> vector<8x256xf32>
    %c0_28 = arith.constant 0 : index
    %c0_29 = arith.constant 0 : index
    %c0_30 = arith.constant 0 : index
    %c0_31 = arith.constant 0 : index
    %84 = vector.load %arg6[%c0_28, %c0_29, %c0_30, %c0_31] : memref<1x1x8x256xf32, #tpu.memory_space<vmem>>, vector<1x1x8x256xf32>
    %85 = vector.shape_cast %84 : vector<1x1x8x256xf32> to vector<8x256xf32>
    %86 = vector.shape_cast %83 : vector<8x256xf32> to vector<1x1x8x256xf32>
    tpu.vector_store %arg6[%c0_28, %c0_29, %c0_30, %c0_31], %86 {strides = array<i32>} : memref<1x1x8x256xf32, #tpu.memory_space<vmem>>, vector<1x1x8x256xf32>,
    return
  }
  func.func @transform_0(%arg0: i32, %arg1: i32) -> (i32, i32, i32, i32) {
    %c0_i32 = arith.constant 0 : i32
    %c0_i32_0 = arith.constant 0 : i32
    %c0_i32_1 = arith.constant 0 : i32
    return %arg1, %arg0, %c0_i32, %c0_i32_0 : i32, i32, i32, i32
  }
  func.func @transform_1(%arg0: i32, %arg1: i32) -> (i32, i32, i32) {
    %c0_i32 = arith.constant 0 : i32
    %c0_i32_0 = arith.constant 0 : i32
    %c0_i32_1 = arith.constant 0 : i32
    return %arg0, %c0_i32, %c0_i32_0 : i32, i32, i32
  }
  func.func @transform_2(%arg0: i32, %arg1: i32) -> (i32, i32, i32) {
    %c0_i32 = arith.constant 0 : i32
    %c0_i32_0 = arith.constant 0 : i32
    %c0_i32_1 = arith.constant 0 : i32
    return %arg0, %c0_i32, %c0_i32_0 : i32, i32, i32
  }
  func.func @transform_3(%arg0: i32, %arg1: i32) -> (i32, i32, i32) {
    %c0_i32 = arith.constant 0 : i32
    %c0_i32_0 = arith.constant 0 : i32
    %c0_i32_1 = arith.constant 0 : i32
    return %arg0, %c0_i32, %c0_i32_0 : i32, i32, i32
  }
  func.func @transform_4(%arg0: i32, %arg1: i32) -> (i32, i32, i32, i32) {
    %c0_i32 = arith.constant 0 : i32
    %c0_i32_0 = arith.constant 0 : i32
    %c0_i32_1 = arith.constant 0 : i32
    return %arg1, %arg0, %c0_i32, %c0_i32_0 : i32, i32, i32, i32
  }
}

</mosaic_0001>

<llo_original>
// kernel: mhsa_2g_forward.1
$region0: #{mhsa_2g_forward.1}
  #allocation0 [shape = 'u32[]', space=smem, size = 0x4, offset = 0x4, fixed_abs, tag = 'smem constant byte address 0x4 - core index']
  #allocation1 [shape = 'u32[144,128]{1,0:T(1,128)}', space=vmem, size = 0x12000, scoped, tag = 'internal scratch']
  %s0 = inlined_call_operand.vmem [shape: f32[2,2,8,256], index: 0, kind: input, shape index: {}]
  %s1 = inlined_call_operand.vmem [shape: f32[2,24,8], index: 1, kind: input, shape index: {}]
  %s2 = inlined_call_operand.vmem [shape: f32[2,24,1], index: 2, kind: input, shape index: {}]
  %s3 = inlined_call_operand.vmem [shape: f32[2,8,256], index: 3, kind: input, shape index: {}]
  %s4 = inlined_call_operand.vmem [shape: f32[2,2,8,256], index: 4, kind: output, shape index: {}]
  %s5 = sld [smem:[#allocation0]]
  $region49: #{mhsa_2g_forward.1} parent=0
    _
  %s7 = ssub.s32 1, %s5
  %s8 = scalar_select 0, %s7, %s5
  loop: start=0, step=1, limit=6
  $region2: #{mhsa_2g_forward.1} parent=0 // loop_pre_header
    _
  $region3: #{mhsa_2g_forward.1} parent=0 // loop_header
    %s10 = sphi 0, %s14
    %p11 = scmp.ge.s32.totalorder %s10, 6
    %s17 = sphi 0, %s29
    %s18 = sphi 0, %s25
    %s19 = sphi 0, %s17
    %s20 = sphi 0, %s18
    %s21 = sphi 0, %s19
    %s22 = sphi 0, %s20
    %s34 = sphi 0, %s36
    %s37 = sphi 0, %s34
    %s38 = sphi 0, %s37
    %s54 = sphi 0, %s38
    %s60 = sphi 0, %s62
    %s63 = sphi 0, %s60
    %s64 = sphi 0, %s63
    %s80 = sphi 0, %s64
    %s86 = sphi 0, %s88
    %s89 = sphi 0, %s86
    %s90 = sphi 0, %s89
    %s106 = sphi 0, %s90
    %s112 = sphi 0, %s114
    %s115 = sphi 0, %s112
    %s116 = sphi 0, %s115
    %s132 = sphi 0, %s116
    %s140 = sphi 0, %s142
    %s143 = sphi 0, %s140
    %s144 = sphi 0, %s143
    %s160 = sphi 0, %s144
  $region4: #{mhsa_2g_forward.1} parent=0 // loop_header_branch
    %13 = sbr.rel (%p11) target = $region8
  $region5: #{mhsa_2g_forward.1} parent=0 // loop_body
    %s15 = ssub.s32 %s10, 1
    %s16 = ssub.s32 %s10, 2
    %s23 = sadd.s32 1, %s18
    %p24 = scmp.ge.s32.totalorder %s23, 2
    %s25 = scalar_select %p24, 0, %s23
    %s26 = sadd.s32 1, %s17
    %s27 = scalar_select %p24, %s26, %s17
    %p28 = scmp.ge.s32.totalorder %s27, 2
    %s29 = scalar_select %p28, 0, %s27
    %s30 = ssub.s32 %s18, %s25
    %s31 = ssub.s32 %s17, %s29
    %s32 = sor.u32 %s30, %s31
    %p33 = scmp.eq.s32.totalorder %s32, 0
    %s35 = sadd.s32 %s34, 1
    %s36 = scalar_select %p33, %s34, %s35
    %p39 = pneg %p33
    %p40 = scmp.eq.s32.totalorder %s10, 3
    %p41 = por %p39, %p40
    %p42 = scmp.ne.s32.totalorder %s34, %s37
    %p43 = scmp.eq.s32.totalorder %s10, 0
    %p44 = por %p42, %p43
    %p45 = scmp.ne.s32.totalorder %s34, %s37
    %p46 = scmp.eq.s32.totalorder %s15, 3
    %p47 = por %p45, %p46
    %p48 = scmp.ne.s32.totalorder %s37, %s38
    %p49 = scmp.eq.s32.totalorder %s15, 0
    %p50 = por %p48, %p49
    %p51 = scmp.ne.s32.totalorder %s37, %s38
    %p52 = scmp.eq.s32.totalorder %s16, 3
    %p53 = por %p51, %p52
    %p55 = scmp.ne.s32.totalorder %s38, %s54
    %p56 = scmp.eq.s32.totalorder %s16, 0
    %p57 = por %p55, %p56
    %s58 = ssub.s32 %s17, %s29
    %p59 = scmp.eq.s32.totalorder %s58, 0
    %s61 = sadd.s32 %s60, 1
    %s62 = scalar_select %p59, %s60, %s61
    %p65 = pneg %p59
    %p66 = scmp.eq.s32.totalorder %s10, 3
    %p67 = por %p65, %p66
    %p68 = scmp.ne.s32.totalorder %s60, %s63
    %p69 = scmp.eq.s32.totalorder %s10, 0
    %p70 = por %p68, %p69
    %p71 = scmp.ne.s32.totalorder %s60, %s63
    %p72 = scmp.eq.s32.totalorder %s15, 3
    %p73 = por %p71, %p72
    %p74 = scmp.ne.s32.totalorder %s63, %s64
    %p75 = scmp.eq.s32.totalorder %s15, 0
    %p76 = por %p74, %p75
    %p77 = scmp.ne.s32.totalorder %s63, %s64
    %p78 = scmp.eq.s32.totalorder %s16, 3
    %p79 = por %p77, %p78
    %p81 = scmp.ne.s32.totalorder %s64, %s80
    %p82 = scmp.eq.s32.totalorder %s16, 0
    %p83 = por %p81, %p82
    %s84 = ssub.s32 %s17, %s29
    %p85 = scmp.eq.s32.totalorder %s84, 0
    %s87 = sadd.s32 %s86, 1
    %s88 = scalar_select %p85, %s86, %s87
    %p91 = pneg %p85
    %p92 = scmp.eq.s32.totalorder %s10, 3
    %p93 = por %p91, %p92
    %p94 = scmp.ne.s32.totalorder %s86, %s89
    %p95 = scmp.eq.s32.totalorder %s10, 0
    %p96 = por %p94, %p95
    %p97 = scmp.ne.s32.totalorder %s86, %s89
    %p98 = scmp.eq.s32.totalorder %s15, 3
    %p99 = por %p97, %p98
    %p100 = scmp.ne.s32.totalorder %s89, %s90
    %p101 = scmp.eq.s32.totalorder %s15, 0
    %p102 = por %p100, %p101
    %p103 = scmp.ne.s32.totalorder %s89, %s90
    %p104 = scmp.eq.s32.totalorder %s16, 3
    %p105 = por %p103, %p104
    %p107 = scmp.ne.s32.totalorder %s90, %s106
    %p108 = scmp.eq.s32.totalorder %s16, 0
    %p109 = por %p107, %p108
    %s110 = ssub.s32 %s17, %s29
    %p111 = scmp.eq.s32.totalorder %s110, 0
    %s113 = sadd.s32 %s112, 1
    %s114 = scalar_select %p111, %s112, %s113
    %p117 = pneg %p111
    %p118 = scmp.eq.s32.totalorder %s10, 3
    %p119 = por %p117, %p118
    %p120 = scmp.ne.s32.totalorder %s112, %s115
    %p121 = scmp.eq.s32.totalorder %s10, 0
    %p122 = por %p120, %p121
    %p123 = scmp.ne.s32.totalorder %s112, %s115
    %p124 = scmp.eq.s32.totalorder %s15, 3
    %p125 = por %p123, %p124
    %p126 = scmp.ne.s32.totalorder %s115, %s116
    %p127 = scmp.eq.s32.totalorder %s15, 0
    %p128 = por %p126, %p127
    %p129 = scmp.ne.s32.totalorder %s115, %s116
    %p130 = scmp.eq.s32.totalorder %s16, 3
    %p131 = por %p129, %p130
    %p133 = scmp.ne.s32.totalorder %s116, %s132
    %p134 = scmp.eq.s32.totalorder %s16, 0
    %p135 = por %p133, %p134
    %s136 = ssub.s32 %s18, %s25
    %s137 = ssub.s32 %s17, %s29
    %s138 = sor.u32 %s136, %s137
    %p139 = scmp.eq.s32.totalorder %s138, 0
    %s141 = sadd.s32 %s140, 1
    %s142 = scalar_select %p139, %s140, %s141
    %p145 = pneg %p139
    %p146 = scmp.eq.s32.totalorder %s10, 3
    %p147 = por %p145, %p146
    %p148 = scmp.ne.s32.totalorder %s140, %s143
    %p149 = scmp.eq.s32.totalorder %s10, 0
    %p150 = por %p148, %p149
    %p151 = scmp.ne.s32.totalorder %s140, %s143
    %p152 = scmp.eq.s32.totalorder %s15, 3
    %p153 = por %p151, %p152
    %p154 = scmp.ne.s32.totalorder %s143, %s144
    %p155 = scmp.eq.s32.totalorder %s15, 0
    %p156 = por %p154, %p155
    %p157 = scmp.ne.s32.totalorder %s143, %s144
    %p158 = scmp.eq.s32.totalorder %s16, 3
    %p159 = por %p157, %p158
    %p161 = scmp.ne.s32.totalorder %s144, %s160
    %p162 = scmp.eq.s32.totalorder %s16, 0
    %p163 = por %p161, %p162
    %p164 = scmp.le.s32.totalorder 1, %s10
    %p165 = scmp.lt.s32.totalorder %s10, 5
    %p166 = pnand %p164, %p165
    %p167 = pneg %p166
    // Predicated region
    $region9: #{mhsa_2g_forward.1} parent=5 // pred_check
      _
    $region10: #{mhsa_2g_forward.1} parent=5 // pred_check_branch
      %169 = sbr.rel (%p166) target = $region12
    $region11: #{mhsa_2g_forward.1} parent=5 // pred_region
      %s170 = ssub.s32 %s10, 1
    $region12: #{mhsa_2g_forward.1} parent=5 // pred_fallthru
      _
    %p171 = scmp.lt.s32.totalorder %s10, 4
    // Predicated region
    $region13: #{mhsa_2g_forward.1} parent=5 // pred_check
      %p172 = pneg %p171
    $region14: #{mhsa_2g_forward.1} parent=5 // pred_check_branch
      %174 = sbr.rel (%p172) target = $region16
    $region15: #{mhsa_2g_forward.1} parent=5 // pred_region
      // Predicated region
      $region17: #{mhsa_2g_forward.1} parent=15 // pred_check
        %p175 = pneg %p44
      $region18: #{mhsa_2g_forward.1} parent=15 // pred_check_branch
        %177 = sbr.rel (%p175) target = $region20
      $region19: #{mhsa_2g_forward.1} parent=15 // pred_region
        %p178 = scmp.lt.s32.totalorder %s18, 1
        %s179 = scalar_select %p178, %s18, 1
        %p180 = scmp.lt.s32.totalorder %s17, 1
        %s181 = scalar_select %p180, %s17, 1
        %s182 = smul.addr %s181, 2
        %s183 = smul.addr %s179, 4
        %s184 = sadd.s32 %s182, %s183
        %s185 = smul.addr %s184, 8
        %s186 = scalar_lea.vmem %s0, %s185
      $region20: #{mhsa_2g_forward.1} parent=15 // pred_fallthru
        _
      // Predicated region
      $region21: #{mhsa_2g_forward.1} parent=15 // pred_check
        %p187 = pneg %p70
      $region22: #{mhsa_2g_forward.1} parent=15 // pred_check_branch
        %189 = sbr.rel (%p187) target = $region24
      $region23: #{mhsa_2g_forward.1} parent=15 // pred_region
        %p190 = scmp.lt.s32.totalorder %s17, 1
        %s191 = scalar_select %p190, %s17, 1
        %s192 = smul.addr %s191, 3
        %s193 = smul.addr %s192, 8
        %s194 = scalar_lea.vmem %s1, %s193
      $region24: #{mhsa_2g_forward.1} parent=15 // pred_fallthru
        _
      // Predicated region
      $region25: #{mhsa_2g_forward.1} parent=15 // pred_check
        %p195 = pneg %p96
      $region26: #{mhsa_2g_forward.1} parent=15 // pred_check_branch
        %197 = sbr.rel (%p195) target = $region28
      $region27: #{mhsa_2g_forward.1} parent=15 // pred_region
        %p198 = scmp.lt.s32.totalorder %s17, 1
        %s199 = scalar_select %p198, %s17, 1
        %s200 = smul.addr %s199, 3
        %s201 = smul.addr %s200, 8
        %s202 = scalar_lea.vmem %s2, %s201
      $region28: #{mhsa_2g_forward.1} parent=15 // pred_fallthru
        _
      // Predicated region
      $region29: #{mhsa_2g_forward.1} parent=15 // pred_check
        %p203 = pneg %p122
      $region30: #{mhsa_2g_forward.1} parent=15 // pred_check_branch
        %205 = sbr.rel (%p203) target = $region32
      $region31: #{mhsa_2g_forward.1} parent=15 // pred_region
        %p206 = scmp.lt.s32.totalorder %s17, 1
        %s207 = scalar_select %p206, %s17, 1
        %s208 = smul.addr %s207, 2
        %s209 = smul.addr %s208, 8
        %s210 = scalar_lea.vmem %s3, %s209
      $region32: #{mhsa_2g_forward.1} parent=15 // pred_fallthru
        _
    $region16: #{mhsa_2g_forward.1} parent=5 // pred_fallthru
      _
    %p211 = scmp.le.s32.totalorder 1, %s10
    %p212 = scmp.lt.s32.totalorder %s10, 5
    %p213 = pnand %p211, %p212
    %p214 = pneg %p213
    // Predicated region
    $region33: #{mhsa_2g_forward.1} parent=5 // pred_check
      _
    $region34: #{mhsa_2g_forward.1} parent=5 // pred_check_branch
      %216 = sbr.rel (%p213) target = $region36
    $region35: #{mhsa_2g_forward.1} parent=5 // pred_region
      %s217 = ssub.s32 %s10, 1
      %p218 = scmp.lt.s32.totalorder %s20, 1
      %s219 = scalar_select %p218, %s20, 1
      %p220 = scmp.lt.s32.totalorder %s19, 1
      %s221 = scalar_select %p220, %s19, 1
      %s222 = smul.addr %s221, 2
      %s223 = smul.addr %s219, 4
      %s224 = sadd.s32 %s222, %s223
      %s225 = smul.addr %s224, 8
      %s226 = scalar_lea.vmem %s0, %s225
      %p227 = pneg %p50
      %p228 = pneg %p47
      %p229 = scmp.lt.s32.totalorder %s19, 1
      %s230 = scalar_select %p229, %s19, 1
      %s231 = smul.addr %s230, 3
      %s232 = smul.addr %s231, 8
      %s233 = scalar_lea.vmem %s1, %s232
      %p234 = pneg %p76
      %p235 = pneg %p73
      %p236 = scmp.lt.s32.totalorder %s19, 1
      %s237 = scalar_select %p236, %s19, 1
      %s238 = smul.addr %s237, 3
      %s239 = smul.addr %s238, 8
      %s240 = scalar_lea.vmem %s2, %s239
      %p241 = pneg %p102
      %p242 = pneg %p99
      %p243 = scmp.lt.s32.totalorder %s19, 1
      %s244 = scalar_select %p243, %s19, 1
      %s245 = smul.addr %s244, 2
      %s246 = smul.addr %s245, 8
      %s247 = scalar_lea.vmem %s3, %s246
      %p248 = pneg %p128
      %p249 = pneg %p125
      %p250 = pneg %p156
      %p251 = pneg %p153
      %p252 = scmp.lt.s32.totalorder %s20, 1
      %s253 = scalar_select %p252, %s20, 1
      %p254 = scmp.lt.s32.totalorder %s19, 1
      %s255 = scalar_select %p254, %s19, 1
      %s256 = smul.addr %s255, 2
      %s257 = smul.addr %s253, 4
      %s258 = sadd.s32 %s256, %s257
      %s259 = smul.addr %s258, 8
      %s260 = scalar_lea.vmem %s4, %s259
      %p261 = scmp.lt.s32.totalorder %s20, 1
      %s262 = scalar_select %p261, %s20, 1
      %p263 = scmp.lt.s32.totalorder %s19, 1
      %s264 = scalar_select %p263, %s19, 1
      %s265 = smul.addr %s264, 2
      %s266 = smul.addr %s262, 4
      %s267 = sadd.s32 %s265, %s266
      %s268 = smul.addr %s267, 8
      %s269 = scalar_lea.vmem %s0, %s268
      %p270 = scmp.lt.s32.totalorder %s19, 1
      %s271 = scalar_select %p270, %s19, 1
      %s272 = smul.addr %s271, 3
      %s273 = smul.addr %s272, 8
      %s274 = scalar_lea.vmem %s1, %s273
      %p275 = scmp.lt.s32.totalorder %s19, 1
      %s276 = scalar_select %p275, %s19, 1
      %s277 = smul.addr %s276, 3
      %s278 = smul.addr %s277, 8
      %s279 = scalar_lea.vmem %s2, %s278
      %p280 = scmp.lt.s32.totalorder %s19, 1
      %s281 = scalar_select %p280, %s19, 1
      %s282 = smul.addr %s281, 2
      %s283 = smul.addr %s282, 8
      %s284 = scalar_lea.vmem %s3, %s283
      %p285 = scmp.lt.s32.totalorder %s20, 1
      %s286 = scalar_select %p285, %s20, 1
      %p287 = scmp.lt.s32.totalorder %s19, 1
      %s288 = scalar_select %p287, %s19, 1
      %s289 = smul.addr %s288, 2
      %s290 = smul.addr %s286, 4
      %s291 = sadd.s32 %s289, %s290
      %s292 = smul.addr %s291, 8
      %s293 = scalar_lea.vmem %s4, %s292
      %v294 = vld [vmem:[%s269] sm:$0xff]
      %v295 = vld [vmem:[%s269 + $0x8] sm:$0xff]
      %v296 = vld [vmem:[%s274] sm:$0xff]
      %v297 = vld [vmem:[%s274 + $0x8] sm:$0xff]
      %v298 = vld [vmem:[%s274 + $0x10] sm:$0xff]
      %v299 = vld [vmem:[%s279] sm:$0xff]
      %v300 = vld [vmem:[%s279 + $0x8] sm:$0xff]
      %v301 = vld [vmem:[%s279 + $0x10] sm:$0xff]
      %v302 = vld [vmem:[%s284] sm:$0xff]
      %v303 = vld [vmem:[%s284 + $0x8] sm:$0xff]
      %305 = vset.pattern.permute.xlu0 0
      %306 = vperm.xlu0 %305, %v299
      %v307 = vpop.permute.xlu0 %306
      %310 = vset.pattern.permute.xlu0 0
      %311 = vperm.xlu0 %310, %v300
      %v312 = vpop.permute.xlu0 %311
      %315 = vset.pattern.permute.xlu0 0
      %316 = vperm.xlu0 %315, %v301
      %v317 = vpop.permute.xlu0 %316
      %vm319 = vcmask 64512
      %v321 = vsel %vm319, %v296, 0
      %v324 = vsel %vm319, %v297, 0
      %v327 = vsel %vm319, %v298, 0
      %329 = vmatprep.subr.mxu0 %v295
      %330 = vmatpush1.msra.mxu0 %v294
      %331 = vmatprep.subr.mxu0 0.0
      %332 = vmatpush1.msra.mxu0 0.0
      %333 = vmatprep.subr.mxu0 0.0
      %334 = vmatpush1.msra.mxu0 0.0
      %335 = vmatprep.subr.mxu0 0.0
      %336 = vmatpush1.msra.mxu0 0.0
      %337 = vmatprep.subr.mxu0 0.0
      %338 = vmatpush1.msra.mxu0 0.0
      %339 = vmatprep.subr.mxu0 0.0
      %340 = vmatpush1.msra.mxu0 0.0
      %341 = vmatprep.subr.mxu0 0.0
      %342 = vmatpush1.msra.mxu0 0.0
      %343 = vmatprep.subr.mxu0 0.0
      %344 = vmatpush1.msra.mxu0 0.0
      %345 = vmatprep.subr.mxu0 0.0
      %346 = vmatpush1.msra.mxu0 0.0
      %347 = vmatprep.subr.mxu0 0.0
      %348 = vmatpush1.msra.mxu0 0.0
      %349 = vmatprep.subr.mxu0 0.0
      %350 = vmatpush1.msra.mxu0 0.0
      %351 = vmatprep.subr.mxu0 0.0
      %352 = vmatpush1.msra.mxu0 0.0
      %353 = vmatprep.subr.mxu0 0.0
      %354 = vmatpush1.msra.mxu0 0.0
      %355 = vmatprep.subr.mxu0 0.0
      %356 = vmatpush1.msra.mxu0 0.0
      %357 = vmatprep.subr.mxu0 0.0
      %358 = vmatpush1.msra.mxu0 0.0
      %359 = vmatprep.subr.mxu0 0.0
      %360 = vmatpush1.msra.mxu0 0.0
      %361 = vmatprep.subr.mxu0 0.0
      %362 = vmatpush1.msra.mxu0 0.0
      %363 = vmatprep.subr.mxu0 0.0
      %364 = vmatpush1.msra.mxu0 0.0
      %365 = vmatprep.subr.mxu0 0.0
      %366 = vmatpush1.msra.mxu0 0.0
      %367 = vmatprep.subr.mxu0 0.0
      %368 = vmatpush1.msra.mxu0 0.0
      %369 = vmatprep.subr.mxu0 0.0
      %370 = vmatpush1.msra.mxu0 0.0
      %371 = vmatprep.subr.mxu0 0.0
      %372 = vmatpush1.msra.mxu0 0.0
      %373 = vmatprep.subr.mxu0 0.0
      %374 = vmatpush1.msra.mxu0 0.0
      %375 = vmatprep.subr.mxu0 0.0
      %376 = vmatpush1.msra.mxu0 0.0
      %377 = vmatprep.subr.mxu0 0.0
      %378 = vmatpush1.msra.mxu0 0.0
      %379 = vmatprep.subr.mxu0 0.0
      %380 = vmatpush1.msra.mxu0 0.0
      %381 = vmatprep.subr.mxu0 0.0
      %382 = vmatpush1.msra.mxu0 0.0
      %383 = vmatprep.subr.mxu0 0.0
      %384 = vmatpush1.msra.mxu0 0.0
      %385 = vmatprep.subr.mxu0 0.0
      %386 = vmatpush1.msra.mxu0 0.0
      %387 = vmatprep.subr.mxu0 0.0
      %388 = vmatpush1.msra.mxu0 0.0
      %389 = vmatprep.subr.mxu0 0.0
      %390 = vmatpush1.msra.mxu0 0.0
      %391 = vmatprep.subr.mxu0 0.0
      %392 = vmatpush1.msra.mxu0 0.0
      %393 = vmatprep.mubr.f32.mxu0 0.0
      %394 = vmatmul.mubr.f32.gmra.mrb[0].mxu0 %v321
      %v395 = vpop.f32.mrb[0].mxu0
      %v396 = vadd.f32 %v307, %v395
      %v397 = vpop.f32.mrb[0].mxu0
      %v398 = vadd.f32 %v307, %v397
      %399 = vmatprep.mubr.f32.mxu0 0.0
      %400 = vmatmul.mubr.f32.gmra.mrb[0].mxu0 %v324
      %v401 = vpop.f32.mrb[0].mxu0
      %v402 = vadd.f32 %v312, %v401
      %v403 = vpop.f32.mrb[0].mxu0
      %v404 = vadd.f32 %v312, %v403
      %405 = vmatprep.mubr.f32.mxu0 0.0
      %406 = vmatmul.mubr.f32.gmra.mrb[0].mxu0 %v327
      %v407 = vpop.f32.mrb[0].mxu0
      %v408 = vadd.f32 %v317, %v407
      %v409 = vpop.f32.mrb[0].mxu0
      %v410 = vadd.f32 %v317, %v409
      %411 = vdwg.mxu0
      %v414 = vrot.slane %v302, 6
      %v415 = vrot.slane %v303, 6
      %vm418 = vcmask 1041408
      %v419 = vsel %vm418, %v396, %v414
      %v420 = vsel %vm418, %v398, %v415
      %v423 = vrot.slane %v396, 6
      %v424 = vrot.slane %v398, 6
      %v427 = vsel %vm418, %v402, %v423
      %v428 = vsel %vm418, %v404, %v424
      %429 = vxpose.xlu0.b32.start [1/16] %v419, 128
      %430 = vxpose.xlu0.b32.cont [2/16] 0.0, 128
      %431 = vxpose.xlu0.b32.cont [3/16] 0.0, 128
      %432 = vxpose.xlu0.b32.cont [4/16] 0.0, 128
      %433 = vxpose.xlu0.b32.cont [5/16] 0.0, 128
      %434 = vxpose.xlu0.b32.cont [6/16] 0.0, 128
      %435 = vxpose.xlu0.b32.cont [7/16] 0.0, 128
      %436 = vxpose.xlu0.b32.cont [8/16] 0.0, 128
      %437 = vxpose.xlu0.b32.cont [9/16] 0.0, 128
      %438 = vxpose.xlu0.b32.cont [10/16] 0.0, 128
      %439 = vxpose.xlu0.b32.cont [11/16] 0.0, 128
      %440 = vxpose.xlu0.b32.cont [12/16] 0.0, 128
      %441 = vxpose.xlu0.b32.cont [13/16] 0.0, 128
      %442 = vxpose.xlu0.b32.cont [14/16] 0.0, 128
      %443 = vxpose.xlu0.b32.cont [15/16] 0.0, 128
      %444 = vxpose.xlu0.b32.end [16/16] 0.0, 128
      %v445 = vpop.trf.xlu0
      %v446 = vpop.trf.xlu0
      %v447 = vpop.trf.xlu0
      %v448 = vpop.trf.xlu0
      %v449 = vpop.trf.xlu0
      %v450 = vpop.trf.xlu0
      %v451 = vpop.trf.xlu0
      %v452 = vpop.trf.xlu0
      %v453 = vpop.trf.xlu0
      %v454 = vpop.trf.xlu0
      %v455 = vpop.trf.xlu0
      %v456 = vpop.trf.xlu0
      %v457 = vpop.trf.xlu0
      %v458 = vpop.trf.xlu0
      %v459 = vpop.trf.xlu0
      %v460 = vpop.trf.xlu0
      %461 = vxpose.xlu0.b32.start [1/16] %v420, 128
      %462 = vxpose.xlu0.b32.cont [2/16] 0.0, 128
      %463 = vxpose.xlu0.b32.cont [3/16] 0.0, 128
      %464 = vxpose.xlu0.b32.cont [4/16] 0.0, 128
      %465 = vxpose.xlu0.b32.cont [5/16] 0.0, 128
      %466 = vxpose.xlu0.b32.cont [6/16] 0.0, 128
      %467 = vxpose.xlu0.b32.cont [7/16] 0.0, 128
      %468 = vxpose.xlu0.b32.cont [8/16] 0.0, 128
      %469 = vxpose.xlu0.b32.cont [9/16] 0.0, 128
      %470 = vxpose.xlu0.b32.cont [10/16] 0.0, 128
      %471 = vxpose.xlu0.b32.cont [11/16] 0.0, 128
      %472 = vxpose.xlu0.b32.cont [12/16] 0.0, 128
      %473 = vxpose.xlu0.b32.cont [13/16] 0.0, 128
      %474 = vxpose.xlu0.b32.cont [14/16] 0.0, 128
      %475 = vxpose.xlu0.b32.cont [15/16] 0.0, 128
      %476 = vxpose.xlu0.b32.end [16/16] 0.0, 128
      %v477 = vpop.trf.xlu0
      %v478 = vpop.trf.xlu0
      %v479 = vpop.trf.xlu0
      %v480 = vpop.trf.xlu0
      %v481 = vpop.trf.xlu0
      %v482 = vpop.trf.xlu0
      %v483 = vpop.trf.xlu0
      %v484 = vpop.trf.xlu0
      %v485 = vpop.trf.xlu0
      %v486 = vpop.trf.xlu0
      %v487 = vpop.trf.xlu0
      %v488 = vpop.trf.xlu0
      %v489 = vpop.trf.xlu0
      %v490 = vpop.trf.xlu0
      %v491 = vpop.trf.xlu0
      %v492 = vpop.trf.xlu0
      %vm493 = vcmask 31744
      %v495 = vsel %vm493, %v445, 0
      %v498 = vsel %vm493, %v446, 0
      %v501 = vsel %vm493, %v447, 0
      %v504 = vsel %vm493, %v448, 0
      %v507 = vsel %vm493, %v449, 0
      %v510 = vsel %vm493, %v450, 0
      %v513 = vsel %vm493, %v451, 0
      %v516 = vsel %vm493, %v452, 0
      %v519 = vsel %vm493, %v453, 0
      %v522 = vsel %vm493, %v454, 0
      %v525 = vsel %vm493, %v455, 0
      %v528 = vsel %vm493, %v456, 0
      %v531 = vsel %vm493, %v457, 0
      %v534 = vsel %vm493, %v458, 0
      %v537 = vsel %vm493, %v459, 0
      %v540 = vsel %vm493, %v460, 0
      %v543 = vsel %vm493, %v477, 0
      %v546 = vsel %vm493, %v478, 0
      %v549 = vsel %vm493, %v479, 0
      %v552 = vsel %vm493, %v480, 0
      %v555 = vsel %vm493, %v481, 0
      %v558 = vsel %vm493, %v482, 0
      %v561 = vsel %vm493, %v483, 0
      %v564 = vsel %vm493, %v484, 0
      %v567 = vsel %vm493, %v485, 0
      %v570 = vsel %vm493, %v486, 0
      %v573 = vsel %vm493, %v487, 0
      %v576 = vsel %vm493, %v488, 0
      %v579 = vsel %vm493, %v489, 0
      %v582 = vsel %vm493, %v490, 0
      %v585 = vsel %vm493, %v491, 0
      %v588 = vsel %vm493, %v492, 0
      %vm590 = vcmask 1043456
      %v592 = vsel %vm590, %v427, 0
      %v595 = vsel %vm590, %v428, 0
      %597 = vmatprep.subr.mxu0 %v595
      %598 = vmatpush1.msra.mxu0 %v592
      %599 = vmatprep.subr.mxu0 0.0
      %600 = vmatpush1.msra.mxu0 0.0
      %601 = vmatprep.subr.mxu0 0.0
      %602 = vmatpush1.msra.mxu0 0.0
      %603 = vmatprep.subr.mxu0 0.0
      %604 = vmatpush1.msra.mxu0 0.0
      %605 = vmatprep.subr.mxu0 0.0
      %606 = vmatpush1.msra.mxu0 0.0
      %607 = vmatprep.subr.mxu0 0.0
      %608 = vmatpush1.msra.mxu0 0.0
      %609 = vmatprep.subr.mxu0 0.0
      %610 = vmatpush1.msra.mxu0 0.0
      %611 = vmatprep.subr.mxu0 0.0
      %612 = vmatpush1.msra.mxu0 0.0
      %613 = vmatprep.subr.mxu0 0.0
      %614 = vmatpush1.msra.mxu0 0.0
      %615 = vmatprep.subr.mxu0 0.0
      %616 = vmatpush1.msra.mxu0 0.0
      %617 = vmatprep.subr.mxu0 0.0
      %618 = vmatpush1.msra.mxu0 0.0
      %619 = vmatprep.subr.mxu0 0.0
      %620 = vmatpush1.msra.mxu0 0.0
      %621 = vmatprep.subr.mxu0 0.0
      %622 = vmatpush1.msra.mxu0 0.0
      %623 = vmatprep.subr.mxu0 0.0
      %624 = vmatpush1.msra.mxu0 0.0
      %625 = vmatprep.subr.mxu0 0.0
      %626 = vmatpush1.msra.mxu0 0.0
      %627 = vmatprep.subr.mxu0 0.0
      %628 = vmatpush1.msra.mxu0 0.0
      %629 = vmatprep.subr.mxu0 0.0
      %630 = vmatpush1.msra.mxu0 0.0
      %631 = vmatprep.subr.mxu0 0.0
      %632 = vmatpush1.msra.mxu0 0.0
      %633 = vmatprep.subr.mxu0 0.0
      %634 = vmatpush1.msra.mxu0 0.0
      %635 = vmatprep.subr.mxu0 0.0
      %636 = vmatpush1.msra.mxu0 0.0
      %637 = vmatprep.subr.mxu0 0.0
      %638 = vmatpush1.msra.mxu0 0.0
      %639 = vmatprep.subr.mxu0 0.0
      %640 = vmatpush1.msra.mxu0 0.0
      %641 = vmatprep.subr.mxu0 0.0
      %642 = vmatpush1.msra.mxu0 0.0
      %643 = vmatprep.subr.mxu0 0.0
      %644 = vmatpush1.msra.mxu0 0.0
      %645 = vmatprep.subr.mxu0 0.0
      %646 = vmatpush1.msra.mxu0 0.0
      %647 = vmatprep.subr.mxu0 0.0
      %648 = vmatpush1.msra.mxu0 0.0
      %649 = vmatprep.subr.mxu0 0.0
      %650 = vmatpush1.msra.mxu0 0.0
      %651 = vmatprep.subr.mxu0 0.0
      %652 = vmatpush1.msra.mxu0 0.0
      %653 = vmatprep.subr.mxu0 0.0
      %654 = vmatpush1.msra.mxu0 0.0
      %655 = vmatprep.subr.mxu0 0.0
      %656 = vmatpush1.msra.mxu0 0.0
      %657 = vmatprep.subr.mxu0 0.0
      %658 = vmatpush1.msra.mxu0 0.0
      %659 = vmatprep.subr.mxu0 0.0
      %660 = vmatpush1.msra.mxu0 0.0
      %661 = vmatprep.mubr.f32.mxu0 0.0
      %662 = vmatmul.mubr.f32.gmra.mrb[0].mxu0 %v495
      %v663 = vpop.f32.mrb[0].mxu0
      %v664 = vadd.f32 0.0, %v663
      %v665 = vpop.f32.mrb[0].mxu0
      %v666 = vadd.f32 0.0, %v665
      %667 = vmatprep.mubr.f32.mxu0 0.0
      %668 = vmatmul.mubr.f32.gmra.mrb[0].mxu0 %v498
      %v669 = vpop.f32.mrb[0].mxu0
      %v670 = vadd.f32 0.0, %v669
      %v671 = vpop.f32.mrb[0].mxu0
      %v672 = vadd.f32 0.0, %v671
      %673 = vmatprep.mubr.f32.mxu0 0.0
      %674 = vmatmul.mubr.f32.gmra.mrb[0].mxu0 %v501
      %v675 = vpop.f32.mrb[0].mxu0
      %v676 = vadd.f32 0.0, %v675
      %v677 = vpop.f32.mrb[0].mxu0
      %v678 = vadd.f32 0.0, %v677
      %679 = vmatprep.mubr.f32.mxu0 0.0
      %680 = vmatmul.mubr.f32.gmra.mrb[0].mxu0 %v504
      %v681 = vpop.f32.mrb[0].mxu0
      %v682 = vadd.f32 0.0, %v681
      %v683 = vpop.f32.mrb[0].mxu0
      %v684 = vadd.f32 0.0, %v683
      %685 = vmatprep.mubr.f32.mxu0 0.0
      %686 = vmatmul.mubr.f32.gmra.mrb[0].mxu0 %v507
      %v687 = vpop.f32.mrb[0].mxu0
      %v688 = vadd.f32 0.0, %v687
      %v689 = vpop.f32.mrb[0].mxu0
      %v690 = vadd.f32 0.0, %v689
      %691 = vmatprep.mubr.f32.mxu0 0.0
      %692 = vmatmul.mubr.f32.gmra.mrb[0].mxu0 %v510
      %v693 = vpop.f32.mrb[0].mxu0
      %v694 = vadd.f32 0.0, %v693
      %v695 = vpop.f32.mrb[0].mxu0
      %v696 = vadd.f32 0.0, %v695
      %697 = vmatprep.mubr.f32.mxu0 0.0
      %698 = vmatmul.mubr.f32.gmra.mrb[0].mxu0 %v513
      %v699 = vpop.f32.mrb[0].mxu0
      %v700 = vadd.f32 0.0, %v699
      %v701 = vpop.f32.mrb[0].mxu0
      %v702 = vadd.f32 0.0, %v701
      %703 = vmatprep.mubr.f32.mxu0 0.0
      %704 = vmatmul.mubr.f32.gmra.mrb[0].mxu0 %v516
      %v705 = vpop.f32.mrb[0].mxu0
      %v706 = vadd.f32 0.0, %v705
      %v707 = vpop.f32.mrb[0].mxu0
      %v708 = vadd.f32 0.0, %v707
      %709 = vmatprep.mubr.f32.mxu0 0.0
      %710 = vmatmul.mubr.f32.gmra.mrb[0].mxu0 %v519
      %v711 = vpop.f32.mrb[0].mxu0
      %v712 = vadd.f32 0.0, %v711
      %v713 = vpop.f32.mrb[0].mxu0
      %v714 = vadd.f32 0.0, %v713
      %715 = vmatprep.mubr.f32.mxu0 0.0
      %716 = vmatmul.mubr.f32.gmra.mrb[0].mxu0 %v522
      %v717 = vpop.f32.mrb[0].mxu0
      %v718 = vadd.f32 0.0, %v717
      %v719 = vpop.f32.mrb[0].mxu0
      %v720 = vadd.f32 0.0, %v719
      %721 = vmatprep.mubr.f32.mxu0 0.0
      %722 = vmatmul.mubr.f32.gmra.mrb[0].mxu0 %v525
      %v723 = vpop.f32.mrb[0].mxu0
      %v724 = vadd.f32 0.0, %v723
      %v725 = vpop.f32.mrb[0].mxu0
      %v726 = vadd.f32 0.0, %v725
      %727 = vmatprep.mubr.f32.mxu0 0.0
      %728 = vmatmul.mubr.f32.gmra.mrb[0].mxu0 %v528
      %v729 = vpop.f32.mrb[0].mxu0
      %v730 = vadd.f32 0.0, %v729
      %v731 = vpop.f32.mrb[0].mxu0
      %v732 = vadd.f32 0.0, %v731
      %733 = vmatprep.mubr.f32.mxu0 0.0
      %734 = vmatmul.mubr.f32.gmra.mrb[0].mxu0 %v531
      %v735 = vpop.f32.mrb[0].mxu0
      %v736 = vadd.f32 0.0, %v735
      %v737 = vpop.f32.mrb[0].mxu0
      %v738 = vadd.f32 0.0, %v737
      %739 = vmatprep.mubr.f32.mxu0 0.0
      %740 = vmatmul.mubr.f32.gmra.mrb[0].mxu0 %v534
      %v741 = vpop.f32.mrb[0].mxu0
      %v742 = vadd.f32 0.0, %v741
      %v743 = vpop.f32.mrb[0].mxu0
      %v744 = vadd.f32 0.0, %v743
      %745 = vmatprep.mubr.f32.mxu0 0.0
      %746 = vmatmul.mubr.f32.gmra.mrb[0].mxu0 %v537
      %v747 = vpop.f32.mrb[0].mxu0
      %v748 = vadd.f32 0.0, %v747
      %v749 = vpop.f32.mrb[0].mxu0
      %v750 = vadd.f32 0.0, %v749
      %751 = vmatprep.mubr.f32.mxu0 0.0
      %752 = vmatmul.mubr.f32.gmra.mrb[0].mxu0 %v540
      %v753 = vpop.f32.mrb[0].mxu0
      %v754 = vadd.f32 0.0, %v753
      %v755 = vpop.f32.mrb[0].mxu0
      %v756 = vadd.f32 0.0, %v755
      %757 = vmatprep.mubr.f32.mxu0 0.0
      %758 = vmatmul.mubr.f32.gmra.mrb[0].mxu0 %v543
      %v759 = vpop.f32.mrb[0].mxu0
      %v760 = vadd.f32 0.0, %v759
      %v761 = vpop.f32.mrb[0].mxu0
      %v762 = vadd.f32 0.0, %v761
      %763 = vmatprep.mubr.f32.mxu0 0.0
      %764 = vmatmul.mubr.f32.gmra.mrb[0].mxu0 %v546
      %v765 = vpop.f32.mrb[0].mxu0
      %v766 = vadd.f32 0.0, %v765
      %v767 = vpop.f32.mrb[0].mxu0
      %v768 = vadd.f32 0.0, %v767
      %769 = vmatprep.mubr.f32.mxu0 0.0
      %770 = vmatmul.mubr.f32.gmra.mrb[0].mxu0 %v549
      %v771 = vpop.f32.mrb[0].mxu0
      %v772 = vadd.f32 0.0, %v771
      %v773 = vpop.f32.mrb[0].mxu0
      %v774 = vadd.f32 0.0, %v773
      %775 = vmatprep.mubr.f32.mxu0 0.0
      %776 = vmatmul.mubr.f32.gmra.mrb[0].mxu0 %v552
      %v777 = vpop.f32.mrb[0].mxu0
      %v778 = vadd.f32 0.0, %v777
      %v779 = vpop.f32.mrb[0].mxu0
      %v780 = vadd.f32 0.0, %v779
      %781 = vmatprep.mubr.f32.mxu0 0.0
      %782 = vmatmul.mubr.f32.gmra.mrb[0].mxu0 %v555
      %v783 = vpop.f32.mrb[0].mxu0
      %v784 = vadd.f32 0.0, %v783
      %v785 = vpop.f32.mrb[0].mxu0
      %v786 = vadd.f32 0.0, %v785
      %787 = vmatprep.mubr.f32.mxu0 0.0
      %788 = vmatmul.mubr.f32.gmra.mrb[0].mxu0 %v558
      %v789 = vpop.f32.mrb[0].mxu0
      %v790 = vadd.f32 0.0, %v789
      %v791 = vpop.f32.mrb[0].mxu0
      %v792 = vadd.f32 0.0, %v791
      %793 = vmatprep.mubr.f32.mxu0 0.0
      %794 = vmatmul.mubr.f32.gmra.mrb[0].mxu0 %v561
      %v795 = vpop.f32.mrb[0].mxu0
      %v796 = vadd.f32 0.0, %v795
      %v797 = vpop.f32.mrb[0].mxu0
      %v798 = vadd.f32 0.0, %v797
      %799 = vmatprep.mubr.f32.mxu0 0.0
      %800 = vmatmul.mubr.f32.gmra.mrb[0].mxu0 %v564
      %v801 = vpop.f32.mrb[0].mxu0
      %v802 = vadd.f32 0.0, %v801
      %v803 = vpop.f32.mrb[0].mxu0
      %v804 = vadd.f32 0.0, %v803
      %805 = vmatprep.mubr.f32.mxu0 0.0
      %806 = vmatmul.mubr.f32.gmra.mrb[0].mxu0 %v567
      %v807 = vpop.f32.mrb[0].mxu0
      %v808 = vadd.f32 0.0, %v807
      %v809 = vpop.f32.mrb[0].mxu0
      %v810 = vadd.f32 0.0, %v809
      %811 = vmatprep.mubr.f32.mxu0 0.0
      %812 = vmatmul.mubr.f32.gmra.mrb[0].mxu0 %v570
      %v813 = vpop.f32.mrb[0].mxu0
      %v814 = vadd.f32 0.0, %v813
      %v815 = vpop.f32.mrb[0].mxu0
      %v816 = vadd.f32 0.0, %v815
      %817 = vmatprep.mubr.f32.mxu0 0.0
      %818 = vmatmul.mubr.f32.gmra.mrb[0].mxu0 %v573
      %v819 = vpop.f32.mrb[0].mxu0
      %v820 = vadd.f32 0.0, %v819
      %v821 = vpop.f32.mrb[0].mxu0
      %v822 = vadd.f32 0.0, %v821
      %823 = vmatprep.mubr.f32.mxu0 0.0
      %824 = vmatmul.mubr.f32.gmra.mrb[0].mxu0 %v576
      %v825 = vpop.f32.mrb[0].mxu0
      %v826 = vadd.f32 0.0, %v825
      %v827 = vpop.f32.mrb[0].mxu0
      %v828 = vadd.f32 0.0, %v827
      %829 = vmatprep.mubr.f32.mxu0 0.0
      %830 = vmatmul.mubr.f32.gmra.mrb[0].mxu0 %v579
      %v831 = vpop.f32.mrb[0].mxu0
      %v832 = vadd.f32 0.0, %v831
      %v833 = vpop.f32.mrb[0].mxu0
      %v834 = vadd.f32 0.0, %v833
      %835 = vmatprep.mubr.f32.mxu0 0.0
      %836 = vmatmul.mubr.f32.gmra.mrb[0].mxu0 %v582
      %v837 = vpop.f32.mrb[0].mxu0
      %v838 = vadd.f32 0.0, %v837
      %v839 = vpop.f32.mrb[0].mxu0
      %v840 = vadd.f32 0.0, %v839
      %841 = vmatprep.mubr.f32.mxu0 0.0
      %842 = vmatmul.mubr.f32.gmra.mrb[0].mxu0 %v585
      %v843 = vpop.f32.mrb[0].mxu0
      %v844 = vadd.f32 0.0, %v843
      %v845 = vpop.f32.mrb[0].mxu0
      %v846 = vadd.f32 0.0, %v845
      %847 = vmatprep.mubr.f32.mxu0 0.0
      %848 = vmatmul.mubr.f32.gmra.mrb[0].mxu0 %v588
      %v849 = vpop.f32.mrb[0].mxu0
      %v850 = vadd.f32 0.0, %v849
      %v851 = vpop.f32.mrb[0].mxu0
      %v852 = vadd.f32 0.0, %v851
      %853 = vdwg.mxu0
      %v854 = vmax.f32 %v664, %v666
      %855 = vmax.xlane.f32.xlu0 %v854
      %v856 = vpop.xlane.xlu0 %855
      %v857 = vmax.f32 %v670, %v672
      %858 = vmax.xlane.f32.xlu0 %v857
      %v859 = vpop.xlane.xlu0 %858
      %v860 = vmax.f32 %v676, %v678
      %861 = vmax.xlane.f32.xlu0 %v860
      %v862 = vpop.xlane.xlu0 %861
      %v863 = vmax.f32 %v682, %v684
      %864 = vmax.xlane.f32.xlu0 %v863
      %v865 = vpop.xlane.xlu0 %864
      %v866 = vmax.f32 %v688, %v690
      %867 = vmax.xlane.f32.xlu0 %v866
      %v868 = vpop.xlane.xlu0 %867
      %v869 = vmax.f32 %v694, %v696
      %870 = vmax.xlane.f32.xlu0 %v869
      %v871 = vpop.xlane.xlu0 %870
      %v872 = vmax.f32 %v700, %v702
      %873 = vmax.xlane.f32.xlu0 %v872
      %v874 = vpop.xlane.xlu0 %873
      %v875 = vmax.f32 %v706, %v708
      %876 = vmax.xlane.f32.xlu0 %v875
      %v877 = vpop.xlane.xlu0 %876
      %v878 = vmax.f32 %v712, %v714
      %879 = vmax.xlane.f32.xlu0 %v878
      %v880 = vpop.xlane.xlu0 %879
      %v881 = vmax.f32 %v718, %v720
      %882 = vmax.xlane.f32.xlu0 %v881
      %v883 = vpop.xlane.xlu0 %882
      %v884 = vmax.f32 %v724, %v726
      %885 = vmax.xlane.f32.xlu0 %v884
      %v886 = vpop.xlane.xlu0 %885
      %v887 = vmax.f32 %v730, %v732
      %888 = vmax.xlane.f32.xlu0 %v887
      %v889 = vpop.xlane.xlu0 %888
      %v890 = vmax.f32 %v736, %v738
      %891 = vmax.xlane.f32.xlu0 %v890
      %v892 = vpop.xlane.xlu0 %891
      %v893 = vmax.f32 %v742, %v744
      %894 = vmax.xlane.f32.xlu0 %v893
      %v895 = vpop.xlane.xlu0 %894
      %v896 = vmax.f32 %v748, %v750
      %897 = vmax.xlane.f32.xlu0 %v896
      %v898 = vpop.xlane.xlu0 %897
      %v899 = vmax.f32 %v754, %v756
      %900 = vmax.xlane.f32.xlu0 %v899
      %v901 = vpop.xlane.xlu0 %900
      %v902 = vmax.f32 %v760, %v762
      %903 = vmax.xlane.f32.xlu0 %v902
      %v904 = vpop.xlane.xlu0 %903
      %v905 = vmax.f32 %v766, %v768
      %906 = vmax.xlane.f32.xlu0 %v905
      %v907 = vpop.xlane.xlu0 %906
      %v908 = vmax.f32 %v772, %v774
      %909 = vmax.xlane.f32.xlu0 %v908
      %v910 = vpop.xlane.xlu0 %909
      %v911 = vmax.f32 %v778, %v780
      %912 = vmax.xlane.f32.xlu0 %v911
      %v913 = vpop.xlane.xlu0 %912
      %v914 = vmax.f32 %v784, %v786
      %915 = vmax.xlane.f32.xlu0 %v914
      %v916 = vpop.xlane.xlu0 %915
      %v917 = vmax.f32 %v790, %v792
      %918 = vmax.xlane.f32.xlu0 %v917
      %v919 = vpop.xlane.xlu0 %918
      %v920 = vmax.f32 %v796, %v798
      %921 = vmax.xlane.f32.xlu0 %v920
      %v922 = vpop.xlane.xlu0 %921
      %v923 = vmax.f32 %v802, %v804
      %924 = vmax.xlane.f32.xlu0 %v923
      %v925 = vpop.xlane.xlu0 %924
      %v926 = vmax.f32 %v808, %v810
      %927 = vmax.xlane.f32.xlu0 %v926
      %v928 = vpop.xlane.xlu0 %927
      %v929 = vmax.f32 %v814, %v816
      %930 = vmax.xlane.f32.xlu0 %v929
      %v931 = vpop.xlane.xlu0 %930
      %v932 = vmax.f32 %v820, %v822
      %933 = vmax.xlane.f32.xlu0 %v932
      %v934 = vpop.xlane.xlu0 %933
      %v935 = vmax.f32 %v826, %v828
      %936 = vmax.xlane.f32.xlu0 %v935
      %v937 = vpop.xlane.xlu0 %936
      %v938 = vmax.f32 %v832, %v834
      %939 = vmax.xlane.f32.xlu0 %v938
      %v940 = vpop.xlane.xlu0 %939
      %v941 = vmax.f32 %v838, %v840
      %942 = vmax.xlane.f32.xlu0 %v941
      %v943 = vpop.xlane.xlu0 %942
      %v944 = vmax.f32 %v844, %v846
      %945 = vmax.xlane.f32.xlu0 %v944
      %v946 = vpop.xlane.xlu0 %945
      %v947 = vmax.f32 %v850, %v852
      %948 = vmax.xlane.f32.xlu0 %v947
      %v949 = vpop.xlane.xlu0 %948
      %v950 = vsub.f32 %v664, %v856
      %v951 = vsub.f32 %v666, %v856
      %v952 = vsub.f32 %v670, %v859
      %v953 = vsub.f32 %v672, %v859
      %v954 = vsub.f32 %v676, %v862
      %v955 = vsub.f32 %v678, %v862
      %v956 = vsub.f32 %v682, %v865
      %v957 = vsub.f32 %v684, %v865
      %v958 = vsub.f32 %v688, %v868
      %v959 = vsub.f32 %v690, %v868
      %v960 = vsub.f32 %v694, %v871
      %v961 = vsub.f32 %v696, %v871
      %v962 = vsub.f32 %v700, %v874
      %v963 = vsub.f32 %v702, %v874
      %v964 = vsub.f32 %v706, %v877
      %v965 = vsub.f32 %v708, %v877
      %v966 = vsub.f32 %v712, %v880
      %v967 = vsub.f32 %v714, %v880
      %v968 = vsub.f32 %v718, %v883
      %v969 = vsub.f32 %v720, %v883
      %v970 = vsub.f32 %v724, %v886
      %v971 = vsub.f32 %v726, %v886
      %v972 = vsub.f32 %v730, %v889
      %v973 = vsub.f32 %v732, %v889
      %v974 = vsub.f32 %v736, %v892
      %v975 = vsub.f32 %v738, %v892
      %v976 = vsub.f32 %v742, %v895
      %v977 = vsub.f32 %v744, %v895
      %v978 = vsub.f32 %v748, %v898
      %v979 = vsub.f32 %v750, %v898
      %v980 = vsub.f32 %v754, %v901
      %v981 = vsub.f32 %v756, %v901
      %v982 = vsub.f32 %v760, %v904
      %v983 = vsub.f32 %v762, %v904
      %v984 = vsub.f32 %v766, %v907
      %v985 = vsub.f32 %v768, %v907
      %v986 = vsub.f32 %v772, %v910
      %v987 = vsub.f32 %v774, %v910
      %v988 = vsub.f32 %v778, %v913
      %v989 = vsub.f32 %v780, %v913
      %v990 = vsub.f32 %v784, %v916
      %v991 = vsub.f32 %v786, %v916
      %v992 = vsub.f32 %v790, %v919
      %v993 = vsub.f32 %v792, %v919
      %v994 = vsub.f32 %v796, %v922
      %v995 = vsub.f32 %v798, %v922
      %v996 = vsub.f32 %v802, %v925
      %v997 = vsub.f32 %v804, %v925
      %v998 = vsub.f32 %v808, %v928
      %v999 = vsub.f32 %v810, %v928
      %v1000 = vsub.f32 %v814, %v931
      %v1001 = vsub.f32 %v816, %v931
      %v1002 = vsub.f32 %v820, %v934
      %v1003 = vsub.f32 %v822, %v934
      %v1004 = vsub.f32 %v826, %v937
      %v1005 = vsub.f32 %v828, %v937
      %v1006 = vsub.f32 %v832, %v940
      %v1007 = vsub.f32 %v834, %v940
      %v1008 = vsub.f32 %v838, %v943
      %v1009 = vsub.f32 %v840, %v943
      %v1010 = vsub.f32 %v844, %v946
      %v1011 = vsub.f32 %v846, %v946
      %v1012 = vsub.f32 %v850, %v949
      %v1013 = vsub.f32 %v852, %v949
      %v1014 = vmul.f32 %v950, 1.442695
      %v1015 = vpow.pop %v1014
      %v1016 = vmul.f32 %v951, 1.442695
      %v1017 = vpow.pop %v1016
      %v1018 = vmul.f32 %v952, 1.442695
      %v1019 = vpow.pop %v1018
      %v1020 = vmul.f32 %v953, 1.442695
      %v1021 = vpow.pop %v1020
      %v1022 = vmul.f32 %v954, 1.442695
      %v1023 = vpow.pop %v1022
      %v1024 = vmul.f32 %v955, 1.442695
      %v1025 = vpow.pop %v1024
      %v1026 = vmul.f32 %v956, 1.442695
      %v1027 = vpow.pop %v1026
      %v1028 = vmul.f32 %v957, 1.442695
      %v1029 = vpow.pop %v1028
      %v1030 = vmul.f32 %v958, 1.442695
      %v1031 = vpow.pop %v1030
      %v1032 = vmul.f32 %v959, 1.442695
      %v1033 = vpow.pop %v1032
      %v1034 = vmul.f32 %v960, 1.442695
      %v1035 = vpow.pop %v1034
      %v1036 = vmul.f32 %v961, 1.442695
      %v1037 = vpow.pop %v1036
      %v1038 = vmul.f32 %v962, 1.442695
      %v1039 = vpow.pop %v1038
      %v1040 = vmul.f32 %v963, 1.442695
      %v1041 = vpow.pop %v1040
      %v1042 = vmul.f32 %v964, 1.442695
      %v1043 = vpow.pop %v1042
      %v1044 = vmul.f32 %v965, 1.442695
      %v1045 = vpow.pop %v1044
      %v1046 = vmul.f32 %v966, 1.442695
      %v1047 = vpow.pop %v1046
      %v1048 = vmul.f32 %v967, 1.442695
      %v1049 = vpow.pop %v1048
      %v1050 = vmul.f32 %v968, 1.442695
      %v1051 = vpow.pop %v1050
      %v1052 = vmul.f32 %v969, 1.442695
      %v1053 = vpow.pop %v1052
      %v1054 = vmul.f32 %v970, 1.442695
      %v1055 = vpow.pop %v1054
      %v1056 = vmul.f32 %v971, 1.442695
      %v1057 = vpow.pop %v1056
      %v1058 = vmul.f32 %v972, 1.442695
      %v1059 = vpow.pop %v1058
      %v1060 = vmul.f32 %v973, 1.442695
      %v1061 = vpow.pop %v1060
      %v1062 = vmul.f32 %v974, 1.442695
      %v1063 = vpow.pop %v1062
      %v1064 = vmul.f32 %v975, 1.442695
      %v1065 = vpow.pop %v1064
      %v1066 = vmul.f32 %v976, 1.442695
      %v1067 = vpow.pop %v1066
      %v1068 = vmul.f32 %v977, 1.442695
      %v1069 = vpow.pop %v1068
      %v1070 = vmul.f32 %v978, 1.442695
      %v1071 = vpow.pop %v1070
      %v1072 = vmul.f32 %v979, 1.442695
      %v1073 = vpow.pop %v1072
      %v1074 = vmul.f32 %v980, 1.442695
      %v1075 = vpow.pop %v1074
      %v1076 = vmul.f32 %v981, 1.442695
      %v1077 = vpow.pop %v1076
      %v1078 = vmul.f32 %v982, 1.442695
      %v1079 = vpow.pop %v1078
      %v1080 = vmul.f32 %v983, 1.442695
      %v1081 = vpow.pop %v1080
      %v1082 = vmul.f32 %v984, 1.442695
      %v1083 = vpow.pop %v1082
      %v1084 = vmul.f32 %v985, 1.442695
      %v1085 = vpow.pop %v1084
      %v1086 = vmul.f32 %v986, 1.442695
      %v1087 = vpow.pop %v1086
      %v1088 = vmul.f32 %v987, 1.442695
      %v1089 = vpow.pop %v1088
      %v1090 = vmul.f32 %v988, 1.442695
      %v1091 = vpow.pop %v1090
      %v1092 = vmul.f32 %v989, 1.442695
      %v1093 = vpow.pop %v1092
      %v1094 = vmul.f32 %v990, 1.442695
      %v1095 = vpow.pop %v1094
      %v1096 = vmul.f32 %v991, 1.442695
      %v1097 = vpow.pop %v1096
      %v1098 = vmul.f32 %v992, 1.442695
      %v1099 = vpow.pop %v1098
      %v1100 = vmul.f32 %v993, 1.442695
      %v1101 = vpow.pop %v1100
      %v1102 = vmul.f32 %v994, 1.442695
      %v1103 = vpow.pop %v1102
      %v1104 = vmul.f32 %v995, 1.442695
      %v1105 = vpow.pop %v1104
      %v1106 = vmul.f32 %v996, 1.442695
      %v1107 = vpow.pop %v1106
      %v1108 = vmul.f32 %v997, 1.442695
      %v1109 = vpow.pop %v1108
      %v1110 = vmul.f32 %v998, 1.442695
      %v1111 = vpow.pop %v1110
      %v1112 = vmul.f32 %v999, 1.442695
      %v1113 = vpow.pop %v1112
      %v1114 = vmul.f32 %v1000, 1.442695
      %v1115 = vpow.pop %v1114
      %v1116 = vmul.f32 %v1001, 1.442695
      %v1117 = vpow.pop %v1116
      %v1118 = vmul.f32 %v1002, 1.442695
      %v1119 = vpow.pop %v1118
      %v1120 = vmul.f32 %v1003, 1.442695
      %v1121 = vpow.pop %v1120
      %v1122 = vmul.f32 %v1004, 1.442695
      %v1123 = vpow.pop %v1122
      %v1124 = vmul.f32 %v1005, 1.442695
      %v1125 = vpow.pop %v1124
      %v1126 = vmul.f32 %v1006, 1.442695
      %v1127 = vpow.pop %v1126
      %v1128 = vmul.f32 %v1007, 1.442695
      %v1129 = vpow.pop %v1128
      %v1130 = vmul.f32 %v1008, 1.442695
      %v1131 = vpow.pop %v1130
      %v1132 = vmul.f32 %v1009, 1.442695
      %v1133 = vpow.pop %v1132
      %v1134 = vmul.f32 %v1010, 1.442695
      %v1135 = vpow.pop %v1134
      %v1136 = vmul.f32 %v1011, 1.442695
      %v1137 = vpow.pop %v1136
      %v1138 = vmul.f32 %v1012, 1.442695
      %v1139 = vpow.pop %v1138
      %v1140 = vmul.f32 %v1013, 1.442695
      %v1141 = vpow.pop %v1140
      %v1142 = vadd.f32 %v1015, %v1017
      %1143 = vadd.xlane.f32.xlu0 %v1142
      %v1144 = vpop.xlane.xlu0 %1143
      %v1145 = vadd.f32 %v1019, %v1021
      %1146 = vadd.xlane.f32.xlu0 %v1145
      %v1147 = vpop.xlane.xlu0 %1146
      %v1148 = vadd.f32 %v1023, %v1025
      %1149 = vadd.xlane.f32.xlu0 %v1148
      %v1150 = vpop.xlane.xlu0 %1149
      %v1151 = vadd.f32 %v1027, %v1029
      %1152 = vadd.xlane.f32.xlu0 %v1151
      %v1153 = vpop.xlane.xlu0 %1152
      %v1154 = vadd.f32 %v1031, %v1033
      %1155 = vadd.xlane.f32.xlu0 %v1154
      %v1156 = vpop.xlane.xlu0 %1155
      %v1157 = vadd.f32 %v1035, %v1037
      %1158 = vadd.xlane.f32.xlu0 %v1157
      %v1159 = vpop.xlane.xlu0 %1158
      %v1160 = vadd.f32 %v1039, %v1041
      %1161 = vadd.xlane.f32.xlu0 %v1160
      %v1162 = vpop.xlane.xlu0 %1161
      %v1163 = vadd.f32 %v1043, %v1045
      %1164 = vadd.xlane.f32.xlu0 %v1163
      %v1165 = vpop.xlane.xlu0 %1164
      %v1166 = vadd.f32 %v1047, %v1049
      %1167 = vadd.xlane.f32.xlu0 %v1166
      %v1168 = vpop.xlane.xlu0 %1167
      %v1169 = vadd.f32 %v1051, %v1053
      %1170 = vadd.xlane.f32.xlu0 %v1169
      %v1171 = vpop.xlane.xlu0 %1170
      %v1172 = vadd.f32 %v1055, %v1057
      %1173 = vadd.xlane.f32.xlu0 %v1172
      %v1174 = vpop.xlane.xlu0 %1173
      %v1175 = vadd.f32 %v1059, %v1061
      %1176 = vadd.xlane.f32.xlu0 %v1175
      %v1177 = vpop.xlane.xlu0 %1176
      %v1178 = vadd.f32 %v1063, %v1065
      %1179 = vadd.xlane.f32.xlu0 %v1178
      %v1180 = vpop.xlane.xlu0 %1179
      %v1181 = vadd.f32 %v1067, %v1069
      %1182 = vadd.xlane.f32.xlu0 %v1181
      %v1183 = vpop.xlane.xlu0 %1182
      %v1184 = vadd.f32 %v1071, %v1073
      %1185 = vadd.xlane.f32.xlu0 %v1184
      %v1186 = vpop.xlane.xlu0 %1185
      %v1187 = vadd.f32 %v1075, %v1077
      %1188 = vadd.xlane.f32.xlu0 %v1187
      %v1189 = vpop.xlane.xlu0 %1188
      %v1190 = vadd.f32 %v1079, %v1081
      %1191 = vadd.xlane.f32.xlu0 %v1190
      %v1192 = vpop.xlane.xlu0 %1191
      %v1193 = vadd.f32 %v1083, %v1085
      %1194 = vadd.xlane.f32.xlu0 %v1193
      %v1195 = vpop.xlane.xlu0 %1194
      %v1196 = vadd.f32 %v1087, %v1089
      %1197 = vadd.xlane.f32.xlu0 %v1196
      %v1198 = vpop.xlane.xlu0 %1197
      %v1199 = vadd.f32 %v1091, %v1093
      %1200 = vadd.xlane.f32.xlu0 %v1199
      %v1201 = vpop.xlane.xlu0 %1200
      %v1202 = vadd.f32 %v1095, %v1097
      %1203 = vadd.xlane.f32.xlu0 %v1202
      %v1204 = vpop.xlane.xlu0 %1203
      %v1205 = vadd.f32 %v1099, %v1101
      %1206 = vadd.xlane.f32.xlu0 %v1205
      %v1207 = vpop.xlane.xlu0 %1206
      %v1208 = vadd.f32 %v1103, %v1105
      %1209 = vadd.xlane.f32.xlu0 %v1208
      %v1210 = vpop.xlane.xlu0 %1209
      %v1211 = vadd.f32 %v1107, %v1109
      %1212 = vadd.xlane.f32.xlu0 %v1211
      %v1213 = vpop.xlane.xlu0 %1212
      %v1214 = vadd.f32 %v1111, %v1113
      %1215 = vadd.xlane.f32.xlu0 %v1214
      %v1216 = vpop.xlane.xlu0 %1215
      %v1217 = vadd.f32 %v1115, %v1117
      %1218 = vadd.xlane.f32.xlu0 %v1217
      %v1219 = vpop.xlane.xlu0 %1218
      %v1220 = vadd.f32 %v1119, %v1121
      %1221 = vadd.xlane.f32.xlu0 %v1220
      %v1222 = vpop.xlane.xlu0 %1221
      %v1223 = vadd.f32 %v1123, %v1125
      %1224 = vadd.xlane.f32.xlu0 %v1223
      %v1225 = vpop.xlane.xlu0 %1224
      %v1226 = vadd.f32 %v1127, %v1129
      %1227 = vadd.xlane.f32.xlu0 %v1226
      %v1228 = vpop.xlane.xlu0 %1227
      %v1229 = vadd.f32 %v1131, %v1133
      %1230 = vadd.xlane.f32.xlu0 %v1229
      %v1231 = vpop.xlane.xlu0 %1230
      %v1232 = vadd.f32 %v1135, %v1137
      %1233 = vadd.xlane.f32.xlu0 %v1232
      %v1234 = vpop.xlane.xlu0 %1233
      %v1235 = vadd.f32 %v1139, %v1141
      %1236 = vadd.xlane.f32.xlu0 %v1235
      %v1237 = vpop.xlane.xlu0 %1236
      %v1238 = vrcp.pop %v1144
      %v1239 = vrcp.pop %v1147
      %v1240 = vrcp.pop %v1150
      %v1241 = vrcp.pop %v1153
      %v1242 = vrcp.pop %v1156
      %v1243 = vrcp.pop %v1159
      %v1244 = vrcp.pop %v1162
      %v1245 = vrcp.pop %v1165
      %v1246 = vrcp.pop %v1168
      %v1247 = vrcp.pop %v1171
      %v1248 = vrcp.pop %v1174
      %v1249 = vrcp.pop %v1177
      %v1250 = vrcp.pop %v1180
      %v1251 = vrcp.pop %v1183
      %v1252 = vrcp.pop %v1186
      %v1253 = vrcp.pop %v1189
      %v1254 = vrcp.pop %v1192
      %v1255 = vrcp.pop %v1195
      %v1256 = vrcp.pop %v1198
      %v1257 = vrcp.pop %v1201
      %v1258 = vrcp.pop %v1204
      %v1259 = vrcp.pop %v1207
      %v1260 = vrcp.pop %v1210
      %v1261 = vrcp.pop %v1213
      %v1262 = vrcp.pop %v1216
      %v1263 = vrcp.pop %v1219
      %v1264 = vrcp.pop %v1222
      %v1265 = vrcp.pop %v1225
      %v1266 = vrcp.pop %v1228
      %v1267 = vrcp.pop %v1231
      %v1268 = vrcp.pop %v1234
      %v1269 = vrcp.pop %v1237
      %v1270 = vmul.f32 %v1015, %v1238
      %v1271 = vmul.f32 %v1017, %v1238
      %v1272 = vmul.f32 %v1019, %v1239
      %v1273 = vmul.f32 %v1021, %v1239
      %v1274 = vmul.f32 %v1023, %v1240
      %v1275 = vmul.f32 %v1025, %v1240
      %v1276 = vmul.f32 %v1027, %v1241
      %v1277 = vmul.f32 %v1029, %v1241
      %v1278 = vmul.f32 %v1031, %v1242
      %v1279 = vmul.f32 %v1033, %v1242
      %v1280 = vmul.f32 %v1035, %v1243
      %v1281 = vmul.f32 %v1037, %v1243
      %v1282 = vmul.f32 %v1039, %v1244
      %v1283 = vmul.f32 %v1041, %v1244
      %v1284 = vmul.f32 %v1043, %v1245
      %v1285 = vmul.f32 %v1045, %v1245
      %v1286 = vmul.f32 %v1047, %v1246
      %v1287 = vmul.f32 %v1049, %v1246
      %v1288 = vmul.f32 %v1051, %v1247
      %v1289 = vmul.f32 %v1053, %v1247
      %v1290 = vmul.f32 %v1055, %v1248
      %v1291 = vmul.f32 %v1057, %v1248
      %v1292 = vmul.f32 %v1059, %v1249
      %v1293 = vmul.f32 %v1061, %v1249
      %v1294 = vmul.f32 %v1063, %v1250
      %v1295 = vmul.f32 %v1065, %v1250
      %v1296 = vmul.f32 %v1067, %v1251
      %v1297 = vmul.f32 %v1069, %v1251
      %v1298 = vmul.f32 %v1071, %v1252
      %v1299 = vmul.f32 %v1073, %v1252
      %v1300 = vmul.f32 %v1075, %v1253
      %v1301 = vmul.f32 %v1077, %v1253
      %v1302 = vmul.f32 %v1079, %v1254
      %v1303 = vmul.f32 %v1081, %v1254
      %v1304 = vmul.f32 %v1083, %v1255
      %v1305 = vmul.f32 %v1085, %v1255
      %v1306 = vmul.f32 %v1087, %v1256
      %v1307 = vmul.f32 %v1089, %v1256
      %v1308 = vmul.f32 %v1091, %v1257
      %v1309 = vmul.f32 %v1093, %v1257
      %v1310 = vmul.f32 %v1095, %v1258
      %v1311 = vmul.f32 %v1097, %v1258
      %v1312 = vmul.f32 %v1099, %v1259
      %v1313 = vmul.f32 %v1101, %v1259
      %v1314 = vmul.f32 %v1103, %v1260
      %v1315 = vmul.f32 %v1105, %v1260
      %v1316 = vmul.f32 %v1107, %v1261
      %v1317 = vmul.f32 %v1109, %v1261
      %v1318 = vmul.f32 %v1111, %v1262
      %v1319 = vmul.f32 %v1113, %v1262
      %v1320 = vmul.f32 %v1115, %v1263
      %v1321 = vmul.f32 %v1117, %v1263
      %v1322 = vmul.f32 %v1119, %v1264
      %v1323 = vmul.f32 %v1121, %v1264
      %v1324 = vmul.f32 %v1123, %v1265
      %v1325 = vmul.f32 %v1125, %v1265
      %v1326 = vmul.f32 %v1127, %v1266
      %v1327 = vmul.f32 %v1129, %v1266
      %v1328 = vmul.f32 %v1131, %v1267
      %v1329 = vmul.f32 %v1133, %v1267
      %v1330 = vmul.f32 %v1135, %v1268
      %v1331 = vmul.f32 %v1137, %v1268
      %v1332 = vmul.f32 %v1139, %v1269
      %v1333 = vmul.f32 %v1141, %v1269
      %1334 = vmatprep.subr.mxu0 %v1271
      %1335 = vmatpush1.xpose.msra.mxu0 %v1270
      %1336 = vmatprep.subr.mxu0 %v1273
      %1337 = vmatpush1.xpose.msra.mxu0 %v1272
      %1338 = vmatprep.subr.mxu0 %v1275
      %1339 = vmatpush1.xpose.msra.mxu0 %v1274
      %1340 = vmatprep.subr.mxu0 %v1277
      %1341 = vmatpush1.xpose.msra.mxu0 %v1276
      %1342 = vmatprep.subr.mxu0 %v1279
      %1343 = vmatpush1.xpose.msra.mxu0 %v1278
      %1344 = vmatprep.subr.mxu0 %v1281
      %1345 = vmatpush1.xpose.msra.mxu0 %v1280
      %1346 = vmatprep.subr.mxu0 %v1283
      %1347 = vmatpush1.xpose.msra.mxu0 %v1282
      %1348 = vmatprep.subr.mxu0 %v1285
      %1349 = vmatpush1.xpose.msra.mxu0 %v1284
      %1350 = vmatprep.subr.mxu0 %v1287
      %1351 = vmatpush1.xpose.msra.mxu0 %v1286
      %1352 = vmatprep.subr.mxu0 %v1289
      %1353 = vmatpush1.xpose.msra.mxu0 %v1288
      %1354 = vmatprep.subr.mxu0 %v1291
      %1355 = vmatpush1.xpose.msra.mxu0 %v1290
      %1356 = vmatprep.subr.mxu0 %v1293
      %1357 = vmatpush1.xpose.msra.mxu0 %v1292
      %1358 = vmatprep.subr.mxu0 %v1295
      %1359 = vmatpush1.xpose.msra.mxu0 %v1294
      %1360 = vmatprep.subr.mxu0 %v1297
      %1361 = vmatpush1.xpose.msra.mxu0 %v1296
      %1362 = vmatprep.subr.mxu0 %v1299
      %1363 = vmatpush1.xpose.msra.mxu0 %v1298
      %1364 = vmatprep.subr.mxu0 %v1301
      %1365 = vmatpush1.xpose.msra.mxu0 %v1300
      %1366 = vmatprep.subr.mxu0 %v1303
      %1367 = vmatpush1.xpose.msra.mxu0 %v1302
      %1368 = vmatprep.subr.mxu0 %v1305
      %1369 = vmatpush1.xpose.msra.mxu0 %v1304
      %1370 = vmatprep.subr.mxu0 %v1307
      %1371 = vmatpush1.xpose.msra.mxu0 %v1306
      %1372 = vmatprep.subr.mxu0 %v1309
      %1373 = vmatpush1.xpose.msra.mxu0 %v1308
      %1374 = vmatprep.subr.mxu0 %v1311
      %1375 = vmatpush1.xpose.msra.mxu0 %v1310
      %1376 = vmatprep.subr.mxu0 %v1313
      %1377 = vmatpush1.xpose.msra.mxu0 %v1312
      %1378 = vmatprep.subr.mxu0 %v1315
      %1379 = vmatpush1.xpose.msra.mxu0 %v1314
      %1380 = vmatprep.subr.mxu0 %v1317
      %1381 = vmatpush1.xpose.msra.mxu0 %v1316
      %1382 = vmatprep.subr.mxu0 %v1319
      %1383 = vmatpush1.xpose.msra.mxu0 %v1318
      %1384 = vmatprep.subr.mxu0 %v1321
      %1385 = vmatpush1.xpose.msra.mxu0 %v1320
      %1386 = vmatprep.subr.mxu0 %v1323
      %1387 = vmatpush1.xpose.msra.mxu0 %v1322
      %1388 = vmatprep.subr.mxu0 %v1325
      %1389 = vmatpush1.xpose.msra.mxu0 %v1324
      %1390 = vmatprep.subr.mxu0 %v1327
      %1391 = vmatpush1.xpose.msra.mxu0 %v1326
      %1392 = vmatprep.subr.mxu0 %v1329
      %1393 = vmatpush1.xpose.msra.mxu0 %v1328
      %1394 = vmatprep.subr.mxu0 %v1331
      %1395 = vmatpush1.xpose.msra.mxu0 %v1330
      %1396 = vmatprep.subr.mxu0 %v1333
      %1397 = vmatpush1.xpose.msra.mxu0 %v1332
      %1398 = vmatprep.mubr.f32.mxu0 %v410
      %1399 = vmatmul.mubr.f32.gmra.mrb[0].mxu0 %v408
      %v1400 = vpop.f32.mrb[0].mxu0
      %v1401 = vadd.f32 0.0, %v1400
      %v1402 = vpop.f32.mrb[0].mxu0
      %v1403 = vadd.f32 0.0, %v1402
      %1404 = vdwg.mxu0
      %v1405 = vrot.slane %v396, 2
      %v1406 = vrot.slane %v398, 2
      %v1409 = vsel %vm418, %v1405, %v302
      %v1410 = vsel %vm418, %v1406, %v303
      %v1413 = vrot.slane %v402, 2
      %v1414 = vrot.slane %v404, 2
      %v1417 = vsel %vm418, %v1413, %v396
      %v1418 = vsel %vm418, %v1414, %v398
      %1419 = vxpose.xlu0.b32.start [1/16] %v1409, 128
      %1420 = vxpose.xlu0.b32.cont [2/16] 0.0, 128
      %1421 = vxpose.xlu0.b32.cont [3/16] 0.0, 128
      %1422 = vxpose.xlu0.b32.cont [4/16] 0.0, 128
      %1423 = vxpose.xlu0.b32.cont [5/16] 0.0, 128
      %1424 = vxpose.xlu0.b32.cont [6/16] 0.0, 128
      %1425 = vxpose.xlu0.b32.cont [7/16] 0.0, 128
      %1426 = vxpose.xlu0.b32.cont [8/16] 0.0, 128
      %1427 = vxpose.xlu0.b32.cont [9/16] 0.0, 128
      %1428 = vxpose.xlu0.b32.cont [10/16] 0.0, 128
      %1429 = vxpose.xlu0.b32.cont [11/16] 0.0, 128
      %1430 = vxpose.xlu0.b32.cont [12/16] 0.0, 128
      %1431 = vxpose.xlu0.b32.cont [13/16] 0.0, 128
      %1432 = vxpose.xlu0.b32.cont [14/16] 0.0, 128
      %1433 = vxpose.xlu0.b32.cont [15/16] 0.0, 128
      %1434 = vxpose.xlu0.b32.end [16/16] 0.0, 128
      %v1435 = vpop.trf.xlu0
      %v1436 = vpop.trf.xlu0
      %v1437 = vpop.trf.xlu0
      %v1438 = vpop.trf.xlu0
      %v1439 = vpop.trf.xlu0
      %v1440 = vpop.trf.xlu0
      %v1441 = vpop.trf.xlu0
      %v1442 = vpop.trf.xlu0
      %v1443 = vpop.trf.xlu0
      %v1444 = vpop.trf.xlu0
      %v1445 = vpop.trf.xlu0
      %v1446 = vpop.trf.xlu0
      %v1447 = vpop.trf.xlu0
      %v1448 = vpop.trf.xlu0
      %v1449 = vpop.trf.xlu0
      %v1450 = vpop.trf.xlu0
      %1451 = vxpose.xlu0.b32.start [1/16] %v1410, 128
      %1452 = vxpose.xlu0.b32.cont [2/16] 0.0, 128
      %1453 = vxpose.xlu0.b32.cont [3/16] 0.0, 128
      %1454 = vxpose.xlu0.b32.cont [4/16] 0.0, 128
      %1455 = vxpose.xlu0.b32.cont [5/16] 0.0, 128
      %1456 = vxpose.xlu0.b32.cont [6/16] 0.0, 128
      %1457 = vxpose.xlu0.b32.cont [7/16] 0.0, 128
      %1458 = vxpose.xlu0.b32.cont [8/16] 0.0, 128
      %1459 = vxpose.xlu0.b32.cont [9/16] 0.0, 128
      %1460 = vxpose.xlu0.b32.cont [10/16] 0.0, 128
      %1461 = vxpose.xlu0.b32.cont [11/16] 0.0, 128
      %1462 = vxpose.xlu0.b32.cont [12/16] 0.0, 128
      %1463 = vxpose.xlu0.b32.cont [13/16] 0.0, 128
      %1464 = vxpose.xlu0.b32.cont [14/16] 0.0, 128
      %1465 = vxpose.xlu0.b32.cont [15/16] 0.0, 128
      %1466 = vxpose.xlu0.b32.end [16/16] 0.0, 128
      %v1467 = vpop.trf.xlu0
      %v1468 = vpop.trf.xlu0
      %v1469 = vpop.trf.xlu0
      %v1470 = vpop.trf.xlu0
      %v1471 = vpop.trf.xlu0
      %v1472 = vpop.trf.xlu0
      %v1473 = vpop.trf.xlu0
      %v1474 = vpop.trf.xlu0
      %v1475 = vpop.trf.xlu0
      %v1476 = vpop.trf.xlu0
      %v1477 = vpop.trf.xlu0
      %v1478 = vpop.trf.xlu0
      %v1479 = vpop.trf.xlu0
      %v1480 = vpop.trf.xlu0
      %v1481 = vpop.trf.xlu0
      %v1482 = vpop.trf.xlu0
      %v1484 = vsel %vm493, %v1435, 0
      %v1487 = vsel %vm493, %v1436, 0
      %v1490 = vsel %vm493, %v1437, 0
      %v1493 = vsel %vm493, %v1438, 0
      %v1496 = vsel %vm493, %v1439, 0
      %v1499 = vsel %vm493, %v1440, 0
      %v1502 = vsel %vm493, %v1441, 0
      %v1505 = vsel %vm493, %v1442, 0
      %v1508 = vsel %vm493, %v1443, 0
      %v1511 = vsel %vm493, %v1444, 0
      %v1514 = vsel %vm493, %v1445, 0
      %v1517 = vsel %vm493, %v1446, 0
      %v1520 = vsel %vm493, %v1447, 0
      %v1523 = vsel %vm493, %v1448, 0
      %v1526 = vsel %vm493, %v1449, 0
      %v1529 = vsel %vm493, %v1450, 0
      %v1532 = vsel %vm493, %v1467, 0
      %v1535 = vsel %vm493, %v1468, 0
      %v1538 = vsel %vm493, %v1469, 0
      %v1541 = vsel %vm493, %v1470, 0
      %v1544 = vsel %vm493, %v1471, 0
      %v1547 = vsel %vm493, %v1472, 0
      %v1550 = vsel %vm493, %v1473, 0
      %v1553 = vsel %vm493, %v1474, 0
      %v1556 = vsel %vm493, %v1475, 0
      %v1559 = vsel %vm493, %v1476, 0
      %v1562 = vsel %vm493, %v1477, 0
      %v1565 = vsel %vm493, %v1478, 0
      %v1568 = vsel %vm493, %v1479, 0
      %v1571 = vsel %vm493, %v1480, 0
      %v1574 = vsel %vm493, %v1481, 0
      %v1577 = vsel %vm493, %v1482, 0
      %v1580 = vsel %vm590, %v1417, 0
      %v1583 = vsel %vm590, %v1418, 0
      %1585 = vmatprep.subr.mxu0 %v1583
      %1586 = vmatpush1.msra.mxu0 %v1580
      %1587 = vmatprep.subr.mxu0 0.0
      %1588 = vmatpush1.msra.mxu0 0.0
      %1589 = vmatprep.subr.mxu0 0.0
      %1590 = vmatpush1.msra.mxu0 0.0
      %1591 = vmatprep.subr.mxu0 0.0
      %1592 = vmatpush1.msra.mxu0 0.0
      %1593 = vmatprep.subr.mxu0 0.0
      %1594 = vmatpush1.msra.mxu0 0.0
      %1595 = vmatprep.subr.mxu0 0.0
      %1596 = vmatpush1.msra.mxu0 0.0
      %1597 = vmatprep.subr.mxu0 0.0
      %1598 = vmatpush1.msra.mxu0 0.0
      %1599 = vmatprep.subr.mxu0 0.0
      %1600 = vmatpush1.msra.mxu0 0.0
      %1601 = vmatprep.subr.mxu0 0.0
      %1602 = vmatpush1.msra.mxu0 0.0
      %1603 = vmatprep.subr.mxu0 0.0
      %1604 = vmatpush1.msra.mxu0 0.0
      %1605 = vmatprep.subr.mxu0 0.0
      %1606 = vmatpush1.msra.mxu0 0.0
      %1607 = vmatprep.subr.mxu0 0.0
      %1608 = vmatpush1.msra.mxu0 0.0
      %1609 = vmatprep.subr.mxu0 0.0
      %1610 = vmatpush1.msra.mxu0 0.0
      %1611 = vmatprep.subr.mxu0 0.0
      %1612 = vmatpush1.msra.mxu0 0.0
      %1613 = vmatprep.subr.mxu0 0.0
      %1614 = vmatpush1.msra.mxu0 0.0
      %1615 = vmatprep.subr.mxu0 0.0
      %1616 = vmatpush1.msra.mxu0 0.0
      %1617 = vmatprep.subr.mxu0 0.0
      %1618 = vmatpush1.msra.mxu0 0.0
      %1619 = vmatprep.subr.mxu0 0.0
      %1620 = vmatpush1.msra.mxu0 0.0
      %1621 = vmatprep.subr.mxu0 0.0
      %1622 = vmatpush1.msra.mxu0 0.0
      %1623 = vmatprep.subr.mxu0 0.0
      %1624 = vmatpush1.msra.mxu0 0.0
      %1625 = vmatprep.subr.mxu0 0.0
      %1626 = vmatpush1.msra.mxu0 0.0
      %1627 = vmatprep.subr.mxu0 0.0
      %1628 = vmatpush1.msra.mxu0 0.0
      %1629 = vmatprep.subr.mxu0 0.0
      %1630 = vmatpush1.msra.mxu0 0.0
      %1631 = vmatprep.subr.mxu0 0.0
      %1632 = vmatpush1.msra.mxu0 0.0
      %1633 = vmatprep.subr.mxu0 0.0
      %1634 = vmatpush1.msra.mxu0 0.0
      %1635 = vmatprep.subr.mxu0 0.0
      %1636 = vmatpush1.msra.mxu0 0.0
      %1637 = vmatprep.subr.mxu0 0.0
      %1638 = vmatpush1.msra.mxu0 0.0
      %1639 = vmatprep.subr.mxu0 0.0
      %1640 = vmatpush1.msra.mxu0 0.0
      %1641 = vmatprep.subr.mxu0 0.0
      %1642 = vmatpush1.msra.mxu0 0.0
      %1643 = vmatprep.subr.mxu0 0.0
      %1644 = vmatpush1.msra.mxu0 0.0
      %1645 = vmatprep.subr.mxu0 0.0
      %1646 = vmatpush1.msra.mxu0 0.0
      %1647 = vmatprep.subr.mxu0 0.0
      %1648 = vmatpush1.msra.mxu0 0.0
      %1649 = vmatprep.mubr.f32.mxu0 0.0
      %1650 = vmatmul.mubr.f32.gmra.mrb[0].mxu0 %v1484
      %v1651 = vpop.f32.mrb[0].mxu0
      %v1652 = vadd.f32 0.0, %v1651
      %v1653 = vpop.f32.mrb[0].mxu0
      %v1654 = vadd.f32 0.0, %v1653
      %1655 = vmatprep.mubr.f32.mxu0 0.0
      %1656 = vmatmul.mubr.f32.gmra.mrb[0].mxu0 %v1487
      %v1657 = vpop.f32.mrb[0].mxu0
      %v1658 = vadd.f32 0.0, %v1657
      %v1659 = vpop.f32.mrb[0].mxu0
      %v1660 = vadd.f32 0.0, %v1659
      %1661 = vmatprep.mubr.f32.mxu0 0.0
      %1662 = vmatmul.mubr.f32.gmra.mrb[0].mxu0 %v1490
      %v1663 = vpop.f32.mrb[0].mxu0
      %v1664 = vadd.f32 0.0, %v1663
      %v1665 = vpop.f32.mrb[0].mxu0
      %v1666 = vadd.f32 0.0, %v1665
      %1667 = vmatprep.mubr.f32.mxu0 0.0
      %1668 = vmatmul.mubr.f32.gmra.mrb[0].mxu0 %v1493
      %v1669 = vpop.f32.mrb[0].mxu0
      %v1670 = vadd.f32 0.0, %v1669
      %v1671 = vpop.f32.mrb[0].mxu0
      %v1672 = vadd.f32 0.0, %v1671
      %1673 = vmatprep.mubr.f32.mxu0 0.0
      %1674 = vmatmul.mubr.f32.gmra.mrb[0].mxu0 %v1496
      %v1675 = vpop.f32.mrb[0].mxu0
      %v1676 = vadd.f32 0.0, %v1675
      %v1677 = vpop.f32.mrb[0].mxu0
      %v1678 = vadd.f32 0.0, %v1677
      %1679 = vmatprep.mubr.f32.mxu0 0.0
      %1680 = vmatmul.mubr.f32.gmra.mrb[0].mxu0 %v1499
      %v1681 = vpop.f32.mrb[0].mxu0
      %v1682 = vadd.f32 0.0, %v1681
      %v1683 = vpop.f32.mrb[0].mxu0
      %v1684 = vadd.f32 0.0, %v1683
      %1685 = vmatprep.mubr.f32.mxu0 0.0
      %1686 = vmatmul.mubr.f32.gmra.mrb[0].mxu0 %v1502
      %v1687 = vpop.f32.mrb[0].mxu0
      %v1688 = vadd.f32 0.0, %v1687
      %v1689 = vpop.f32.mrb[0].mxu0
      %v1690 = vadd.f32 0.0, %v1689
      %1691 = vmatprep.mubr.f32.mxu0 0.0
      %1692 = vmatmul.mubr.f32.gmra.mrb[0].mxu0 %v1505
      %v1693 = vpop.f32.mrb[0].mxu0
      %v1694 = vadd.f32 0.0, %v1693
      %v1695 = vpop.f32.mrb[0].mxu0
      %v1696 = vadd.f32 0.0, %v1695
      %1697 = vmatprep.mubr.f32.mxu0 0.0
      %1698 = vmatmul.mubr.f32.gmra.mrb[0].mxu0 %v1508
      %v1699 = vpop.f32.mrb[0].mxu0
      %v1700 = vadd.f32 0.0, %v1699
      %v1701 = vpop.f32.mrb[0].mxu0
      %v1702 = vadd.f32 0.0, %v1701
      %1703 = vmatprep.mubr.f32.mxu0 0.0
      %1704 = vmatmul.mubr.f32.gmra.mrb[0].mxu0 %v1511
      %v1705 = vpop.f32.mrb[0].mxu0
      %v1706 = vadd.f32 0.0, %v1705
      %v1707 = vpop.f32.mrb[0].mxu0
      %v1708 = vadd.f32 0.0, %v1707
      %1709 = vmatprep.mubr.f32.mxu0 0.0
      %1710 = vmatmul.mubr.f32.gmra.mrb[0].mxu0 %v1514
      %v1711 = vpop.f32.mrb[0].mxu0
      %v1712 = vadd.f32 0.0, %v1711
      %v1713 = vpop.f32.mrb[0].mxu0
      %v1714 = vadd.f32 0.0, %v1713
      %1715 = vmatprep.mubr.f32.mxu0 0.0
      %1716 = vmatmul.mubr.f32.gmra.mrb[0].mxu0 %v1517
      %v1717 = vpop.f32.mrb[0].mxu0
      %v1718 = vadd.f32 0.0, %v1717
      %v1719 = vpop.f32.mrb[0].mxu0
      %v1720 = vadd.f32 0.0, %v1719
      %1721 = vmatprep.mubr.f32.mxu0 0.0
      %1722 = vmatmul.mubr.f32.gmra.mrb[0].mxu0 %v1520
      %v1723 = vpop.f32.mrb[0].mxu0
      %v1724 = vadd.f32 0.0, %v1723
      %v1725 = vpop.f32.mrb[0].mxu0
      %v1726 = vadd.f32 0.0, %v1725
      %1727 = vmatprep.mubr.f32.mxu0 0.0
      %1728 = vmatmul.mubr.f32.gmra.mrb[0].mxu0 %v1523
      %v1729 = vpop.f32.mrb[0].mxu0
      %v1730 = vadd.f32 0.0, %v1729
      %v1731 = vpop.f32.mrb[0].mxu0
      %v1732 = vadd.f32 0.0, %v1731
      %1733 = vmatprep.mubr.f32.mxu0 0.0
      %1734 = vmatmul.mubr.f32.gmra.mrb[0].mxu0 %v1526
      %v1735 = vpop.f32.mrb[0].mxu0
      %v1736 = vadd.f32 0.0, %v1735
      %v1737 = vpop.f32.mrb[0].mxu0
      %v1738 = vadd.f32 0.0, %v1737
      %1739 = vmatprep.mubr.f32.mxu0 0.0
      %1740 = vmatmul.mubr.f32.gmra.mrb[0].mxu0 %v1529
      %v1741 = vpop.f32.mrb[0].mxu0
      %v1742 = vadd.f32 0.0, %v1741
      %v1743 = vpop.f32.mrb[0].mxu0
      %v1744 = vadd.f32 0.0, %v1743
      %1745 = vmatprep.mubr.f32.mxu0 0.0
      %1746 = vmatmul.mubr.f32.gmra.mrb[0].mxu0 %v1532
      %v1747 = vpop.f32.mrb[0].mxu0
      %v1748 = vadd.f32 0.0, %v1747
      %v1749 = vpop.f32.mrb[0].mxu0
      %v1750 = vadd.f32 0.0, %v1749
      %1751 = vmatprep.mubr.f32.mxu0 0.0
      %1752 = vmatmul.mubr.f32.gmra.mrb[0].mxu0 %v1535
      %v1753 = vpop.f32.mrb[0].mxu0
      %v1754 = vadd.f32 0.0, %v1753
      %v1755 = vpop.f32.mrb[0].mxu0
      %v1756 = vadd.f32 0.0, %v1755
      %1757 = vmatprep.mubr.f32.mxu0 0.0
      %1758 = vmatmul.mubr.f32.gmra.mrb[0].mxu0 %v1538
      %v1759 = vpop.f32.mrb[0].mxu0
      %v1760 = vadd.f32 0.0, %v1759
      %v1761 = vpop.f32.mrb[0].mxu0
      %v1762 = vadd.f32 0.0, %v1761
      %1763 = vmatprep.mubr.f32.mxu0 0.0
      %1764 = vmatmul.mubr.f32.gmra.mrb[0].mxu0 %v1541
      %v1765 = vpop.f32.mrb[0].mxu0
      %v1766 = vadd.f32 0.0, %v1765
      %v1767 = vpop.f32.mrb[0].mxu0
      %v1768 = vadd.f32 0.0, %v1767
      %1769 = vmatprep.mubr.f32.mxu0 0.0
      %1770 = vmatmul.mubr.f32.gmra.mrb[0].mxu0 %v1544
      %v1771 = vpop.f32.mrb[0].mxu0
      %v1772 = vadd.f32 0.0, %v1771
      %v1773 = vpop.f32.mrb[0].mxu0
      %v1774 = vadd.f32 0.0, %v1773
      %1775 = vmatprep.mubr.f32.mxu0 0.0
      %1776 = vmatmul.mubr.f32.gmra.mrb[0].mxu0 %v1547
      %v1777 = vpop.f32.mrb[0].mxu0
      %v1778 = vadd.f32 0.0, %v1777
      %v1779 = vpop.f32.mrb[0].mxu0
      %v1780 = vadd.f32 0.0, %v1779
      %1781 = vmatprep.mubr.f32.mxu0 0.0
      %1782 = vmatmul.mubr.f32.gmra.mrb[0].mxu0 %v1550
      %v1783 = vpop.f32.mrb[0].mxu0
      %v1784 = vadd.f32 0.0, %v1783
      %v1785 = vpop.f32.mrb[0].mxu0
      %v1786 = vadd.f32 0.0, %v1785
      %1787 = vmatprep.mubr.f32.mxu0 0.0
      %1788 = vmatmul.mubr.f32.gmra.mrb[0].mxu0 %v1553
      %v1789 = vpop.f32.mrb[0].mxu0
      %v1790 = vadd.f32 0.0, %v1789
      %v1791 = vpop.f32.mrb[0].mxu0
      %v1792 = vadd.f32 0.0, %v1791
      %1793 = vmatprep.mubr.f32.mxu0 0.0
      %1794 = vmatmul.mubr.f32.gmra.mrb[0].mxu0 %v1556
      %v1795 = vpop.f32.mrb[0].mxu0
      %v1796 = vadd.f32 0.0, %v1795
      %v1797 = vpop.f32.mrb[0].mxu0
      %v1798 = vadd.f32 0.0, %v1797
      %1799 = vmatprep.mubr.f32.mxu0 0.0
      %1800 = vmatmul.mubr.f32.gmra.mrb[0].mxu0 %v1559
      %v1801 = vpop.f32.mrb[0].mxu0
      %v1802 = vadd.f32 0.0, %v1801
      %v1803 = vpop.f32.mrb[0].mxu0
      %v1804 = vadd.f32 0.0, %v1803
      %1805 = vmatprep.mubr.f32.mxu0 0.0
      %1806 = vmatmul.mubr.f32.gmra.mrb[0].mxu0 %v1562
      %v1807 = vpop.f32.mrb[0].mxu0
      %v1808 = vadd.f32 0.0, %v1807
      %v1809 = vpop.f32.mrb[0].mxu0
      %v1810 = vadd.f32 0.0, %v1809
      %1811 = vmatprep.mubr.f32.mxu0 0.0
      %1812 = vmatmul.mubr.f32.gmra.mrb[0].mxu0 %v1565
      %v1813 = vpop.f32.mrb[0].mxu0
      %v1814 = vadd.f32 0.0, %v1813
      %v1815 = vpop.f32.mrb[0].mxu0
      %v1816 = vadd.f32 0.0, %v1815
      %1817 = vmatprep.mubr.f32.mxu0 0.0
      %1818 = vmatmul.mubr.f32.gmra.mrb[0].mxu0 %v1568
      %v1819 = vpop.f32.mrb[0].mxu0
      %v1820 = vadd.f32 0.0, %v1819
      %v1821 = vpop.f32.mrb[0].mxu0
      %v1822 = vadd.f32 0.0, %v1821
      %1823 = vmatprep.mubr.f32.mxu0 0.0
      %1824 = vmatmul.mubr.f32.gmra.mrb[0].mxu0 %v1571
      %v1825 = vpop.f32.mrb[0].mxu0
      %v1826 = vadd.f32 0.0, %v1825
      %v1827 = vpop.f32.mrb[0].mxu0
      %v1828 = vadd.f32 0.0, %v1827
      %1829 = vmatprep.mubr.f32.mxu0 0.0
      %1830 = vmatmul.mubr.f32.gmra.mrb[0].mxu0 %v1574
      %v1831 = vpop.f32.mrb[0].mxu0
      %v1832 = vadd.f32 0.0, %v1831
      %v1833 = vpop.f32.mrb[0].mxu0
      %v1834 = vadd.f32 0.0, %v1833
      %1835 = vmatprep.mubr.f32.mxu0 0.0
      %1836 = vmatmul.mubr.f32.gmra.mrb[0].mxu0 %v1577
      %v1837 = vpop.f32.mrb[0].mxu0
      %v1838 = vadd.f32 0.0, %v1837
      %v1839 = vpop.f32.mrb[0].mxu0
      %v1840 = vadd.f32 0.0, %v1839
      %1841 = vdwg.mxu0
      %v1842 = vmax.f32 %v1652, %v1654
      %1843 = vmax.xlane.f32.xlu0 %v1842
      %v1844 = vpop.xlane.xlu0 %1843
      %v1845 = vmax.f32 %v1658, %v1660
      %1846 = vmax.xlane.f32.xlu0 %v1845
      %v1847 = vpop.xlane.xlu0 %1846
      %v1848 = vmax.f32 %v1664, %v1666
      %1849 = vmax.xlane.f32.xlu0 %v1848
      %v1850 = vpop.xlane.xlu0 %1849
      %v1851 = vmax.f32 %v1670, %v1672
      %1852 = vmax.xlane.f32.xlu0 %v1851
      %v1853 = vpop.xlane.xlu0 %1852
      %v1854 = vmax.f32 %v1676, %v1678
      %1855 = vmax.xlane.f32.xlu0 %v1854
      %v1856 = vpop.xlane.xlu0 %1855
      %v1857 = vmax.f32 %v1682, %v1684
      %1858 = vmax.xlane.f32.xlu0 %v1857
      %v1859 = vpop.xlane.xlu0 %1858
      %v1860 = vmax.f32 %v1688, %v1690
      %1861 = vmax.xlane.f32.xlu0 %v1860
      %v1862 = vpop.xlane.xlu0 %1861
      %v1863 = vmax.f32 %v1694, %v1696
      %1864 = vmax.xlane.f32.xlu0 %v1863
      %v1865 = vpop.xlane.xlu0 %1864
      %v1866 = vmax.f32 %v1700, %v1702
      %1867 = vmax.xlane.f32.xlu0 %v1866
      %v1868 = vpop.xlane.xlu0 %1867
      %v1869 = vmax.f32 %v1706, %v1708
      %1870 = vmax.xlane.f32.xlu0 %v1869
      %v1871 = vpop.xlane.xlu0 %1870
      %v1872 = vmax.f32 %v1712, %v1714
      %1873 = vmax.xlane.f32.xlu0 %v1872
      %v1874 = vpop.xlane.xlu0 %1873
      %v1875 = vmax.f32 %v1718, %v1720
      %1876 = vmax.xlane.f32.xlu0 %v1875
      %v1877 = vpop.xlane.xlu0 %1876
      %v1878 = vmax.f32 %v1724, %v1726
      %1879 = vmax.xlane.f32.xlu0 %v1878
      %v1880 = vpop.xlane.xlu0 %1879
      %v1881 = vmax.f32 %v1730, %v1732
      %1882 = vmax.xlane.f32.xlu0 %v1881
      %v1883 = vpop.xlane.xlu0 %1882
      %v1884 = vmax.f32 %v1736, %v1738
      %1885 = vmax.xlane.f32.xlu0 %v1884
      %v1886 = vpop.xlane.xlu0 %1885
      %v1887 = vmax.f32 %v1742, %v1744
      %1888 = vmax.xlane.f32.xlu0 %v1887
      %v1889 = vpop.xlane.xlu0 %1888
      %v1890 = vmax.f32 %v1748, %v1750
      %1891 = vmax.xlane.f32.xlu0 %v1890
      %v1892 = vpop.xlane.xlu0 %1891
      %v1893 = vmax.f32 %v1754, %v1756
      %1894 = vmax.xlane.f32.xlu0 %v1893
      %v1895 = vpop.xlane.xlu0 %1894
      %v1896 = vmax.f32 %v1760, %v1762
      %1897 = vmax.xlane.f32.xlu0 %v1896
      %v1898 = vpop.xlane.xlu0 %1897
      %v1899 = vmax.f32 %v1766, %v1768
      %1900 = vmax.xlane.f32.xlu0 %v1899
      %v1901 = vpop.xlane.xlu0 %1900
      %v1902 = vmax.f32 %v1772, %v1774
      %1903 = vmax.xlane.f32.xlu0 %v1902
      %v1904 = vpop.xlane.xlu0 %1903
      %v1905 = vmax.f32 %v1778, %v1780
      %1906 = vmax.xlane.f32.xlu0 %v1905
      %v1907 = vpop.xlane.xlu0 %1906
      %v1908 = vmax.f32 %v1784, %v1786
      %1909 = vmax.xlane.f32.xlu0 %v1908
      %v1910 = vpop.xlane.xlu0 %1909
      %v1911 = vmax.f32 %v1790, %v1792
      %1912 = vmax.xlane.f32.xlu0 %v1911
      %v1913 = vpop.xlane.xlu0 %1912
      %v1914 = vmax.f32 %v1796, %v1798
      %1915 = vmax.xlane.f32.xlu0 %v1914
      %v1916 = vpop.xlane.xlu0 %1915
      %v1917 = vmax.f32 %v1802, %v1804
      %1918 = vmax.xlane.f32.xlu0 %v1917
      %v1919 = vpop.xlane.xlu0 %1918
      %v1920 = vmax.f32 %v1808, %v1810
      %1921 = vmax.xlane.f32.xlu0 %v1920
      %v1922 = vpop.xlane.xlu0 %1921
      %v1923 = vmax.f32 %v1814, %v1816
      %1924 = vmax.xlane.f32.xlu0 %v1923
      %v1925 = vpop.xlane.xlu0 %1924
      %v1926 = vmax.f32 %v1820, %v1822
      %1927 = vmax.xlane.f32.xlu0 %v1926
      %v1928 = vpop.xlane.xlu0 %1927
      %v1929 = vmax.f32 %v1826, %v1828
      %1930 = vmax.xlane.f32.xlu0 %v1929
      %v1931 = vpop.xlane.xlu0 %1930
      %v1932 = vmax.f32 %v1832, %v1834
      %1933 = vmax.xlane.f32.xlu0 %v1932
      %v1934 = vpop.xlane.xlu0 %1933
      %v1935 = vmax.f32 %v1838, %v1840
      %1936 = vmax.xlane.f32.xlu0 %v1935
      %v1937 = vpop.xlane.xlu0 %1936
      %v1938 = vsub.f32 %v1652, %v1844
      %v1939 = vsub.f32 %v1654, %v1844
      %v1940 = vsub.f32 %v1658, %v1847
      %v1941 = vsub.f32 %v1660, %v1847
      %v1942 = vsub.f32 %v1664, %v1850
      %v1943 = vsub.f32 %v1666, %v1850
      %v1944 = vsub.f32 %v1670, %v1853
      %v1945 = vsub.f32 %v1672, %v1853
      %v1946 = vsub.f32 %v1676, %v1856
      %v1947 = vsub.f32 %v1678, %v1856
      %v1948 = vsub.f32 %v1682, %v1859
      %v1949 = vsub.f32 %v1684, %v1859
      %v1950 = vsub.f32 %v1688, %v1862
      %v1951 = vsub.f32 %v1690, %v1862
      %v1952 = vsub.f32 %v1694, %v1865
      %v1953 = vsub.f32 %v1696, %v1865
      %v1954 = vsub.f32 %v1700, %v1868
      %v1955 = vsub.f32 %v1702, %v1868
      %v1956 = vsub.f32 %v1706, %v1871
      %v1957 = vsub.f32 %v1708, %v1871
      %v1958 = vsub.f32 %v1712, %v1874
      %v1959 = vsub.f32 %v1714, %v1874
      %v1960 = vsub.f32 %v1718, %v1877
      %v1961 = vsub.f32 %v1720, %v1877
      %v1962 = vsub.f32 %v1724, %v1880
      %v1963 = vsub.f32 %v1726, %v1880
      %v1964 = vsub.f32 %v1730, %v1883
      %v1965 = vsub.f32 %v1732, %v1883
      %v1966 = vsub.f32 %v1736, %v1886
      %v1967 = vsub.f32 %v1738, %v1886
      %v1968 = vsub.f32 %v1742, %v1889
      %v1969 = vsub.f32 %v1744, %v1889
      %v1970 = vsub.f32 %v1748, %v1892
      %v1971 = vsub.f32 %v1750, %v1892
      %v1972 = vsub.f32 %v1754, %v1895
      %v1973 = vsub.f32 %v1756, %v1895
      %v1974 = vsub.f32 %v1760, %v1898
      %v1975 = vsub.f32 %v1762, %v1898
      %v1976 = vsub.f32 %v1766, %v1901
      %v1977 = vsub.f32 %v1768, %v1901
      %v1978 = vsub.f32 %v1772, %v1904
      %v1979 = vsub.f32 %v1774, %v1904
      %v1980 = vsub.f32 %v1778, %v1907
      %v1981 = vsub.f32 %v1780, %v1907
      %v1982 = vsub.f32 %v1784, %v1910
      %v1983 = vsub.f32 %v1786, %v1910
      %v1984 = vsub.f32 %v1790, %v1913
      %v1985 = vsub.f32 %v1792, %v1913
      %v1986 = vsub.f32 %v1796, %v1916
      %v1987 = vsub.f32 %v1798, %v1916
      %v1988 = vsub.f32 %v1802, %v1919
      %v1989 = vsub.f32 %v1804, %v1919
      %v1990 = vsub.f32 %v1808, %v1922
      %v1991 = vsub.f32 %v1810, %v1922
      %v1992 = vsub.f32 %v1814, %v1925
      %v1993 = vsub.f32 %v1816, %v1925
      %v1994 = vsub.f32 %v1820, %v1928
      %v1995 = vsub.f32 %v1822, %v1928
      %v1996 = vsub.f32 %v1826, %v1931
      %v1997 = vsub.f32 %v1828, %v1931
      %v1998 = vsub.f32 %v1832, %v1934
      %v1999 = vsub.f32 %v1834, %v1934
      %v2000 = vsub.f32 %v1838, %v1937
      %v2001 = vsub.f32 %v1840, %v1937
      %v2002 = vmul.f32 %v1938, 1.442695
      %v2003 = vpow.pop %v2002
      %v2004 = vmul.f32 %v1939, 1.442695
      %v2005 = vpow.pop %v2004
      %v2006 = vmul.f32 %v1940, 1.442695
      %v2007 = vpow.pop %v2006
      %v2008 = vmul.f32 %v1941, 1.442695
      %v2009 = vpow.pop %v2008
      %v2010 = vmul.f32 %v1942, 1.442695
      %v2011 = vpow.pop %v2010
      %v2012 = vmul.f32 %v1943, 1.442695
      %v2013 = vpow.pop %v2012
      %v2014 = vmul.f32 %v1944, 1.442695
      %v2015 = vpow.pop %v2014
      %v2016 = vmul.f32 %v1945, 1.442695
      %v2017 = vpow.pop %v2016
      %v2018 = vmul.f32 %v1946, 1.442695
      %v2019 = vpow.pop %v2018
      %v2020 = vmul.f32 %v1947, 1.442695
      %v2021 = vpow.pop %v2020
      %v2022 = vmul.f32 %v1948, 1.442695
      %v2023 = vpow.pop %v2022
      %v2024 = vmul.f32 %v1949, 1.442695
      %v2025 = vpow.pop %v2024
      %v2026 = vmul.f32 %v1950, 1.442695
      %v2027 = vpow.pop %v2026
      %v2028 = vmul.f32 %v1951, 1.442695
      %v2029 = vpow.pop %v2028
      %v2030 = vmul.f32 %v1952, 1.442695
      %v2031 = vpow.pop %v2030
      %v2032 = vmul.f32 %v1953, 1.442695
      %v2033 = vpow.pop %v2032
      %v2034 = vmul.f32 %v1954, 1.442695
      %v2035 = vpow.pop %v2034
      %v2036 = vmul.f32 %v1955, 1.442695
      %v2037 = vpow.pop %v2036
      %v2038 = vmul.f32 %v1956, 1.442695
      %v2039 = vpow.pop %v2038
      %v2040 = vmul.f32 %v1957, 1.442695
      %v2041 = vpow.pop %v2040
      %v2042 = vmul.f32 %v1958, 1.442695
      %v2043 = vpow.pop %v2042
      %v2044 = vmul.f32 %v1959, 1.442695
      %v2045 = vpow.pop %v2044
      %v2046 = vmul.f32 %v1960, 1.442695
      %v2047 = vpow.pop %v2046
      %v2048 = vmul.f32 %v1961, 1.442695
      %v2049 = vpow.pop %v2048
      %v2050 = vmul.f32 %v1962, 1.442695
      %v2051 = vpow.pop %v2050
      %v2052 = vmul.f32 %v1963, 1.442695
      %v2053 = vpow.pop %v2052
      %v2054 = vmul.f32 %v1964, 1.442695
      %v2055 = vpow.pop %v2054
      %v2056 = vmul.f32 %v1965, 1.442695
      %v2057 = vpow.pop %v2056
      %v2058 = vmul.f32 %v1966, 1.442695
      %v2059 = vpow.pop %v2058
      %v2060 = vmul.f32 %v1967, 1.442695
      %v2061 = vpow.pop %v2060
      %v2062 = vmul.f32 %v1968, 1.442695
      %v2063 = vpow.pop %v2062
      %v2064 = vmul.f32 %v1969, 1.442695
      %v2065 = vpow.pop %v2064
      %v2066 = vmul.f32 %v1970, 1.442695
      %v2067 = vpow.pop %v2066
      %v2068 = vmul.f32 %v1971, 1.442695
      %v2069 = vpow.pop %v2068
      %v2070 = vmul.f32 %v1972, 1.442695
      %v2071 = vpow.pop %v2070
      %v2072 = vmul.f32 %v1973, 1.442695
      %v2073 = vpow.pop %v2072
      %v2074 = vmul.f32 %v1974, 1.442695
      %v2075 = vpow.pop %v2074
      %v2076 = vmul.f32 %v1975, 1.442695
      %v2077 = vpow.pop %v2076
      %v2078 = vmul.f32 %v1976, 1.442695
      %v2079 = vpow.pop %v2078
      %v2080 = vmul.f32 %v1977, 1.442695
      %v2081 = vpow.pop %v2080
      %v2082 = vmul.f32 %v1978, 1.442695
      %v2083 = vpow.pop %v2082
      %v2084 = vmul.f32 %v1979, 1.442695
      %v2085 = vpow.pop %v2084
      %v2086 = vmul.f32 %v1980, 1.442695
      %v2087 = vpow.pop %v2086
      %v2088 = vmul.f32 %v1981, 1.442695
      %v2089 = vpow.pop %v2088
      %v2090 = vmul.f32 %v1982, 1.442695
      %v2091 = vpow.pop %v2090
      %v2092 = vmul.f32 %v1983, 1.442695
      %v2093 = vpow.pop %v2092
      %v2094 = vmul.f32 %v1984, 1.442695
      %v2095 = vpow.pop %v2094
      %v2096 = vmul.f32 %v1985, 1.442695
      %v2097 = vpow.pop %v2096
      %v2098 = vmul.f32 %v1986, 1.442695
      %v2099 = vpow.pop %v2098
      %v2100 = vmul.f32 %v1987, 1.442695
      %v2101 = vpow.pop %v2100
      %v2102 = vmul.f32 %v1988, 1.442695
      %v2103 = vpow.pop %v2102
      %v2104 = vmul.f32 %v1989, 1.442695
      %v2105 = vpow.pop %v2104
      %v2106 = vmul.f32 %v1990, 1.442695
      %v2107 = vpow.pop %v2106
      %v2108 = vmul.f32 %v1991, 1.442695
      %v2109 = vpow.pop %v2108
      %v2110 = vmul.f32 %v1992, 1.442695
      %v2111 = vpow.pop %v2110
      %v2112 = vmul.f32 %v1993, 1.442695
      %v2113 = vpow.pop %v2112
      %v2114 = vmul.f32 %v1994, 1.442695
      %v2115 = vpow.pop %v2114
      %v2116 = vmul.f32 %v1995, 1.442695
      %v2117 = vpow.pop %v2116
      %v2118 = vmul.f32 %v1996, 1.442695
      %v2119 = vpow.pop %v2118
      %v2120 = vmul.f32 %v1997, 1.442695
      %v2121 = vpow.pop %v2120
      %v2122 = vmul.f32 %v1998, 1.442695
      %v2123 = vpow.pop %v2122
      %v2124 = vmul.f32 %v1999, 1.442695
      %v2125 = vpow.pop %v2124
      %v2126 = vmul.f32 %v2000, 1.442695
      %v2127 = vpow.pop %v2126
      %v2128 = vmul.f32 %v2001, 1.442695
      %v2129 = vpow.pop %v2128
      %v2130 = vadd.f32 %v2003, %v2005
      %2131 = vadd.xlane.f32.xlu0 %v2130
      %v2132 = vpop.xlane.xlu0 %2131
      %v2133 = vadd.f32 %v2007, %v2009
      %2134 = vadd.xlane.f32.xlu0 %v2133
      %v2135 = vpop.xlane.xlu0 %2134
      %v2136 = vadd.f32 %v2011, %v2013
      %2137 = vadd.xlane.f32.xlu0 %v2136
      %v2138 = vpop.xlane.xlu0 %2137
      %v2139 = vadd.f32 %v2015, %v2017
      %2140 = vadd.xlane.f32.xlu0 %v2139
      %v2141 = vpop.xlane.xlu0 %2140
      %v2142 = vadd.f32 %v2019, %v2021
      %2143 = vadd.xlane.f32.xlu0 %v2142
      %v2144 = vpop.xlane.xlu0 %2143
      %v2145 = vadd.f32 %v2023, %v2025
      %2146 = vadd.xlane.f32.xlu0 %v2145
      %v2147 = vpop.xlane.xlu0 %2146
      %v2148 = vadd.f32 %v2027, %v2029
      %2149 = vadd.xlane.f32.xlu0 %v2148
      %v2150 = vpop.xlane.xlu0 %2149
      %v2151 = vadd.f32 %v2031, %v2033
      %2152 = vadd.xlane.f32.xlu0 %v2151
      %v2153 = vpop.xlane.xlu0 %2152
      %v2154 = vadd.f32 %v2035, %v2037
      %2155 = vadd.xlane.f32.xlu0 %v2154
      %v2156 = vpop.xlane.xlu0 %2155
      %v2157 = vadd.f32 %v2039, %v2041
      %2158 = vadd.xlane.f32.xlu0 %v2157
      %v2159 = vpop.xlane.xlu0 %2158
      %v2160 = vadd.f32 %v2043, %v2045
      %2161 = vadd.xlane.f32.xlu0 %v2160
      %v2162 = vpop.xlane.xlu0 %2161
      %v2163 = vadd.f32 %v2047, %v2049
      %2164 = vadd.xlane.f32.xlu0 %v2163
      %v2165 = vpop.xlane.xlu0 %2164
      %v2166 = vadd.f32 %v2051, %v2053
      %2167 = vadd.xlane.f32.xlu0 %v2166
      %v2168 = vpop.xlane.xlu0 %2167
      %v2169 = vadd.f32 %v2055, %v2057
      %2170 = vadd.xlane.f32.xlu0 %v2169
      %v2171 = vpop.xlane.xlu0 %2170
      %v2172 = vadd.f32 %v2059, %v2061
      %2173 = vadd.xlane.f32.xlu0 %v2172
      %v2174 = vpop.xlane.xlu0 %2173
      %v2175 = vadd.f32 %v2063, %v2065
      %2176 = vadd.xlane.f32.xlu0 %v2175
      %v2177 = vpop.xlane.xlu0 %2176
      %v2178 = vadd.f32 %v2067, %v2069
      %2179 = vadd.xlane.f32.xlu0 %v2178
      %v2180 = vpop.xlane.xlu0 %2179
      %v2181 = vadd.f32 %v2071, %v2073
      %2182 = vadd.xlane.f32.xlu0 %v2181
      %v2183 = vpop.xlane.xlu0 %2182
      %v2184 = vadd.f32 %v2075, %v2077
      %2185 = vadd.xlane.f32.xlu0 %v2184
      %v2186 = vpop.xlane.xlu0 %2185
      %v2187 = vadd.f32 %v2079, %v2081
      %2188 = vadd.xlane.f32.xlu0 %v2187
      %v2189 = vpop.xlane.xlu0 %2188
      %v2190 = vadd.f32 %v2083, %v2085
      %2191 = vadd.xlane.f32.xlu0 %v2190
      %v2192 = vpop.xlane.xlu0 %2191
      %v2193 = vadd.f32 %v2087, %v2089
      %2194 = vadd.xlane.f32.xlu0 %v2193
      %v2195 = vpop.xlane.xlu0 %2194
      %v2196 = vadd.f32 %v2091, %v2093
      %2197 = vadd.xlane.f32.xlu0 %v2196
      %v2198 = vpop.xlane.xlu0 %2197
      %v2199 = vadd.f32 %v2095, %v2097
      %2200 = vadd.xlane.f32.xlu0 %v2199
      %v2201 = vpop.xlane.xlu0 %2200
      %v2202 = vadd.f32 %v2099, %v2101
      %2203 = vadd.xlane.f32.xlu0 %v2202
      %v2204 = vpop.xlane.xlu0 %2203
      %v2205 = vadd.f32 %v2103, %v2105
      %2206 = vadd.xlane.f32.xlu0 %v2205
      %v2207 = vpop.xlane.xlu0 %2206
      %v2208 = vadd.f32 %v2107, %v2109
      %2209 = vadd.xlane.f32.xlu0 %v2208
      %v2210 = vpop.xlane.xlu0 %2209
      %v2211 = vadd.f32 %v2111, %v2113
      %2212 = vadd.xlane.f32.xlu0 %v2211
      %v2213 = vpop.xlane.xlu0 %2212
      %v2214 = vadd.f32 %v2115, %v2117
      %2215 = vadd.xlane.f32.xlu0 %v2214
      %v2216 = vpop.xlane.xlu0 %2215
      %v2217 = vadd.f32 %v2119, %v2121
      %2218 = vadd.xlane.f32.xlu0 %v2217
      %v2219 = vpop.xlane.xlu0 %2218
      %v2220 = vadd.f32 %v2123, %v2125
      %2221 = vadd.xlane.f32.xlu0 %v2220
      %v2222 = vpop.xlane.xlu0 %2221
      %v2223 = vadd.f32 %v2127, %v2129
      %2224 = vadd.xlane.f32.xlu0 %v2223
      %v2225 = vpop.xlane.xlu0 %2224
      %v2226 = vrcp.pop %v2132
      %v2227 = vrcp.pop %v2135
      %v2228 = vrcp.pop %v2138
      %v2229 = vrcp.pop %v2141
      %v2230 = vrcp.pop %v2144
      %v2231 = vrcp.pop %v2147
      %v2232 = vrcp.pop %v2150
      %v2233 = vrcp.pop %v2153
      %v2234 = vrcp.pop %v2156
      %v2235 = vrcp.pop %v2159
      %v2236 = vrcp.pop %v2162
      %v2237 = vrcp.pop %v2165
      %v2238 = vrcp.pop %v2168
      %v2239 = vrcp.pop %v2171
      %v2240 = vrcp.pop %v2174
      %v2241 = vrcp.pop %v2177
      %v2242 = vrcp.pop %v2180
      %v2243 = vrcp.pop %v2183
      %v2244 = vrcp.pop %v2186
      %v2245 = vrcp.pop %v2189
      %v2246 = vrcp.pop %v2192
      %v2247 = vrcp.pop %v2195
      %v2248 = vrcp.pop %v2198
      %v2249 = vrcp.pop %v2201
      %v2250 = vrcp.pop %v2204
      %v2251 = vrcp.pop %v2207
      %v2252 = vrcp.pop %v2210
      %v2253 = vrcp.pop %v2213
      %v2254 = vrcp.pop %v2216
      %v2255 = vrcp.pop %v2219
      %v2256 = vrcp.pop %v2222
      %v2257 = vrcp.pop %v2225
      %v2258 = vmul.f32 %v2003, %v2226
      %v2259 = vmul.f32 %v2005, %v2226
      %v2260 = vmul.f32 %v2007, %v2227
      %v2261 = vmul.f32 %v2009, %v2227
      %v2262 = vmul.f32 %v2011, %v2228
      %v2263 = vmul.f32 %v2013, %v2228
      %v2264 = vmul.f32 %v2015, %v2229
      %v2265 = vmul.f32 %v2017, %v2229
      %v2266 = vmul.f32 %v2019, %v2230
      %v2267 = vmul.f32 %v2021, %v2230
      %v2268 = vmul.f32 %v2023, %v2231
      %v2269 = vmul.f32 %v2025, %v2231
      %v2270 = vmul.f32 %v2027, %v2232
      %v2271 = vmul.f32 %v2029, %v2232
      %v2272 = vmul.f32 %v2031, %v2233
      %v2273 = vmul.f32 %v2033, %v2233
      %v2274 = vmul.f32 %v2035, %v2234
      %v2275 = vmul.f32 %v2037, %v2234
      %v2276 = vmul.f32 %v2039, %v2235
      %v2277 = vmul.f32 %v2041, %v2235
      %v2278 = vmul.f32 %v2043, %v2236
      %v2279 = vmul.f32 %v2045, %v2236
      %v2280 = vmul.f32 %v2047, %v2237
      %v2281 = vmul.f32 %v2049, %v2237
      %v2282 = vmul.f32 %v2051, %v2238
      %v2283 = vmul.f32 %v2053, %v2238
      %v2284 = vmul.f32 %v2055, %v2239
      %v2285 = vmul.f32 %v2057, %v2239
      %v2286 = vmul.f32 %v2059, %v2240
      %v2287 = vmul.f32 %v2061, %v2240
      %v2288 = vmul.f32 %v2063, %v2241
      %v2289 = vmul.f32 %v2065, %v2241
      %v2290 = vmul.f32 %v2067, %v2242
      %v2291 = vmul.f32 %v2069, %v2242
      %v2292 = vmul.f32 %v2071, %v2243
      %v2293 = vmul.f32 %v2073, %v2243
      %v2294 = vmul.f32 %v2075, %v2244
      %v2295 = vmul.f32 %v2077, %v2244
      %v2296 = vmul.f32 %v2079, %v2245
      %v2297 = vmul.f32 %v2081, %v2245
      %v2298 = vmul.f32 %v2083, %v2246
      %v2299 = vmul.f32 %v2085, %v2246
      %v2300 = vmul.f32 %v2087, %v2247
      %v2301 = vmul.f32 %v2089, %v2247
      %v2302 = vmul.f32 %v2091, %v2248
      %v2303 = vmul.f32 %v2093, %v2248
      %v2304 = vmul.f32 %v2095, %v2249
      %v2305 = vmul.f32 %v2097, %v2249
      %v2306 = vmul.f32 %v2099, %v2250
      %v2307 = vmul.f32 %v2101, %v2250
      %v2308 = vmul.f32 %v2103, %v2251
      %v2309 = vmul.f32 %v2105, %v2251
      %v2310 = vmul.f32 %v2107, %v2252
      %v2311 = vmul.f32 %v2109, %v2252
      %v2312 = vmul.f32 %v2111, %v2253
      %v2313 = vmul.f32 %v2113, %v2253
      %v2314 = vmul.f32 %v2115, %v2254
      %v2315 = vmul.f32 %v2117, %v2254
      %v2316 = vmul.f32 %v2119, %v2255
      %v2317 = vmul.f32 %v2121, %v2255
      %v2318 = vmul.f32 %v2123, %v2256
      %v2319 = vmul.f32 %v2125, %v2256
      %v2320 = vmul.f32 %v2127, %v2257
      %v2321 = vmul.f32 %v2129, %v2257
      %v2324 = vrot.slane %v408, 2
      %v2325 = vrot.slane %v410, 2
      %2328 = vmatprep.subr.mxu0 %v2259
      %2329 = vmatpush1.xpose.msra.mxu0 %v2258
      %2330 = vmatprep.subr.mxu0 %v2261
      %2331 = vmatpush1.xpose.msra.mxu0 %v2260
      %2332 = vmatprep.subr.mxu0 %v2263
      %2333 = vmatpush1.xpose.msra.mxu0 %v2262
      %2334 = vmatprep.subr.mxu0 %v2265
      %2335 = vmatpush1.xpose.msra.mxu0 %v2264
      %2336 = vmatprep.subr.mxu0 %v2267
      %2337 = vmatpush1.xpose.msra.mxu0 %v2266
      %2338 = vmatprep.subr.mxu0 %v2269
      %2339 = vmatpush1.xpose.msra.mxu0 %v2268
      %2340 = vmatprep.subr.mxu0 %v2271
      %2341 = vmatpush1.xpose.msra.mxu0 %v2270
      %2342 = vmatprep.subr.mxu0 %v2273
      %2343 = vmatpush1.xpose.msra.mxu0 %v2272
      %2344 = vmatprep.subr.mxu0 %v2275
      %2345 = vmatpush1.xpose.msra.mxu0 %v2274
      %2346 = vmatprep.subr.mxu0 %v2277
      %2347 = vmatpush1.xpose.msra.mxu0 %v2276
      %2348 = vmatprep.subr.mxu0 %v2279
      %2349 = vmatpush1.xpose.msra.mxu0 %v2278
      %2350 = vmatprep.subr.mxu0 %v2281
      %2351 = vmatpush1.xpose.msra.mxu0 %v2280
      %2352 = vmatprep.subr.mxu0 %v2283
      %2353 = vmatpush1.xpose.msra.mxu0 %v2282
      %2354 = vmatprep.subr.mxu0 %v2285
      %2355 = vmatpush1.xpose.msra.mxu0 %v2284
      %2356 = vmatprep.subr.mxu0 %v2287
      %2357 = vmatpush1.xpose.msra.mxu0 %v2286
      %2358 = vmatprep.subr.mxu0 %v2289
      %2359 = vmatpush1.xpose.msra.mxu0 %v2288
      %2360 = vmatprep.subr.mxu0 %v2291
      %2361 = vmatpush1.xpose.msra.mxu0 %v2290
      %2362 = vmatprep.subr.mxu0 %v2293
      %2363 = vmatpush1.xpose.msra.mxu0 %v2292
      %2364 = vmatprep.subr.mxu0 %v2295
      %2365 = vmatpush1.xpose.msra.mxu0 %v2294
      %2366 = vmatprep.subr.mxu0 %v2297
      %2367 = vmatpush1.xpose.msra.mxu0 %v2296
      %2368 = vmatprep.subr.mxu0 %v2299
      %2369 = vmatpush1.xpose.msra.mxu0 %v2298
      %2370 = vmatprep.subr.mxu0 %v2301
      %2371 = vmatpush1.xpose.msra.mxu0 %v2300
      %2372 = vmatprep.subr.mxu0 %v2303
      %2373 = vmatpush1.xpose.msra.mxu0 %v2302
      %2374 = vmatprep.subr.mxu0 %v2305
      %2375 = vmatpush1.xpose.msra.mxu0 %v2304
      %2376 = vmatprep.subr.mxu0 %v2307
      %2377 = vmatpush1.xpose.msra.mxu0 %v2306
      %2378 = vmatprep.subr.mxu0 %v2309
      %2379 = vmatpush1.xpose.msra.mxu0 %v2308
      %2380 = vmatprep.subr.mxu0 %v2311
      %2381 = vmatpush1.xpose.msra.mxu0 %v2310
      %2382 = vmatprep.subr.mxu0 %v2313
      %2383 = vmatpush1.xpose.msra.mxu0 %v2312
      %2384 = vmatprep.subr.mxu0 %v2315
      %2385 = vmatpush1.xpose.msra.mxu0 %v2314
      %2386 = vmatprep.subr.mxu0 %v2317
      %2387 = vmatpush1.xpose.msra.mxu0 %v2316
      %2388 = vmatprep.subr.mxu0 %v2319
      %2389 = vmatpush1.xpose.msra.mxu0 %v2318
      %2390 = vmatprep.subr.mxu0 %v2321
      %2391 = vmatpush1.xpose.msra.mxu0 %v2320
      %2392 = vmatprep.mubr.f32.mxu0 %v2325
      %2393 = vmatmul.mubr.f32.gmra.mrb[0].mxu0 %v2324
      %v2394 = vpop.f32.mrb[0].mxu0
      %v2395 = vadd.f32 0.0, %v2394
      %v2396 = vpop.f32.mrb[0].mxu0
      %v2397 = vadd.f32 0.0, %v2396
      %2398 = vdwg.mxu0
      %v2399 = vrot.slane %v396, 4
      %v2400 = vrot.slane %v398, 4
      %v2403 = vrot.slane %v302, 2
      %v2404 = vrot.slane %v303, 2
      %v2407 = vsel %vm418, %v2399, %v2403
      %v2408 = vsel %vm418, %v2400, %v2404
      %v2409 = vrot.slane %v402, 4
      %v2410 = vrot.slane %v404, 4
      %v2413 = vsel %vm418, %v2409, %v1405
      %v2414 = vsel %vm418, %v2410, %v1406
      %2415 = vxpose.xlu0.b32.start [1/16] %v2407, 128
      %2416 = vxpose.xlu0.b32.cont [2/16] 0.0, 128
      %2417 = vxpose.xlu0.b32.cont [3/16] 0.0, 128
      %2418 = vxpose.xlu0.b32.cont [4/16] 0.0, 128
      %2419 = vxpose.xlu0.b32.cont [5/16] 0.0, 128
      %2420 = vxpose.xlu0.b32.cont [6/16] 0.0, 128
      %2421 = vxpose.xlu0.b32.cont [7/16] 0.0, 128
      %2422 = vxpose.xlu0.b32.cont [8/16] 0.0, 128
      %2423 = vxpose.xlu0.b32.cont [9/16] 0.0, 128
      %2424 = vxpose.xlu0.b32.cont [10/16] 0.0, 128
      %2425 = vxpose.xlu0.b32.cont [11/16] 0.0, 128
      %2426 = vxpose.xlu0.b32.cont [12/16] 0.0, 128
      %2427 = vxpose.xlu0.b32.cont [13/16] 0.0, 128
      %2428 = vxpose.xlu0.b32.cont [14/16] 0.0, 128
      %2429 = vxpose.xlu0.b32.cont [15/16] 0.0, 128
      %2430 = vxpose.xlu0.b32.end [16/16] 0.0, 128
      %v2431 = vpop.trf.xlu0
      %v2432 = vpop.trf.xlu0
      %v2433 = vpop.trf.xlu0
      %v2434 = vpop.trf.xlu0
      %v2435 = vpop.trf.xlu0
      %v2436 = vpop.trf.xlu0
      %v2437 = vpop.trf.xlu0
      %v2438 = vpop.trf.xlu0
      %v2439 = vpop.trf.xlu0
      %v2440 = vpop.trf.xlu0
      %v2441 = vpop.trf.xlu0
      %v2442 = vpop.trf.xlu0
      %v2443 = vpop.trf.xlu0
      %v2444 = vpop.trf.xlu0
      %v2445 = vpop.trf.xlu0
      %v2446 = vpop.trf.xlu0
      %2447 = vxpose.xlu0.b32.start [1/16] %v2408, 128
      %2448 = vxpose.xlu0.b32.cont [2/16] 0.0, 128
      %2449 = vxpose.xlu0.b32.cont [3/16] 0.0, 128
      %2450 = vxpose.xlu0.b32.cont [4/16] 0.0, 128
      %2451 = vxpose.xlu0.b32.cont [5/16] 0.0, 128
      %2452 = vxpose.xlu0.b32.cont [6/16] 0.0, 128
      %2453 = vxpose.xlu0.b32.cont [7/16] 0.0, 128
      %2454 = vxpose.xlu0.b32.cont [8/16] 0.0, 128
      %2455 = vxpose.xlu0.b32.cont [9/16] 0.0, 128
      %2456 = vxpose.xlu0.b32.cont [10/16] 0.0, 128
      %2457 = vxpose.xlu0.b32.cont [11/16] 0.0, 128
      %2458 = vxpose.xlu0.b32.cont [12/16] 0.0, 128
      %2459 = vxpose.xlu0.b32.cont [13/16] 0.0, 128
      %2460 = vxpose.xlu0.b32.cont [14/16] 0.0, 128
      %2461 = vxpose.xlu0.b32.cont [15/16] 0.0, 128
      %2462 = vxpose.xlu0.b32.end [16/16] 0.0, 128
      %v2463 = vpop.trf.xlu0
      %v2464 = vpop.trf.xlu0
      %v2465 = vpop.trf.xlu0
      %v2466 = vpop.trf.xlu0
      %v2467 = vpop.trf.xlu0
      %v2468 = vpop.trf.xlu0
      %v2469 = vpop.trf.xlu0
      %v2470 = vpop.trf.xlu0
      %v2471 = vpop.trf.xlu0
      %v2472 = vpop.trf.xlu0
      %v2473 = vpop.trf.xlu0
      %v2474 = vpop.trf.xlu0
      %v2475 = vpop.trf.xlu0
      %v2476 = vpop.trf.xlu0
      %v2477 = vpop.trf.xlu0
      %v2478 = vpop.trf.xlu0
      %v2480 = vsel %vm493, %v2431, 0
      %v2483 = vsel %vm493, %v2432, 0
      %v2486 = vsel %vm493, %v2433, 0
      %v2489 = vsel %vm493, %v2434, 0
      %v2492 = vsel %vm493, %v2435, 0
      %v2495 = vsel %vm493, %v2436, 0
      %v2498 = vsel %vm493, %v2437, 0
      %v2501 = vsel %vm493, %v2438, 0
      %v2504 = vsel %vm493, %v2439, 0
      %v2507 = vsel %vm493, %v2440, 0
      %v2510 = vsel %vm493, %v2441, 0
      %v2513 = vsel %vm493, %v2442, 0
      %v2516 = vsel %vm493, %v2443, 0
      %v2519 = vsel %vm493, %v2444, 0
      %v2522 = vsel %vm493, %v2445, 0
      %v2525 = vsel %vm493, %v2446, 0
      %v2528 = vsel %vm493, %v2463, 0
      %v2531 = vsel %vm493, %v2464, 0
      %v2534 = vsel %vm493, %v2465, 0
      %v2537 = vsel %vm493, %v2466, 0
      %v2540 = vsel %vm493, %v2467, 0
      %v2543 = vsel %vm493, %v2468, 0
      %v2546 = vsel %vm493, %v2469, 0
      %v2549 = vsel %vm493, %v2470, 0
      %v2552 = vsel %vm493, %v2471, 0
      %v2555 = vsel %vm493, %v2472, 0
      %v2558 = vsel %vm493, %v2473, 0
      %v2561 = vsel %vm493, %v2474, 0
      %v2564 = vsel %vm493, %v2475, 0
      %v2567 = vsel %vm493, %v2476, 0
      %v2570 = vsel %vm493, %v2477, 0
      %v2573 = vsel %vm493, %v2478, 0
      %v2576 = vsel %vm590, %v2413, 0
      %v2579 = vsel %vm590, %v2414, 0
      %2581 = vmatprep.subr.mxu0 %v2579
      %2582 = vmatpush1.msra.mxu0 %v2576
      %2583 = vmatprep.subr.mxu0 0.0
      %2584 = vmatpush1.msra.mxu0 0.0
      %2585 = vmatprep.subr.mxu0 0.0
      %2586 = vmatpush1.msra.mxu0 0.0
      %2587 = vmatprep.subr.mxu0 0.0
      %2588 = vmatpush1.msra.mxu0 0.0
      %2589 = vmatprep.subr.mxu0 0.0
      %2590 = vmatpush1.msra.mxu0 0.0
      %2591 = vmatprep.subr.mxu0 0.0
      %2592 = vmatpush1.msra.mxu0 0.0
      %2593 = vmatprep.subr.mxu0 0.0
      %2594 = vmatpush1.msra.mxu0 0.0
      %2595 = vmatprep.subr.mxu0 0.0
      %2596 = vmatpush1.msra.mxu0 0.0
      %2597 = vmatprep.subr.mxu0 0.0
      %2598 = vmatpush1.msra.mxu0 0.0
      %2599 = vmatprep.subr.mxu0 0.0
      %2600 = vmatpush1.msra.mxu0 0.0
      %2601 = vmatprep.subr.mxu0 0.0
      %2602 = vmatpush1.msra.mxu0 0.0
      %2603 = vmatprep.subr.mxu0 0.0
      %2604 = vmatpush1.msra.mxu0 0.0
      %2605 = vmatprep.subr.mxu0 0.0
      %2606 = vmatpush1.msra.mxu0 0.0
      %2607 = vmatprep.subr.mxu0 0.0
      %2608 = vmatpush1.msra.mxu0 0.0
      %2609 = vmatprep.subr.mxu0 0.0
      %2610 = vmatpush1.msra.mxu0 0.0
      %2611 = vmatprep.subr.mxu0 0.0
      %2612 = vmatpush1.msra.mxu0 0.0
      %2613 = vmatprep.subr.mxu0 0.0
      %2614 = vmatpush1.msra.mxu0 0.0
      %2615 = vmatprep.subr.mxu0 0.0
      %2616 = vmatpush1.msra.mxu0 0.0
      %2617 = vmatprep.subr.mxu0 0.0
      %2618 = vmatpush1.msra.mxu0 0.0
      %2619 = vmatprep.subr.mxu0 0.0
      %2620 = vmatpush1.msra.mxu0 0.0
      %2621 = vmatprep.subr.mxu0 0.0
      %2622 = vmatpush1.msra.mxu0 0.0
      %2623 = vmatprep.subr.mxu0 0.0
      %2624 = vmatpush1.msra.mxu0 0.0
      %2625 = vmatprep.subr.mxu0 0.0
      %2626 = vmatpush1.msra.mxu0 0.0
      %2627 = vmatprep.subr.mxu0 0.0
      %2628 = vmatpush1.msra.mxu0 0.0
      %2629 = vmatprep.subr.mxu0 0.0
      %2630 = vmatpush1.msra.mxu0 0.0
      %2631 = vmatprep.subr.mxu0 0.0
      %2632 = vmatpush1.msra.mxu0 0.0
      %2633 = vmatprep.subr.mxu0 0.0
      %2634 = vmatpush1.msra.mxu0 0.0
      %2635 = vmatprep.subr.mxu0 0.0
      %2636 = vmatpush1.msra.mxu0 0.0
      %2637 = vmatprep.subr.mxu0 0.0
      %2638 = vmatpush1.msra.mxu0 0.0
      %2639 = vmatprep.subr.mxu0 0.0
      %2640 = vmatpush1.msra.mxu0 0.0
      %2641 = vmatprep.subr.mxu0 0.0
      %2642 = vmatpush1.msra.mxu0 0.0
      %2643 = vmatprep.subr.mxu0 0.0
      %2644 = vmatpush1.msra.mxu0 0.0
      %2645 = vmatprep.mubr.f32.mxu0 0.0
      %2646 = vmatmul.mubr.f32.gmra.mrb[0].mxu0 %v2480
      %v2647 = vpop.f32.mrb[0].mxu0
      %v2648 = vadd.f32 0.0, %v2647
      %v2649 = vpop.f32.mrb[0].mxu0
      %v2650 = vadd.f32 0.0, %v2649
      %2651 = vmatprep.mubr.f32.mxu0 0.0
      %2652 = vmatmul.mubr.f32.gmra.mrb[0].mxu0 %v2483
      %v2653 = vpop.f32.mrb[0].mxu0
      %v2654 = vadd.f32 0.0, %v2653
      %v2655 = vpop.f32.mrb[0].mxu0
      %v2656 = vadd.f32 0.0, %v2655
      %2657 = vmatprep.mubr.f32.mxu0 0.0
      %2658 = vmatmul.mubr.f32.gmra.mrb[0].mxu0 %v2486
      %v2659 = vpop.f32.mrb[0].mxu0
      %v2660 = vadd.f32 0.0, %v2659
      %v2661 = vpop.f32.mrb[0].mxu0
      %v2662 = vadd.f32 0.0, %v2661
      %2663 = vmatprep.mubr.f32.mxu0 0.0
      %2664 = vmatmul.mubr.f32.gmra.mrb[0].mxu0 %v2489
      %v2665 = vpop.f32.mrb[0].mxu0
      %v2666 = vadd.f32 0.0, %v2665
      %v2667 = vpop.f32.mrb[0].mxu0
      %v2668 = vadd.f32 0.0, %v2667
      %2669 = vmatprep.mubr.f32.mxu0 0.0
      %2670 = vmatmul.mubr.f32.gmra.mrb[0].mxu0 %v2492
      %v2671 = vpop.f32.mrb[0].mxu0
      %v2672 = vadd.f32 0.0, %v2671
      %v2673 = vpop.f32.mrb[0].mxu0
      %v2674 = vadd.f32 0.0, %v2673
      %2675 = vmatprep.mubr.f32.mxu0 0.0
      %2676 = vmatmul.mubr.f32.gmra.mrb[0].mxu0 %v2495
      %v2677 = vpop.f32.mrb[0].mxu0
      %v2678 = vadd.f32 0.0, %v2677
      %v2679 = vpop.f32.mrb[0].mxu0
      %v2680 = vadd.f32 0.0, %v2679
      %2681 = vmatprep.mubr.f32.mxu0 0.0
      %2682 = vmatmul.mubr.f32.gmra.mrb[0].mxu0 %v2498
      %v2683 = vpop.f32.mrb[0].mxu0
      %v2684 = vadd.f32 0.0, %v2683
      %v2685 = vpop.f32.mrb[0].mxu0
      %v2686 = vadd.f32 0.0, %v2685
      %2687 = vmatprep.mubr.f32.mxu0 0.0
      %2688 = vmatmul.mubr.f32.gmra.mrb[0].mxu0 %v2501
      %v2689 = vpop.f32.mrb[0].mxu0
      %v2690 = vadd.f32 0.0, %v2689
      %v2691 = vpop.f32.mrb[0].mxu0
      %v2692 = vadd.f32 0.0, %v2691
      %2693 = vmatprep.mubr.f32.mxu0 0.0
      %2694 = vmatmul.mubr.f32.gmra.mrb[0].mxu0 %v2504
      %v2695 = vpop.f32.mrb[0].mxu0
      %v2696 = vadd.f32 0.0, %v2695
      %v2697 = vpop.f32.mrb[0].mxu0
      %v2698 = vadd.f32 0.0, %v2697
      %2699 = vmatprep.mubr.f32.mxu0 0.0
      %2700 = vmatmul.mubr.f32.gmra.mrb[0].mxu0 %v2507
      %v2701 = vpop.f32.mrb[0].mxu0
      %v2702 = vadd.f32 0.0, %v2701
      %v2703 = vpop.f32.mrb[0].mxu0
      %v2704 = vadd.f32 0.0, %v2703
      %2705 = vmatprep.mubr.f32.mxu0 0.0
      %2706 = vmatmul.mubr.f32.gmra.mrb[0].mxu0 %v2510
      %v2707 = vpop.f32.mrb[0].mxu0
      %v2708 = vadd.f32 0.0, %v2707
      %v2709 = vpop.f32.mrb[0].mxu0
      %v2710 = vadd.f32 0.0, %v2709
      %2711 = vmatprep.mubr.f32.mxu0 0.0
      %2712 = vmatmul.mubr.f32.gmra.mrb[0].mxu0 %v2513
      %v2713 = vpop.f32.mrb[0].mxu0
      %v2714 = vadd.f32 0.0, %v2713
      %v2715 = vpop.f32.mrb[0].mxu0
      %v2716 = vadd.f32 0.0, %v2715
      %2717 = vmatprep.mubr.f32.mxu0 0.0
      %2718 = vmatmul.mubr.f32.gmra.mrb[0].mxu0 %v2516
      %v2719 = vpop.f32.mrb[0].mxu0
      %v2720 = vadd.f32 0.0, %v2719
      %v2721 = vpop.f32.mrb[0].mxu0
      %v2722 = vadd.f32 0.0, %v2721
      %2723 = vmatprep.mubr.f32.mxu0 0.0
      %2724 = vmatmul.mubr.f32.gmra.mrb[0].mxu0 %v2519
      %v2725 = vpop.f32.mrb[0].mxu0
      %v2726 = vadd.f32 0.0, %v2725
      %v2727 = vpop.f32.mrb[0].mxu0
      %v2728 = vadd.f32 0.0, %v2727
      %2729 = vmatprep.mubr.f32.mxu0 0.0
      %2730 = vmatmul.mubr.f32.gmra.mrb[0].mxu0 %v2522
      %v2731 = vpop.f32.mrb[0].mxu0
      %v2732 = vadd.f32 0.0, %v2731
      %v2733 = vpop.f32.mrb[0].mxu0
      %v2734 = vadd.f32 0.0, %v2733
      %2735 = vmatprep.mubr.f32.mxu0 0.0
      %2736 = vmatmul.mubr.f32.gmra.mrb[0].mxu0 %v2525
      %v2737 = vpop.f32.mrb[0].mxu0
      %v2738 = vadd.f32 0.0, %v2737
      %v2739 = vpop.f32.mrb[0].mxu0
      %v2740 = vadd.f32 0.0, %v2739
      %2741 = vmatprep.mubr.f32.mxu0 0.0
      %2742 = vmatmul.mubr.f32.gmra.mrb[0].mxu0 %v2528
      %v2743 = vpop.f32.mrb[0].mxu0
      %v2744 = vadd.f32 0.0, %v2743
      %v2745 = vpop.f32.mrb[0].mxu0
      %v2746 = vadd.f32 0.0, %v2745
      %2747 = vmatprep.mubr.f32.mxu0 0.0
      %2748 = vmatmul.mubr.f32.gmra.mrb[0].mxu0 %v2531
      %v2749 = vpop.f32.mrb[0].mxu0
      %v2750 = vadd.f32 0.0, %v2749
      %v2751 = vpop.f32.mrb[0].mxu0
      %v2752 = vadd.f32 0.0, %v2751
      %2753 = vmatprep.mubr.f32.mxu0 0.0
      %2754 = vmatmul.mubr.f32.gmra.mrb[0].mxu0 %v2534
      %v2755 = vpop.f32.mrb[0].mxu0
      %v2756 = vadd.f32 0.0, %v2755
      %v2757 = vpop.f32.mrb[0].mxu0
      %v2758 = vadd.f32 0.0, %v2757
      %2759 = vmatprep.mubr.f32.mxu0 0.0
      %2760 = vmatmul.mubr.f32.gmra.mrb[0].mxu0 %v2537
      %v2761 = vpop.f32.mrb[0].mxu0
      %v2762 = vadd.f32 0.0, %v2761
      %v2763 = vpop.f32.mrb[0].mxu0
      %v2764 = vadd.f32 0.0, %v2763
      %2765 = vmatprep.mubr.f32.mxu0 0.0
      %2766 = vmatmul.mubr.f32.gmra.mrb[0].mxu0 %v2540
      %v2767 = vpop.f32.mrb[0].mxu0
      %v2768 = vadd.f32 0.0, %v2767
      %v2769 = vpop.f32.mrb[0].mxu0
      %v2770 = vadd.f32 0.0, %v2769
      %2771 = vmatprep.mubr.f32.mxu0 0.0
      %2772 = vmatmul.mubr.f32.gmra.mrb[0].mxu0 %v2543
      %v2773 = vpop.f32.mrb[0].mxu0
      %v2774 = vadd.f32 0.0, %v2773
      %v2775 = vpop.f32.mrb[0].mxu0
      %v2776 = vadd.f32 0.0, %v2775
      %2777 = vmatprep.mubr.f32.mxu0 0.0
      %2778 = vmatmul.mubr.f32.gmra.mrb[0].mxu0 %v2546
      %v2779 = vpop.f32.mrb[0].mxu0
      %v2780 = vadd.f32 0.0, %v2779
      %v2781 = vpop.f32.mrb[0].mxu0
      %v2782 = vadd.f32 0.0, %v2781
      %2783 = vmatprep.mubr.f32.mxu0 0.0
      %2784 = vmatmul.mubr.f32.gmra.mrb[0].mxu0 %v2549
      %v2785 = vpop.f32.mrb[0].mxu0
      %v2786 = vadd.f32 0.0, %v2785
      %v2787 = vpop.f32.mrb[0].mxu0
      %v2788 = vadd.f32 0.0, %v2787
      %2789 = vmatprep.mubr.f32.mxu0 0.0
      %2790 = vmatmul.mubr.f32.gmra.mrb[0].mxu0 %v2552
      %v2791 = vpop.f32.mrb[0].mxu0
      %v2792 = vadd.f32 0.0, %v2791
      %v2793 = vpop.f32.mrb[0].mxu0
      %v2794 = vadd.f32 0.0, %v2793
      %2795 = vmatprep.mubr.f32.mxu0 0.0
      %2796 = vmatmul.mubr.f32.gmra.mrb[0].mxu0 %v2555
      %v2797 = vpop.f32.mrb[0].mxu0
      %v2798 = vadd.f32 0.0, %v2797
      %v2799 = vpop.f32.mrb[0].mxu0
      %v2800 = vadd.f32 0.0, %v2799
      %2801 = vmatprep.mubr.f32.mxu0 0.0
      %2802 = vmatmul.mubr.f32.gmra.mrb[0].mxu0 %v2558
      %v2803 = vpop.f32.mrb[0].mxu0
      %v2804 = vadd.f32 0.0, %v2803
      %v2805 = vpop.f32.mrb[0].mxu0
      %v2806 = vadd.f32 0.0, %v2805
      %2807 = vmatprep.mubr.f32.mxu0 0.0
      %2808 = vmatmul.mubr.f32.gmra.mrb[0].mxu0 %v2561
      %v2809 = vpop.f32.mrb[0].mxu0
      %v2810 = vadd.f32 0.0, %v2809
      %v2811 = vpop.f32.mrb[0].mxu0
      %v2812 = vadd.f32 0.0, %v2811
      %2813 = vmatprep.mubr.f32.mxu0 0.0
      %2814 = vmatmul.mubr.f32.gmra.mrb[0].mxu0 %v2564
      %v2815 = vpop.f32.mrb[0].mxu0
      %v2816 = vadd.f32 0.0, %v2815
      %v2817 = vpop.f32.mrb[0].mxu0
      %v2818 = vadd.f32 0.0, %v2817
      %2819 = vmatprep.mubr.f32.mxu0 0.0
      %2820 = vmatmul.mubr.f32.gmra.mrb[0].mxu0 %v2567
      %v2821 = vpop.f32.mrb[0].mxu0
      %v2822 = vadd.f32 0.0, %v2821
      %v2823 = vpop.f32.mrb[0].mxu0
      %v2824 = vadd.f32 0.0, %v2823
      %2825 = vmatprep.mubr.f32.mxu0 0.0
      %2826 = vmatmul.mubr.f32.gmra.mrb[0].mxu0 %v2570
      %v2827 = vpop.f32.mrb[0].mxu0
      %v2828 = vadd.f32 0.0, %v2827
      %v2829 = vpop.f32.mrb[0].mxu0
      %v2830 = vadd.f32 0.0, %v2829
      %2831 = vmatprep.mubr.f32.mxu0 0.0
      %2832 = vmatmul.mubr.f32.gmra.mrb[0].mxu0 %v2573
      %v2833 = vpop.f32.mrb[0].mxu0
      %v2834 = vadd.f32 0.0, %v2833
      %v2835 = vpop.f32.mrb[0].mxu0
      %v2836 = vadd.f32 0.0, %v2835
      %2837 = vdwg.mxu0
      %v2838 = vmax.f32 %v2648, %v2650
      %2839 = vmax.xlane.f32.xlu0 %v2838
      %v2840 = vpop.xlane.xlu0 %2839
      %v2841 = vmax.f32 %v2654, %v2656
      %2842 = vmax.xlane.f32.xlu0 %v2841
      %v2843 = vpop.xlane.xlu0 %2842
      %v2844 = vmax.f32 %v2660, %v2662
      %2845 = vmax.xlane.f32.xlu0 %v2844
      %v2846 = vpop.xlane.xlu0 %2845
      %v2847 = vmax.f32 %v2666, %v2668
      %2848 = vmax.xlane.f32.xlu0 %v2847
      %v2849 = vpop.xlane.xlu0 %2848
      %v2850 = vmax.f32 %v2672, %v2674
      %2851 = vmax.xlane.f32.xlu0 %v2850
      %v2852 = vpop.xlane.xlu0 %2851
      %v2853 = vmax.f32 %v2678, %v2680
      %2854 = vmax.xlane.f32.xlu0 %v2853
      %v2855 = vpop.xlane.xlu0 %2854
      %v2856 = vmax.f32 %v2684, %v2686
      %2857 = vmax.xlane.f32.xlu0 %v2856
      %v2858 = vpop.xlane.xlu0 %2857
      %v2859 = vmax.f32 %v2690, %v2692
      %2860 = vmax.xlane.f32.xlu0 %v2859
      %v2861 = vpop.xlane.xlu0 %2860
      %v2862 = vmax.f32 %v2696, %v2698
      %2863 = vmax.xlane.f32.xlu0 %v2862
      %v2864 = vpop.xlane.xlu0 %2863
      %v2865 = vmax.f32 %v2702, %v2704
      %2866 = vmax.xlane.f32.xlu0 %v2865
      %v2867 = vpop.xlane.xlu0 %2866
      %v2868 = vmax.f32 %v2708, %v2710
      %2869 = vmax.xlane.f32.xlu0 %v2868
      %v2870 = vpop.xlane.xlu0 %2869
      %v2871 = vmax.f32 %v2714, %v2716
      %2872 = vmax.xlane.f32.xlu0 %v2871
      %v2873 = vpop.xlane.xlu0 %2872
      %v2874 = vmax.f32 %v2720, %v2722
      %2875 = vmax.xlane.f32.xlu0 %v2874
      %v2876 = vpop.xlane.xlu0 %2875
      %v2877 = vmax.f32 %v2726, %v2728
      %2878 = vmax.xlane.f32.xlu0 %v2877
      %v2879 = vpop.xlane.xlu0 %2878
      %v2880 = vmax.f32 %v2732, %v2734
      %2881 = vmax.xlane.f32.xlu0 %v2880
      %v2882 = vpop.xlane.xlu0 %2881
      %v2883 = vmax.f32 %v2738, %v2740
      %2884 = vmax.xlane.f32.xlu0 %v2883
      %v2885 = vpop.xlane.xlu0 %2884
      %v2886 = vmax.f32 %v2744, %v2746
      %2887 = vmax.xlane.f32.xlu0 %v2886
      %v2888 = vpop.xlane.xlu0 %2887
      %v2889 = vmax.f32 %v2750, %v2752
      %2890 = vmax.xlane.f32.xlu0 %v2889
      %v2891 = vpop.xlane.xlu0 %2890
      %v2892 = vmax.f32 %v2756, %v2758
      %2893 = vmax.xlane.f32.xlu0 %v2892
      %v2894 = vpop.xlane.xlu0 %2893
      %v2895 = vmax.f32 %v2762, %v2764
      %2896 = vmax.xlane.f32.xlu0 %v2895
      %v2897 = vpop.xlane.xlu0 %2896
      %v2898 = vmax.f32 %v2768, %v2770
      %2899 = vmax.xlane.f32.xlu0 %v2898
      %v2900 = vpop.xlane.xlu0 %2899
      %v2901 = vmax.f32 %v2774, %v2776
      %2902 = vmax.xlane.f32.xlu0 %v2901
      %v2903 = vpop.xlane.xlu0 %2902
      %v2904 = vmax.f32 %v2780, %v2782
      %2905 = vmax.xlane.f32.xlu0 %v2904
      %v2906 = vpop.xlane.xlu0 %2905
      %v2907 = vmax.f32 %v2786, %v2788
      %2908 = vmax.xlane.f32.xlu0 %v2907
      %v2909 = vpop.xlane.xlu0 %2908
      %v2910 = vmax.f32 %v2792, %v2794
      %2911 = vmax.xlane.f32.xlu0 %v2910
      %v2912 = vpop.xlane.xlu0 %2911
      %v2913 = vmax.f32 %v2798, %v2800
      %2914 = vmax.xlane.f32.xlu0 %v2913
      %v2915 = vpop.xlane.xlu0 %2914
      %v2916 = vmax.f32 %v2804, %v2806
      %2917 = vmax.xlane.f32.xlu0 %v2916
      %v2918 = vpop.xlane.xlu0 %2917
      %v2919 = vmax.f32 %v2810, %v2812
      %2920 = vmax.xlane.f32.xlu0 %v2919
      %v2921 = vpop.xlane.xlu0 %2920
      %v2922 = vmax.f32 %v2816, %v2818
      %2923 = vmax.xlane.f32.xlu0 %v2922
      %v2924 = vpop.xlane.xlu0 %2923
      %v2925 = vmax.f32 %v2822, %v2824
      %2926 = vmax.xlane.f32.xlu0 %v2925
      %v2927 = vpop.xlane.xlu0 %2926
      %v2928 = vmax.f32 %v2828, %v2830
      %2929 = vmax.xlane.f32.xlu0 %v2928
      %v2930 = vpop.xlane.xlu0 %2929
      %v2931 = vmax.f32 %v2834, %v2836
      %2932 = vmax.xlane.f32.xlu0 %v2931
      %v2933 = vpop.xlane.xlu0 %2932
      %v2934 = vsub.f32 %v2648, %v2840
      %v2935 = vsub.f32 %v2650, %v2840
      %v2936 = vsub.f32 %v2654, %v2843
      %v2937 = vsub.f32 %v2656, %v2843
      %v2938 = vsub.f32 %v2660, %v2846
      %v2939 = vsub.f32 %v2662, %v2846
      %v2940 = vsub.f32 %v2666, %v2849
      %v2941 = vsub.f32 %v2668, %v2849
      %v2942 = vsub.f32 %v2672, %v2852
      %v2943 = vsub.f32 %v2674, %v2852
      %v2944 = vsub.f32 %v2678, %v2855
      %v2945 = vsub.f32 %v2680, %v2855
      %v2946 = vsub.f32 %v2684, %v2858
      %v2947 = vsub.f32 %v2686, %v2858
      %v2948 = vsub.f32 %v2690, %v2861
      %v2949 = vsub.f32 %v2692, %v2861
      %v2950 = vsub.f32 %v2696, %v2864
      %v2951 = vsub.f32 %v2698, %v2864
      %v2952 = vsub.f32 %v2702, %v2867
      %v2953 = vsub.f32 %v2704, %v2867
      %v2954 = vsub.f32 %v2708, %v2870
      %v2955 = vsub.f32 %v2710, %v2870
      %v2956 = vsub.f32 %v2714, %v2873
      %v2957 = vsub.f32 %v2716, %v2873
      %v2958 = vsub.f32 %v2720, %v2876
      %v2959 = vsub.f32 %v2722, %v2876
      %v2960 = vsub.f32 %v2726, %v2879
      %v2961 = vsub.f32 %v2728, %v2879
      %v2962 = vsub.f32 %v2732, %v2882
      %v2963 = vsub.f32 %v2734, %v2882
      %v2964 = vsub.f32 %v2738, %v2885
      %v2965 = vsub.f32 %v2740, %v2885
      %v2966 = vsub.f32 %v2744, %v2888
      %v2967 = vsub.f32 %v2746, %v2888
      %v2968 = vsub.f32 %v2750, %v2891
      %v2969 = vsub.f32 %v2752, %v2891
      %v2970 = vsub.f32 %v2756, %v2894
      %v2971 = vsub.f32 %v2758, %v2894
      %v2972 = vsub.f32 %v2762, %v2897
      %v2973 = vsub.f32 %v2764, %v2897
      %v2974 = vsub.f32 %v2768, %v2900
      %v2975 = vsub.f32 %v2770, %v2900
      %v2976 = vsub.f32 %v2774, %v2903
      %v2977 = vsub.f32 %v2776, %v2903
      %v2978 = vsub.f32 %v2780, %v2906
      %v2979 = vsub.f32 %v2782, %v2906
      %v2980 = vsub.f32 %v2786, %v2909
      %v2981 = vsub.f32 %v2788, %v2909
      %v2982 = vsub.f32 %v2792, %v2912
      %v2983 = vsub.f32 %v2794, %v2912
      %v2984 = vsub.f32 %v2798, %v2915
      %v2985 = vsub.f32 %v2800, %v2915
      %v2986 = vsub.f32 %v2804, %v2918
      %v2987 = vsub.f32 %v2806, %v2918
      %v2988 = vsub.f32 %v2810, %v2921
      %v2989 = vsub.f32 %v2812, %v2921
      %v2990 = vsub.f32 %v2816, %v2924
      %v2991 = vsub.f32 %v2818, %v2924
      %v2992 = vsub.f32 %v2822, %v2927
      %v2993 = vsub.f32 %v2824, %v2927
      %v2994 = vsub.f32 %v2828, %v2930
      %v2995 = vsub.f32 %v2830, %v2930
      %v2996 = vsub.f32 %v2834, %v2933
      %v2997 = vsub.f32 %v2836, %v2933
      %v2998 = vmul.f32 %v2934, 1.442695
      %v2999 = vpow.pop %v2998
      %v3000 = vmul.f32 %v2935, 1.442695
      %v3001 = vpow.pop %v3000
      %v3002 = vmul.f32 %v2936, 1.442695
      %v3003 = vpow.pop %v3002
      %v3004 = vmul.f32 %v2937, 1.442695
      %v3005 = vpow.pop %v3004
      %v3006 = vmul.f32 %v2938, 1.442695
      %v3007 = vpow.pop %v3006
      %v3008 = vmul.f32 %v2939, 1.442695
      %v3009 = vpow.pop %v3008
      %v3010 = vmul.f32 %v2940, 1.442695
      %v3011 = vpow.pop %v3010
      %v3012 = vmul.f32 %v2941, 1.442695
      %v3013 = vpow.pop %v3012
      %v3014 = vmul.f32 %v2942, 1.442695
      %v3015 = vpow.pop %v3014
      %v3016 = vmul.f32 %v2943, 1.442695
      %v3017 = vpow.pop %v3016
      %v3018 = vmul.f32 %v2944, 1.442695
      %v3019 = vpow.pop %v3018
      %v3020 = vmul.f32 %v2945, 1.442695
      %v3021 = vpow.pop %v3020
      %v3022 = vmul.f32 %v2946, 1.442695
      %v3023 = vpow.pop %v3022
      %v3024 = vmul.f32 %v2947, 1.442695
      %v3025 = vpow.pop %v3024
      %v3026 = vmul.f32 %v2948, 1.442695
      %v3027 = vpow.pop %v3026
      %v3028 = vmul.f32 %v2949, 1.442695
      %v3029 = vpow.pop %v3028
      %v3030 = vmul.f32 %v2950, 1.442695
      %v3031 = vpow.pop %v3030
      %v3032 = vmul.f32 %v2951, 1.442695
      %v3033 = vpow.pop %v3032
      %v3034 = vmul.f32 %v2952, 1.442695
      %v3035 = vpow.pop %v3034
      %v3036 = vmul.f32 %v2953, 1.442695
      %v3037 = vpow.pop %v3036
      %v3038 = vmul.f32 %v2954, 1.442695
      %v3039 = vpow.pop %v3038
      %v3040 = vmul.f32 %v2955, 1.442695
      %v3041 = vpow.pop %v3040
      %v3042 = vmul.f32 %v2956, 1.442695
      %v3043 = vpow.pop %v3042
      %v3044 = vmul.f32 %v2957, 1.442695
      %v3045 = vpow.pop %v3044
      %v3046 = vmul.f32 %v2958, 1.442695
      %v3047 = vpow.pop %v3046
      %v3048 = vmul.f32 %v2959, 1.442695
      %v3049 = vpow.pop %v3048
      %v3050 = vmul.f32 %v2960, 1.442695
      %v3051 = vpow.pop %v3050
      %v3052 = vmul.f32 %v2961, 1.442695
      %v3053 = vpow.pop %v3052
      %v3054 = vmul.f32 %v2962, 1.442695
      %v3055 = vpow.pop %v3054
      %v3056 = vmul.f32 %v2963, 1.442695
      %v3057 = vpow.pop %v3056
      %v3058 = vmul.f32 %v2964, 1.442695
      %v3059 = vpow.pop %v3058
      %v3060 = vmul.f32 %v2965, 1.442695
      %v3061 = vpow.pop %v3060
      %v3062 = vmul.f32 %v2966, 1.442695
      %v3063 = vpow.pop %v3062
      %v3064 = vmul.f32 %v2967, 1.442695
      %v3065 = vpow.pop %v3064
      %v3066 = vmul.f32 %v2968, 1.442695
      %v3067 = vpow.pop %v3066
      %v3068 = vmul.f32 %v2969, 1.442695
      %v3069 = vpow.pop %v3068
      %v3070 = vmul.f32 %v2970, 1.442695
      %v3071 = vpow.pop %v3070
      %v3072 = vmul.f32 %v2971, 1.442695
      %v3073 = vpow.pop %v3072
      %v3074 = vmul.f32 %v2972, 1.442695
      %v3075 = vpow.pop %v3074
      %v3076 = vmul.f32 %v2973, 1.442695
      %v3077 = vpow.pop %v3076
      %v3078 = vmul.f32 %v2974, 1.442695
      %v3079 = vpow.pop %v3078
      %v3080 = vmul.f32 %v2975, 1.442695
      %v3081 = vpow.pop %v3080
      %v3082 = vmul.f32 %v2976, 1.442695
      %v3083 = vpow.pop %v3082
      %v3084 = vmul.f32 %v2977, 1.442695
      %v3085 = vpow.pop %v3084
      %v3086 = vmul.f32 %v2978, 1.442695
      %v3087 = vpow.pop %v3086
      %v3088 = vmul.f32 %v2979, 1.442695
      %v3089 = vpow.pop %v3088
      %v3090 = vmul.f32 %v2980, 1.442695
      %v3091 = vpow.pop %v3090
      %v3092 = vmul.f32 %v2981, 1.442695
      %v3093 = vpow.pop %v3092
      %v3094 = vmul.f32 %v2982, 1.442695
      %v3095 = vpow.pop %v3094
      %v3096 = vmul.f32 %v2983, 1.442695
      %v3097 = vpow.pop %v3096
      %v3098 = vmul.f32 %v2984, 1.442695
      %v3099 = vpow.pop %v3098
      %v3100 = vmul.f32 %v2985, 1.442695
      %v3101 = vpow.pop %v3100
      %v3102 = vmul.f32 %v2986, 1.442695
      %v3103 = vpow.pop %v3102
      %v3104 = vmul.f32 %v2987, 1.442695
      %v3105 = vpow.pop %v3104
      %v3106 = vmul.f32 %v2988, 1.442695
      %v3107 = vpow.pop %v3106
      %v3108 = vmul.f32 %v2989, 1.442695
      %v3109 = vpow.pop %v3108
      %v3110 = vmul.f32 %v2990, 1.442695
      %v3111 = vpow.pop %v3110
      %v3112 = vmul.f32 %v2991, 1.442695
      %v3113 = vpow.pop %v3112
      %v3114 = vmul.f32 %v2992, 1.442695
      %v3115 = vpow.pop %v3114
      %v3116 = vmul.f32 %v2993, 1.442695
      %v3117 = vpow.pop %v3116
      %v3118 = vmul.f32 %v2994, 1.442695
      %v3119 = vpow.pop %v3118
      %v3120 = vmul.f32 %v2995, 1.442695
      %v3121 = vpow.pop %v3120
      %v3122 = vmul.f32 %v2996, 1.442695
      %v3123 = vpow.pop %v3122
      %v3124 = vmul.f32 %v2997, 1.442695
      %v3125 = vpow.pop %v3124
      %v3126 = vadd.f32 %v2999, %v3001
      %3127 = vadd.xlane.f32.xlu0 %v3126
      %v3128 = vpop.xlane.xlu0 %3127
      %v3129 = vadd.f32 %v3003, %v3005
      %3130 = vadd.xlane.f32.xlu0 %v3129
      %v3131 = vpop.xlane.xlu0 %3130
      %v3132 = vadd.f32 %v3007, %v3009
      %3133 = vadd.xlane.f32.xlu0 %v3132
      %v3134 = vpop.xlane.xlu0 %3133
      %v3135 = vadd.f32 %v3011, %v3013
      %3136 = vadd.xlane.f32.xlu0 %v3135
      %v3137 = vpop.xlane.xlu0 %3136
      %v3138 = vadd.f32 %v3015, %v3017
      %3139 = vadd.xlane.f32.xlu0 %v3138
      %v3140 = vpop.xlane.xlu0 %3139
      %v3141 = vadd.f32 %v3019, %v3021
      %3142 = vadd.xlane.f32.xlu0 %v3141
      %v3143 = vpop.xlane.xlu0 %3142
      %v3144 = vadd.f32 %v3023, %v3025
      %3145 = vadd.xlane.f32.xlu0 %v3144
      %v3146 = vpop.xlane.xlu0 %3145
      %v3147 = vadd.f32 %v3027, %v3029
      %3148 = vadd.xlane.f32.xlu0 %v3147
      %v3149 = vpop.xlane.xlu0 %3148
      %v3150 = vadd.f32 %v3031, %v3033
      %3151 = vadd.xlane.f32.xlu0 %v3150
      %v3152 = vpop.xlane.xlu0 %3151
      %v3153 = vadd.f32 %v3035, %v3037
      %3154 = vadd.xlane.f32.xlu0 %v3153
      %v3155 = vpop.xlane.xlu0 %3154
      %v3156 = vadd.f32 %v3039, %v3041
      %3157 = vadd.xlane.f32.xlu0 %v3156
      %v3158 = vpop.xlane.xlu0 %3157
      %v3159 = vadd.f32 %v3043, %v3045
      %3160 = vadd.xlane.f32.xlu0 %v3159
      %v3161 = vpop.xlane.xlu0 %3160
      %v3162 = vadd.f32 %v3047, %v3049
      %3163 = vadd.xlane.f32.xlu0 %v3162
      %v3164 = vpop.xlane.xlu0 %3163
      %v3165 = vadd.f32 %v3051, %v3053
      %3166 = vadd.xlane.f32.xlu0 %v3165
      %v3167 = vpop.xlane.xlu0 %3166
      %v3168 = vadd.f32 %v3055, %v3057
      %3169 = vadd.xlane.f32.xlu0 %v3168
      %v3170 = vpop.xlane.xlu0 %3169
      %v3171 = vadd.f32 %v3059, %v3061
      %3172 = vadd.xlane.f32.xlu0 %v3171
      %v3173 = vpop.xlane.xlu0 %3172
      %v3174 = vadd.f32 %v3063, %v3065
      %3175 = vadd.xlane.f32.xlu0 %v3174
      %v3176 = vpop.xlane.xlu0 %3175
      %v3177 = vadd.f32 %v3067, %v3069
      %3178 = vadd.xlane.f32.xlu0 %v3177
      %v3179 = vpop.xlane.xlu0 %3178
      %v3180 = vadd.f32 %v3071, %v3073
      %3181 = vadd.xlane.f32.xlu0 %v3180
      %v3182 = vpop.xlane.xlu0 %3181
      %v3183 = vadd.f32 %v3075, %v3077
      %3184 = vadd.xlane.f32.xlu0 %v3183
      %v3185 = vpop.xlane.xlu0 %3184
      %v3186 = vadd.f32 %v3079, %v3081
      %3187 = vadd.xlane.f32.xlu0 %v3186
      %v3188 = vpop.xlane.xlu0 %3187
      %v3189 = vadd.f32 %v3083, %v3085
      %3190 = vadd.xlane.f32.xlu0 %v3189
      %v3191 = vpop.xlane.xlu0 %3190
      %v3192 = vadd.f32 %v3087, %v3089
      %3193 = vadd.xlane.f32.xlu0 %v3192
      %v3194 = vpop.xlane.xlu0 %3193
      %v3195 = vadd.f32 %v3091, %v3093
      %3196 = vadd.xlane.f32.xlu0 %v3195
      %v3197 = vpop.xlane.xlu0 %3196
      %v3198 = vadd.f32 %v3095, %v3097
      %3199 = vadd.xlane.f32.xlu0 %v3198
      %v3200 = vpop.xlane.xlu0 %3199
      %v3201 = vadd.f32 %v3099, %v3101
      %3202 = vadd.xlane.f32.xlu0 %v3201
      %v3203 = vpop.xlane.xlu0 %3202
      %v3204 = vadd.f32 %v3103, %v3105
      %3205 = vadd.xlane.f32.xlu0 %v3204
      %v3206 = vpop.xlane.xlu0 %3205
      %v3207 = vadd.f32 %v3107, %v3109
      %3208 = vadd.xlane.f32.xlu0 %v3207
      %v3209 = vpop.xlane.xlu0 %3208
      %v3210 = vadd.f32 %v3111, %v3113
      %3211 = vadd.xlane.f32.xlu0 %v3210
      %v3212 = vpop.xlane.xlu0 %3211
      %v3213 = vadd.f32 %v3115, %v3117
      %3214 = vadd.xlane.f32.xlu0 %v3213
      %v3215 = vpop.xlane.xlu0 %3214
      %v3216 = vadd.f32 %v3119, %v3121
      %3217 = vadd.xlane.f32.xlu0 %v3216
      %v3218 = vpop.xlane.xlu0 %3217
      %v3219 = vadd.f32 %v3123, %v3125
      %3220 = vadd.xlane.f32.xlu0 %v3219
      %v3221 = vpop.xlane.xlu0 %3220
      %v3222 = vrcp.pop %v3128
      %v3223 = vrcp.pop %v3131
      %v3224 = vrcp.pop %v3134
      %v3225 = vrcp.pop %v3137
      %v3226 = vrcp.pop %v3140
      %v3227 = vrcp.pop %v3143
      %v3228 = vrcp.pop %v3146
      %v3229 = vrcp.pop %v3149
      %v3230 = vrcp.pop %v3152
      %v3231 = vrcp.pop %v3155
      %v3232 = vrcp.pop %v3158
      %v3233 = vrcp.pop %v3161
      %v3234 = vrcp.pop %v3164
      %v3235 = vrcp.pop %v3167
      %v3236 = vrcp.pop %v3170
      %v3237 = vrcp.pop %v3173
      %v3238 = vrcp.pop %v3176
      %v3239 = vrcp.pop %v3179
      %v3240 = vrcp.pop %v3182
      %v3241 = vrcp.pop %v3185
      %v3242 = vrcp.pop %v3188
      %v3243 = vrcp.pop %v3191
      %v3244 = vrcp.pop %v3194
      %v3245 = vrcp.pop %v3197
      %v3246 = vrcp.pop %v3200
      %v3247 = vrcp.pop %v3203
      %v3248 = vrcp.pop %v3206
      %v3249 = vrcp.pop %v3209
      %v3250 = vrcp.pop %v3212
      %v3251 = vrcp.pop %v3215
      %v3252 = vrcp.pop %v3218
      %v3253 = vrcp.pop %v3221
      %v3254 = vmul.f32 %v2999, %v3222
      %v3255 = vmul.f32 %v3001, %v3222
      %v3256 = vmul.f32 %v3003, %v3223
      %v3257 = vmul.f32 %v3005, %v3223
      %v3258 = vmul.f32 %v3007, %v3224
      %v3259 = vmul.f32 %v3009, %v3224
      %v3260 = vmul.f32 %v3011, %v3225
      %v3261 = vmul.f32 %v3013, %v3225
      %v3262 = vmul.f32 %v3015, %v3226
      %v3263 = vmul.f32 %v3017, %v3226
      %v3264 = vmul.f32 %v3019, %v3227
      %v3265 = vmul.f32 %v3021, %v3227
      %v3266 = vmul.f32 %v3023, %v3228
      %v3267 = vmul.f32 %v3025, %v3228
      %v3268 = vmul.f32 %v3027, %v3229
      %v3269 = vmul.f32 %v3029, %v3229
      %v3270 = vmul.f32 %v3031, %v3230
      %v3271 = vmul.f32 %v3033, %v3230
      %v3272 = vmul.f32 %v3035, %v3231
      %v3273 = vmul.f32 %v3037, %v3231
      %v3274 = vmul.f32 %v3039, %v3232
      %v3275 = vmul.f32 %v3041, %v3232
      %v3276 = vmul.f32 %v3043, %v3233
      %v3277 = vmul.f32 %v3045, %v3233
      %v3278 = vmul.f32 %v3047, %v3234
      %v3279 = vmul.f32 %v3049, %v3234
      %v3280 = vmul.f32 %v3051, %v3235
      %v3281 = vmul.f32 %v3053, %v3235
      %v3282 = vmul.f32 %v3055, %v3236
      %v3283 = vmul.f32 %v3057, %v3236
      %v3284 = vmul.f32 %v3059, %v3237
      %v3285 = vmul.f32 %v3061, %v3237
      %v3286 = vmul.f32 %v3063, %v3238
      %v3287 = vmul.f32 %v3065, %v3238
      %v3288 = vmul.f32 %v3067, %v3239
      %v3289 = vmul.f32 %v3069, %v3239
      %v3290 = vmul.f32 %v3071, %v3240
      %v3291 = vmul.f32 %v3073, %v3240
      %v3292 = vmul.f32 %v3075, %v3241
      %v3293 = vmul.f32 %v3077, %v3241
      %v3294 = vmul.f32 %v3079, %v3242
      %v3295 = vmul.f32 %v3081, %v3242
      %v3296 = vmul.f32 %v3083, %v3243
      %v3297 = vmul.f32 %v3085, %v3243
      %v3298 = vmul.f32 %v3087, %v3244
      %v3299 = vmul.f32 %v3089, %v3244
      %v3300 = vmul.f32 %v3091, %v3245
      %v3301 = vmul.f32 %v3093, %v3245
      %v3302 = vmul.f32 %v3095, %v3246
      %v3303 = vmul.f32 %v3097, %v3246
      %v3304 = vmul.f32 %v3099, %v3247
      %v3305 = vmul.f32 %v3101, %v3247
      %v3306 = vmul.f32 %v3103, %v3248
      %v3307 = vmul.f32 %v3105, %v3248
      %v3308 = vmul.f32 %v3107, %v3249
      %v3309 = vmul.f32 %v3109, %v3249
      %v3310 = vmul.f32 %v3111, %v3250
      %v3311 = vmul.f32 %v3113, %v3250
      %v3312 = vmul.f32 %v3115, %v3251
      %v3313 = vmul.f32 %v3117, %v3251
      %v3314 = vmul.f32 %v3119, %v3252
      %v3315 = vmul.f32 %v3121, %v3252
      %v3316 = vmul.f32 %v3123, %v3253
      %v3317 = vmul.f32 %v3125, %v3253
      %v3318 = vrot.slane %v408, 4
      %v3319 = vrot.slane %v410, 4
      %3322 = vmatprep.subr.mxu0 %v3255
      %3323 = vmatpush1.xpose.msra.mxu0 %v3254
      %3324 = vmatprep.subr.mxu0 %v3257
      %3325 = vmatpush1.xpose.msra.mxu0 %v3256
      %3326 = vmatprep.subr.mxu0 %v3259
      %3327 = vmatpush1.xpose.msra.mxu0 %v3258
      %3328 = vmatprep.subr.mxu0 %v3261
      %3329 = vmatpush1.xpose.msra.mxu0 %v3260
      %3330 = vmatprep.subr.mxu0 %v3263
      %3331 = vmatpush1.xpose.msra.mxu0 %v3262
      %3332 = vmatprep.subr.mxu0 %v3265
      %3333 = vmatpush1.xpose.msra.mxu0 %v3264
      %3334 = vmatprep.subr.mxu0 %v3267
      %3335 = vmatpush1.xpose.msra.mxu0 %v3266
      %3336 = vmatprep.subr.mxu0 %v3269
      %3337 = vmatpush1.xpose.msra.mxu0 %v3268
      %3338 = vmatprep.subr.mxu0 %v3271
      %3339 = vmatpush1.xpose.msra.mxu0 %v3270
      %3340 = vmatprep.subr.mxu0 %v3273
      %3341 = vmatpush1.xpose.msra.mxu0 %v3272
      %3342 = vmatprep.subr.mxu0 %v3275
      %3343 = vmatpush1.xpose.msra.mxu0 %v3274
      %3344 = vmatprep.subr.mxu0 %v3277
      %3345 = vmatpush1.xpose.msra.mxu0 %v3276
      %3346 = vmatprep.subr.mxu0 %v3279
      %3347 = vmatpush1.xpose.msra.mxu0 %v3278
      %3348 = vmatprep.subr.mxu0 %v3281
      %3349 = vmatpush1.xpose.msra.mxu0 %v3280
      %3350 = vmatprep.subr.mxu0 %v3283
      %3351 = vmatpush1.xpose.msra.mxu0 %v3282
      %3352 = vmatprep.subr.mxu0 %v3285
      %3353 = vmatpush1.xpose.msra.mxu0 %v3284
      %3354 = vmatprep.subr.mxu0 %v3287
      %3355 = vmatpush1.xpose.msra.mxu0 %v3286
      %3356 = vmatprep.subr.mxu0 %v3289
      %3357 = vmatpush1.xpose.msra.mxu0 %v3288
      %3358 = vmatprep.subr.mxu0 %v3291
      %3359 = vmatpush1.xpose.msra.mxu0 %v3290
      %3360 = vmatprep.subr.mxu0 %v3293
      %3361 = vmatpush1.xpose.msra.mxu0 %v3292
      %3362 = vmatprep.subr.mxu0 %v3295
      %3363 = vmatpush1.xpose.msra.mxu0 %v3294
      %3364 = vmatprep.subr.mxu0 %v3297
      %3365 = vmatpush1.xpose.msra.mxu0 %v3296
      %3366 = vmatprep.subr.mxu0 %v3299
      %3367 = vmatpush1.xpose.msra.mxu0 %v3298
      %3368 = vmatprep.subr.mxu0 %v3301
      %3369 = vmatpush1.xpose.msra.mxu0 %v3300
      %3370 = vmatprep.subr.mxu0 %v3303
      %3371 = vmatpush1.xpose.msra.mxu0 %v3302
      %3372 = vmatprep.subr.mxu0 %v3305
      %3373 = vmatpush1.xpose.msra.mxu0 %v3304
      %3374 = vmatprep.subr.mxu0 %v3307
      %3375 = vmatpush1.xpose.msra.mxu0 %v3306
      %3376 = vmatprep.subr.mxu0 %v3309
      %3377 = vmatpush1.xpose.msra.mxu0 %v3308
      %3378 = vmatprep.subr.mxu0 %v3311
      %3379 = vmatpush1.xpose.msra.mxu0 %v3310
      %3380 = vmatprep.subr.mxu0 %v3313
      %3381 = vmatpush1.xpose.msra.mxu0 %v3312
      %3382 = vmatprep.subr.mxu0 %v3315
      %3383 = vmatpush1.xpose.msra.mxu0 %v3314
      %3384 = vmatprep.subr.mxu0 %v3317
      %3385 = vmatpush1.xpose.msra.mxu0 %v3316
      %3386 = vmatprep.mubr.f32.mxu0 %v3319
      %3387 = vmatmul.mubr.f32.gmra.mrb[0].mxu0 %v3318
      %v3388 = vpop.f32.mrb[0].mxu0
      %v3389 = vadd.f32 0.0, %v3388
      %v3390 = vpop.f32.mrb[0].mxu0
      %v3391 = vadd.f32 0.0, %v3390
      %3392 = vdwg.mxu0
      %v3393 = vrot.slane %v302, 4
      %v3394 = vrot.slane %v303, 4
      %v3397 = vsel %vm418, %v423, %v3393
      %v3398 = vsel %vm418, %v424, %v3394
      %v3399 = vrot.slane %v402, 6
      %v3400 = vrot.slane %v404, 6
      %v3403 = vsel %vm418, %v3399, %v2399
      %v3404 = vsel %vm418, %v3400, %v2400
      %3405 = vxpose.xlu0.b32.start [1/16] %v3397, 128
      %3406 = vxpose.xlu0.b32.cont [2/16] 0.0, 128
      %3407 = vxpose.xlu0.b32.cont [3/16] 0.0, 128
      %3408 = vxpose.xlu0.b32.cont [4/16] 0.0, 128
      %3409 = vxpose.xlu0.b32.cont [5/16] 0.0, 128
      %3410 = vxpose.xlu0.b32.cont [6/16] 0.0, 128
      %3411 = vxpose.xlu0.b32.cont [7/16] 0.0, 128
      %3412 = vxpose.xlu0.b32.cont [8/16] 0.0, 128
      %3413 = vxpose.xlu0.b32.cont [9/16] 0.0, 128
      %3414 = vxpose.xlu0.b32.cont [10/16] 0.0, 128
      %3415 = vxpose.xlu0.b32.cont [11/16] 0.0, 128
      %3416 = vxpose.xlu0.b32.cont [12/16] 0.0, 128
      %3417 = vxpose.xlu0.b32.cont [13/16] 0.0, 128
      %3418 = vxpose.xlu0.b32.cont [14/16] 0.0, 128
      %3419 = vxpose.xlu0.b32.cont [15/16] 0.0, 128
      %3420 = vxpose.xlu0.b32.end [16/16] 0.0, 128
      %v3421 = vpop.trf.xlu0
      %v3422 = vpop.trf.xlu0
      %v3423 = vpop.trf.xlu0
      %v3424 = vpop.trf.xlu0
      %v3425 = vpop.trf.xlu0
      %v3426 = vpop.trf.xlu0
      %v3427 = vpop.trf.xlu0
      %v3428 = vpop.trf.xlu0
      %v3429 = vpop.trf.xlu0
      %v3430 = vpop.trf.xlu0
      %v3431 = vpop.trf.xlu0
      %v3432 = vpop.trf.xlu0
      %v3433 = vpop.trf.xlu0
      %v3434 = vpop.trf.xlu0
      %v3435 = vpop.trf.xlu0
      %v3436 = vpop.trf.xlu0
      %3437 = vxpose.xlu0.b32.start [1/16] %v3398, 128
      %3438 = vxpose.xlu0.b32.cont [2/16] 0.0, 128
      %3439 = vxpose.xlu0.b32.cont [3/16] 0.0, 128
      %3440 = vxpose.xlu0.b32.cont [4/16] 0.0, 128
      %3441 = vxpose.xlu0.b32.cont [5/16] 0.0, 128
      %3442 = vxpose.xlu0.b32.cont [6/16] 0.0, 128
      %3443 = vxpose.xlu0.b32.cont [7/16] 0.0, 128
      %3444 = vxpose.xlu0.b32.cont [8/16] 0.0, 128
      %3445 = vxpose.xlu0.b32.cont [9/16] 0.0, 128
      %3446 = vxpose.xlu0.b32.cont [10/16] 0.0, 128
      %3447 = vxpose.xlu0.b32.cont [11/16] 0.0, 128
      %3448 = vxpose.xlu0.b32.cont [12/16] 0.0, 128
      %3449 = vxpose.xlu0.b32.cont [13/16] 0.0, 128
      %3450 = vxpose.xlu0.b32.cont [14/16] 0.0, 128
      %3451 = vxpose.xlu0.b32.cont [15/16] 0.0, 128
      %3452 = vxpose.xlu0.b32.end [16/16] 0.0, 128
      %v3453 = vpop.trf.xlu0
      %v3454 = vpop.trf.xlu0
      %v3455 = vpop.trf.xlu0
      %v3456 = vpop.trf.xlu0
      %v3457 = vpop.trf.xlu0
      %v3458 = vpop.trf.xlu0
      %v3459 = vpop.trf.xlu0
      %v3460 = vpop.trf.xlu0
      %v3461 = vpop.trf.xlu0
      %v3462 = vpop.trf.xlu0
      %v3463 = vpop.trf.xlu0
      %v3464 = vpop.trf.xlu0
      %v3465 = vpop.trf.xlu0
      %v3466 = vpop.trf.xlu0
      %v3467 = vpop.trf.xlu0
      %v3468 = vpop.trf.xlu0
      %v3470 = vsel %vm493, %v3421, 0
      %v3473 = vsel %vm493, %v3422, 0
      %v3476 = vsel %vm493, %v3423, 0
      %v3479 = vsel %vm493, %v3424, 0
      %v3482 = vsel %vm493, %v3425, 0
      %v3485 = vsel %vm493, %v3426, 0
      %v3488 = vsel %vm493, %v3427, 0
      %v3491 = vsel %vm493, %v3428, 0
      %v3494 = vsel %vm493, %v3429, 0
      %v3497 = vsel %vm493, %v3430, 0
      %v3500 = vsel %vm493, %v3431, 0
      %v3503 = vsel %vm493, %v3432, 0
      %v3506 = vsel %vm493, %v3433, 0
      %v3509 = vsel %vm493, %v3434, 0
      %v3512 = vsel %vm493, %v3435, 0
      %v3515 = vsel %vm493, %v3436, 0
      %v3518 = vsel %vm493, %v3453, 0
      %v3521 = vsel %vm493, %v3454, 0
      %v3524 = vsel %vm493, %v3455, 0
      %v3527 = vsel %vm493, %v3456, 0
      %v3530 = vsel %vm493, %v3457, 0
      %v3533 = vsel %vm493, %v3458, 0
      %v3536 = vsel %vm493, %v3459, 0
      %v3539 = vsel %vm493, %v3460, 0
      %v3542 = vsel %vm493, %v3461, 0
      %v3545 = vsel %vm493, %v3462, 0
      %v3548 = vsel %vm493, %v3463, 0
      %v3551 = vsel %vm493, %v3464, 0
      %v3554 = vsel %vm493, %v3465, 0
      %v3557 = vsel %vm493, %v3466, 0
      %v3560 = vsel %vm493, %v3467, 0
      %v3563 = vsel %vm493, %v3468, 0
      %v3566 = vsel %vm590, %v3403, 0
      %v3569 = vsel %vm590, %v3404, 0
      %3571 = vmatprep.subr.mxu0 %v3569
      %3572 = vmatpush1.msra.mxu0 %v3566
      %3573 = vmatprep.subr.mxu0 0.0
      %3574 = vmatpush1.msra.mxu0 0.0
      %3575 = vmatprep.subr.mxu0 0.0
      %3576 = vmatpush1.msra.mxu0 0.0
      %3577 = vmatprep.subr.mxu0 0.0
      %3578 = vmatpush1.msra.mxu0 0.0
      %3579 = vmatprep.subr.mxu0 0.0
      %3580 = vmatpush1.msra.mxu0 0.0
      %3581 = vmatprep.subr.mxu0 0.0
      %3582 = vmatpush1.msra.mxu0 0.0
      %3583 = vmatprep.subr.mxu0 0.0
      %3584 = vmatpush1.msra.mxu0 0.0
      %3585 = vmatprep.subr.mxu0 0.0
      %3586 = vmatpush1.msra.mxu0 0.0
      %3587 = vmatprep.subr.mxu0 0.0
      %3588 = vmatpush1.msra.mxu0 0.0
      %3589 = vmatprep.subr.mxu0 0.0
      %3590 = vmatpush1.msra.mxu0 0.0
      %3591 = vmatprep.subr.mxu0 0.0
      %3592 = vmatpush1.msra.mxu0 0.0
      %3593 = vmatprep.subr.mxu0 0.0
      %3594 = vmatpush1.msra.mxu0 0.0
      %3595 = vmatprep.subr.mxu0 0.0
      %3596 = vmatpush1.msra.mxu0 0.0
      %3597 = vmatprep.subr.mxu0 0.0
      %3598 = vmatpush1.msra.mxu0 0.0
      %3599 = vmatprep.subr.mxu0 0.0
      %3600 = vmatpush1.msra.mxu0 0.0
      %3601 = vmatprep.subr.mxu0 0.0
      %3602 = vmatpush1.msra.mxu0 0.0
      %3603 = vmatprep.subr.mxu0 0.0
      %3604 = vmatpush1.msra.mxu0 0.0
      %3605 = vmatprep.subr.mxu0 0.0
      %3606 = vmatpush1.msra.mxu0 0.0
      %3607 = vmatprep.subr.mxu0 0.0
      %3608 = vmatpush1.msra.mxu0 0.0
      %3609 = vmatprep.subr.mxu0 0.0
      %3610 = vmatpush1.msra.mxu0 0.0
      %3611 = vmatprep.subr.mxu0 0.0
      %3612 = vmatpush1.msra.mxu0 0.0
      %3613 = vmatprep.subr.mxu0 0.0
      %3614 = vmatpush1.msra.mxu0 0.0
      %3615 = vmatprep.subr.mxu0 0.0
      %3616 = vmatpush1.msra.mxu0 0.0
      %3617 = vmatprep.subr.mxu0 0.0
      %3618 = vmatpush1.msra.mxu0 0.0
      %3619 = vmatprep.subr.mxu0 0.0
      %3620 = vmatpush1.msra.mxu0 0.0
      %3621 = vmatprep.subr.mxu0 0.0
      %3622 = vmatpush1.msra.mxu0 0.0
      %3623 = vmatprep.subr.mxu0 0.0
      %3624 = vmatpush1.msra.mxu0 0.0
      %3625 = vmatprep.subr.mxu0 0.0
      %3626 = vmatpush1.msra.mxu0 0.0
      %3627 = vmatprep.subr.mxu0 0.0
      %3628 = vmatpush1.msra.mxu0 0.0
      %3629 = vmatprep.subr.mxu0 0.0
      %3630 = vmatpush1.msra.mxu0 0.0
      %3631 = vmatprep.subr.mxu0 0.0
      %3632 = vmatpush1.msra.mxu0 0.0
      %3633 = vmatprep.subr.mxu0 0.0
      %3634 = vmatpush1.msra.mxu0 0.0
      %3635 = vmatprep.mubr.f32.mxu0 0.0
      %3636 = vmatmul.mubr.f32.gmra.mrb[0].mxu0 %v3470
      %v3637 = vpop.f32.mrb[0].mxu0
      %v3638 = vadd.f32 0.0, %v3637
      %v3639 = vpop.f32.mrb[0].mxu0
      %v3640 = vadd.f32 0.0, %v3639
      %3641 = vmatprep.mubr.f32.mxu0 0.0
      %3642 = vmatmul.mubr.f32.gmra.mrb[0].mxu0 %v3473
      %v3643 = vpop.f32.mrb[0].mxu0
      %v3644 = vadd.f32 0.0, %v3643
      %v3645 = vpop.f32.mrb[0].mxu0
      %v3646 = vadd.f32 0.0, %v3645
      %3647 = vmatprep.mubr.f32.mxu0 0.0
      %3648 = vmatmul.mubr.f32.gmra.mrb[0].mxu0 %v3476
      %v3649 = vpop.f32.mrb[0].mxu0
      %v3650 = vadd.f32 0.0, %v3649
      %v3651 = vpop.f32.mrb[0].mxu0
      %v3652 = vadd.f32 0.0, %v3651
      %3653 = vmatprep.mubr.f32.mxu0 0.0
      %3654 = vmatmul.mubr.f32.gmra.mrb[0].mxu0 %v3479
      %v3655 = vpop.f32.mrb[0].mxu0
      %v3656 = vadd.f32 0.0, %v3655
      %v3657 = vpop.f32.mrb[0].mxu0
      %v3658 = vadd.f32 0.0, %v3657
      %3659 = vmatprep.mubr.f32.mxu0 0.0
      %3660 = vmatmul.mubr.f32.gmra.mrb[0].mxu0 %v3482
      %v3661 = vpop.f32.mrb[0].mxu0
      %v3662 = vadd.f32 0.0, %v3661
      %v3663 = vpop.f32.mrb[0].mxu0
      %v3664 = vadd.f32 0.0, %v3663
      %3665 = vmatprep.mubr.f32.mxu0 0.0
      %3666 = vmatmul.mubr.f32.gmra.mrb[0].mxu0 %v3485
      %v3667 = vpop.f32.mrb[0].mxu0
      %v3668 = vadd.f32 0.0, %v3667
      %v3669 = vpop.f32.mrb[0].mxu0
      %v3670 = vadd.f32 0.0, %v3669
      %3671 = vmatprep.mubr.f32.mxu0 0.0
      %3672 = vmatmul.mubr.f32.gmra.mrb[0].mxu0 %v3488
      %v3673 = vpop.f32.mrb[0].mxu0
      %v3674 = vadd.f32 0.0, %v3673
      %v3675 = vpop.f32.mrb[0].mxu0
      %v3676 = vadd.f32 0.0, %v3675
      %3677 = vmatprep.mubr.f32.mxu0 0.0
      %3678 = vmatmul.mubr.f32.gmra.mrb[0].mxu0 %v3491
      %v3679 = vpop.f32.mrb[0].mxu0
      %v3680 = vadd.f32 0.0, %v3679
      %v3681 = vpop.f32.mrb[0].mxu0
      %v3682 = vadd.f32 0.0, %v3681
      %3683 = vmatprep.mubr.f32.mxu0 0.0
      %3684 = vmatmul.mubr.f32.gmra.mrb[0].mxu0 %v3494
      %v3685 = vpop.f32.mrb[0].mxu0
      %v3686 = vadd.f32 0.0, %v3685
      %v3687 = vpop.f32.mrb[0].mxu0
      %v3688 = vadd.f32 0.0, %v3687
      %3689 = vmatprep.mubr.f32.mxu0 0.0
      %3690 = vmatmul.mubr.f32.gmra.mrb[0].mxu0 %v3497
      %v3691 = vpop.f32.mrb[0].mxu0
      %v3692 = vadd.f32 0.0, %v3691
      %v3693 = vpop.f32.mrb[0].mxu0
      %v3694 = vadd.f32 0.0, %v3693
      %3695 = vmatprep.mubr.f32.mxu0 0.0
      %3696 = vmatmul.mubr.f32.gmra.mrb[0].mxu0 %v3500
      %v3697 = vpop.f32.mrb[0].mxu0
      %v3698 = vadd.f32 0.0, %v3697
      %v3699 = vpop.f32.mrb[0].mxu0
      %v3700 = vadd.f32 0.0, %v3699
      %3701 = vmatprep.mubr.f32.mxu0 0.0
      %3702 = vmatmul.mubr.f32.gmra.mrb[0].mxu0 %v3503
      %v3703 = vpop.f32.mrb[0].mxu0
      %v3704 = vadd.f32 0.0, %v3703
      %v3705 = vpop.f32.mrb[0].mxu0
      %v3706 = vadd.f32 0.0, %v3705
      %3707 = vmatprep.mubr.f32.mxu0 0.0
      %3708 = vmatmul.mubr.f32.gmra.mrb[0].mxu0 %v3506
      %v3709 = vpop.f32.mrb[0].mxu0
      %v3710 = vadd.f32 0.0, %v3709
      %v3711 = vpop.f32.mrb[0].mxu0
      %v3712 = vadd.f32 0.0, %v3711
      %3713 = vmatprep.mubr.f32.mxu0 0.0
      %3714 = vmatmul.mubr.f32.gmra.mrb[0].mxu0 %v3509
      %v3715 = vpop.f32.mrb[0].mxu0
      %v3716 = vadd.f32 0.0, %v3715
      %v3717 = vpop.f32.mrb[0].mxu0
      %v3718 = vadd.f32 0.0, %v3717
      %3719 = vmatprep.mubr.f32.mxu0 0.0
      %3720 = vmatmul.mubr.f32.gmra.mrb[0].mxu0 %v3512
      %v3721 = vpop.f32.mrb[0].mxu0
      %v3722 = vadd.f32 0.0, %v3721
      %v3723 = vpop.f32.mrb[0].mxu0
      %v3724 = vadd.f32 0.0, %v3723
      %3725 = vmatprep.mubr.f32.mxu0 0.0
      %3726 = vmatmul.mubr.f32.gmra.mrb[0].mxu0 %v3515
      %v3727 = vpop.f32.mrb[0].mxu0
      %v3728 = vadd.f32 0.0, %v3727
      %v3729 = vpop.f32.mrb[0].mxu0
      %v3730 = vadd.f32 0.0, %v3729
      %3731 = vmatprep.mubr.f32.mxu0 0.0
      %3732 = vmatmul.mubr.f32.gmra.mrb[0].mxu0 %v3518
      %v3733 = vpop.f32.mrb[0].mxu0
      %v3734 = vadd.f32 0.0, %v3733
      %v3735 = vpop.f32.mrb[0].mxu0
      %v3736 = vadd.f32 0.0, %v3735
      %3737 = vmatprep.mubr.f32.mxu0 0.0
      %3738 = vmatmul.mubr.f32.gmra.mrb[0].mxu0 %v3521
      %v3739 = vpop.f32.mrb[0].mxu0
      %v3740 = vadd.f32 0.0, %v3739
      %v3741 = vpop.f32.mrb[0].mxu0
      %v3742 = vadd.f32 0.0, %v3741
      %3743 = vmatprep.mubr.f32.mxu0 0.0
      %3744 = vmatmul.mubr.f32.gmra.mrb[0].mxu0 %v3524
      %v3745 = vpop.f32.mrb[0].mxu0
      %v3746 = vadd.f32 0.0, %v3745
      %v3747 = vpop.f32.mrb[0].mxu0
      %v3748 = vadd.f32 0.0, %v3747
      %3749 = vmatprep.mubr.f32.mxu0 0.0
      %3750 = vmatmul.mubr.f32.gmra.mrb[0].mxu0 %v3527
      %v3751 = vpop.f32.mrb[0].mxu0
      %v3752 = vadd.f32 0.0, %v3751
      %v3753 = vpop.f32.mrb[0].mxu0
      %v3754 = vadd.f32 0.0, %v3753
      %3755 = vmatprep.mubr.f32.mxu0 0.0
      %3756 = vmatmul.mubr.f32.gmra.mrb[0].mxu0 %v3530
      %v3757 = vpop.f32.mrb[0].mxu0
      %v3758 = vadd.f32 0.0, %v3757
      %v3759 = vpop.f32.mrb[0].mxu0
      %v3760 = vadd.f32 0.0, %v3759
      %3761 = vmatprep.mubr.f32.mxu0 0.0
      %3762 = vmatmul.mubr.f32.gmra.mrb[0].mxu0 %v3533
      %v3763 = vpop.f32.mrb[0].mxu0
      %v3764 = vadd.f32 0.0, %v3763
      %v3765 = vpop.f32.mrb[0].mxu0
      %v3766 = vadd.f32 0.0, %v3765
      %3767 = vmatprep.mubr.f32.mxu0 0.0
      %3768 = vmatmul.mubr.f32.gmra.mrb[0].mxu0 %v3536
      %v3769 = vpop.f32.mrb[0].mxu0
      %v3770 = vadd.f32 0.0, %v3769
      %v3771 = vpop.f32.mrb[0].mxu0
      %v3772 = vadd.f32 0.0, %v3771
      %3773 = vmatprep.mubr.f32.mxu0 0.0
      %3774 = vmatmul.mubr.f32.gmra.mrb[0].mxu0 %v3539
      %v3775 = vpop.f32.mrb[0].mxu0
      %v3776 = vadd.f32 0.0, %v3775
      %v3777 = vpop.f32.mrb[0].mxu0
      %v3778 = vadd.f32 0.0, %v3777
      %3779 = vmatprep.mubr.f32.mxu0 0.0
      %3780 = vmatmul.mubr.f32.gmra.mrb[0].mxu0 %v3542
      %v3781 = vpop.f32.mrb[0].mxu0
      %v3782 = vadd.f32 0.0, %v3781
      %v3783 = vpop.f32.mrb[0].mxu0
      %v3784 = vadd.f32 0.0, %v3783
      %3785 = vmatprep.mubr.f32.mxu0 0.0
      %3786 = vmatmul.mubr.f32.gmra.mrb[0].mxu0 %v3545
      %v3787 = vpop.f32.mrb[0].mxu0
      %v3788 = vadd.f32 0.0, %v3787
      %v3789 = vpop.f32.mrb[0].mxu0
      %v3790 = vadd.f32 0.0, %v3789
      %3791 = vmatprep.mubr.f32.mxu0 0.0
      %3792 = vmatmul.mubr.f32.gmra.mrb[0].mxu0 %v3548
      %v3793 = vpop.f32.mrb[0].mxu0
      %v3794 = vadd.f32 0.0, %v3793
      %v3795 = vpop.f32.mrb[0].mxu0
      %v3796 = vadd.f32 0.0, %v3795
      %3797 = vmatprep.mubr.f32.mxu0 0.0
      %3798 = vmatmul.mubr.f32.gmra.mrb[0].mxu0 %v3551
      %v3799 = vpop.f32.mrb[0].mxu0
      %v3800 = vadd.f32 0.0, %v3799
      %v3801 = vpop.f32.mrb[0].mxu0
      %v3802 = vadd.f32 0.0, %v3801
      %3803 = vmatprep.mubr.f32.mxu0 0.0
      %3804 = vmatmul.mubr.f32.gmra.mrb[0].mxu0 %v3554
      %v3805 = vpop.f32.mrb[0].mxu0
      %v3806 = vadd.f32 0.0, %v3805
      %v3807 = vpop.f32.mrb[0].mxu0
      %v3808 = vadd.f32 0.0, %v3807
      %3809 = vmatprep.mubr.f32.mxu0 0.0
      %3810 = vmatmul.mubr.f32.gmra.mrb[0].mxu0 %v3557
      %v3811 = vpop.f32.mrb[0].mxu0
      %v3812 = vadd.f32 0.0, %v3811
      %v3813 = vpop.f32.mrb[0].mxu0
      %v3814 = vadd.f32 0.0, %v3813
      %3815 = vmatprep.mubr.f32.mxu0 0.0
      %3816 = vmatmul.mubr.f32.gmra.mrb[0].mxu0 %v3560
      %v3817 = vpop.f32.mrb[0].mxu0
      %v3818 = vadd.f32 0.0, %v3817
      %v3819 = vpop.f32.mrb[0].mxu0
      %v3820 = vadd.f32 0.0, %v3819
      %3821 = vmatprep.mubr.f32.mxu0 0.0
      %3822 = vmatmul.mubr.f32.gmra.mrb[0].mxu0 %v3563
      %v3823 = vpop.f32.mrb[0].mxu0
      %v3824 = vadd.f32 0.0, %v3823
      %v3825 = vpop.f32.mrb[0].mxu0
      %v3826 = vadd.f32 0.0, %v3825
      %3827 = vdwg.mxu0
      %v3828 = vmax.f32 %v3638, %v3640
      %3829 = vmax.xlane.f32.xlu0 %v3828
      %v3830 = vpop.xlane.xlu0 %3829
      %v3831 = vmax.f32 %v3644, %v3646
      %3832 = vmax.xlane.f32.xlu0 %v3831
      %v3833 = vpop.xlane.xlu0 %3832
      %v3834 = vmax.f32 %v3650, %v3652
      %3835 = vmax.xlane.f32.xlu0 %v3834
      %v3836 = vpop.xlane.xlu0 %3835
      %v3837 = vmax.f32 %v3656, %v3658
      %3838 = vmax.xlane.f32.xlu0 %v3837
      %v3839 = vpop.xlane.xlu0 %3838
      %v3840 = vmax.f32 %v3662, %v3664
      %3841 = vmax.xlane.f32.xlu0 %v3840
      %v3842 = vpop.xlane.xlu0 %3841
      %v3843 = vmax.f32 %v3668, %v3670
      %3844 = vmax.xlane.f32.xlu0 %v3843
      %v3845 = vpop.xlane.xlu0 %3844
      %v3846 = vmax.f32 %v3674, %v3676
      %3847 = vmax.xlane.f32.xlu0 %v3846
      %v3848 = vpop.xlane.xlu0 %3847
      %v3849 = vmax.f32 %v3680, %v3682
      %3850 = vmax.xlane.f32.xlu0 %v3849
      %v3851 = vpop.xlane.xlu0 %3850
      %v3852 = vmax.f32 %v3686, %v3688
      %3853 = vmax.xlane.f32.xlu0 %v3852
      %v3854 = vpop.xlane.xlu0 %3853
      %v3855 = vmax.f32 %v3692, %v3694
      %3856 = vmax.xlane.f32.xlu0 %v3855
      %v3857 = vpop.xlane.xlu0 %3856
      %v3858 = vmax.f32 %v3698, %v3700
      %3859 = vmax.xlane.f32.xlu0 %v3858
      %v3860 = vpop.xlane.xlu0 %3859
      %v3861 = vmax.f32 %v3704, %v3706
      %3862 = vmax.xlane.f32.xlu0 %v3861
      %v3863 = vpop.xlane.xlu0 %3862
      %v3864 = vmax.f32 %v3710, %v3712
      %3865 = vmax.xlane.f32.xlu0 %v3864
      %v3866 = vpop.xlane.xlu0 %3865
      %v3867 = vmax.f32 %v3716, %v3718
      %3868 = vmax.xlane.f32.xlu0 %v3867
      %v3869 = vpop.xlane.xlu0 %3868
      %v3870 = vmax.f32 %v3722, %v3724
      %3871 = vmax.xlane.f32.xlu0 %v3870
      %v3872 = vpop.xlane.xlu0 %3871
      %v3873 = vmax.f32 %v3728, %v3730
      %3874 = vmax.xlane.f32.xlu0 %v3873
      %v3875 = vpop.xlane.xlu0 %3874
      %v3876 = vmax.f32 %v3734, %v3736
      %3877 = vmax.xlane.f32.xlu0 %v3876
      %v3878 = vpop.xlane.xlu0 %3877
      %v3879 = vmax.f32 %v3740, %v3742
      %3880 = vmax.xlane.f32.xlu0 %v3879
      %v3881 = vpop.xlane.xlu0 %3880
      %v3882 = vmax.f32 %v3746, %v3748
      %3883 = vmax.xlane.f32.xlu0 %v3882
      %v3884 = vpop.xlane.xlu0 %3883
      %v3885 = vmax.f32 %v3752, %v3754
      %3886 = vmax.xlane.f32.xlu0 %v3885
      %v3887 = vpop.xlane.xlu0 %3886
      %v3888 = vmax.f32 %v3758, %v3760
      %3889 = vmax.xlane.f32.xlu0 %v3888
      %v3890 = vpop.xlane.xlu0 %3889
      %v3891 = vmax.f32 %v3764, %v3766
      %3892 = vmax.xlane.f32.xlu0 %v3891
      %v3893 = vpop.xlane.xlu0 %3892
      %v3894 = vmax.f32 %v3770, %v3772
      %3895 = vmax.xlane.f32.xlu0 %v3894
      %v3896 = vpop.xlane.xlu0 %3895
      %v3897 = vmax.f32 %v3776, %v3778
      %3898 = vmax.xlane.f32.xlu0 %v3897
      %v3899 = vpop.xlane.xlu0 %3898
      %v3900 = vmax.f32 %v3782, %v3784
      %3901 = vmax.xlane.f32.xlu0 %v3900
      %v3902 = vpop.xlane.xlu0 %3901
      %v3903 = vmax.f32 %v3788, %v3790
      %3904 = vmax.xlane.f32.xlu0 %v3903
      %v3905 = vpop.xlane.xlu0 %3904
      %v3906 = vmax.f32 %v3794, %v3796
      %3907 = vmax.xlane.f32.xlu0 %v3906
      %v3908 = vpop.xlane.xlu0 %3907
      %v3909 = vmax.f32 %v3800, %v3802
      %3910 = vmax.xlane.f32.xlu0 %v3909
      %v3911 = vpop.xlane.xlu0 %3910
      %v3912 = vmax.f32 %v3806, %v3808
      %3913 = vmax.xlane.f32.xlu0 %v3912
      %v3914 = vpop.xlane.xlu0 %3913
      %v3915 = vmax.f32 %v3812, %v3814
      %3916 = vmax.xlane.f32.xlu0 %v3915
      %v3917 = vpop.xlane.xlu0 %3916
      %v3918 = vmax.f32 %v3818, %v3820
      %3919 = vmax.xlane.f32.xlu0 %v3918
      %v3920 = vpop.xlane.xlu0 %3919
      %v3921 = vmax.f32 %v3824, %v3826
      %3922 = vmax.xlane.f32.xlu0 %v3921
      %v3923 = vpop.xlane.xlu0 %3922
      %v3924 = vsub.f32 %v3638, %v3830
      %v3925 = vsub.f32 %v3640, %v3830
      %v3926 = vsub.f32 %v3644, %v3833
      %v3927 = vsub.f32 %v3646, %v3833
      %v3928 = vsub.f32 %v3650, %v3836
      %v3929 = vsub.f32 %v3652, %v3836
      %v3930 = vsub.f32 %v3656, %v3839
      %v3931 = vsub.f32 %v3658, %v3839
      %v3932 = vsub.f32 %v3662, %v3842
      %v3933 = vsub.f32 %v3664, %v3842
      %v3934 = vsub.f32 %v3668, %v3845
      %v3935 = vsub.f32 %v3670, %v3845
      %v3936 = vsub.f32 %v3674, %v3848
      %v3937 = vsub.f32 %v3676, %v3848
      %v3938 = vsub.f32 %v3680, %v3851
      %v3939 = vsub.f32 %v3682, %v3851
      %v3940 = vsub.f32 %v3686, %v3854
      %v3941 = vsub.f32 %v3688, %v3854
      %v3942 = vsub.f32 %v3692, %v3857
      %v3943 = vsub.f32 %v3694, %v3857
      %v3944 = vsub.f32 %v3698, %v3860
      %v3945 = vsub.f32 %v3700, %v3860
      %v3946 = vsub.f32 %v3704, %v3863
      %v3947 = vsub.f32 %v3706, %v3863
      %v3948 = vsub.f32 %v3710, %v3866
      %v3949 = vsub.f32 %v3712, %v3866
      %v3950 = vsub.f32 %v3716, %v3869
      %v3951 = vsub.f32 %v3718, %v3869
      %v3952 = vsub.f32 %v3722, %v3872
      %v3953 = vsub.f32 %v3724, %v3872
      %v3954 = vsub.f32 %v3728, %v3875
      %v3955 = vsub.f32 %v3730, %v3875
      %v3956 = vsub.f32 %v3734, %v3878
      %v3957 = vsub.f32 %v3736, %v3878
      %v3958 = vsub.f32 %v3740, %v3881
      %v3959 = vsub.f32 %v3742, %v3881
      %v3960 = vsub.f32 %v3746, %v3884
      %v3961 = vsub.f32 %v3748, %v3884
      %v3962 = vsub.f32 %v3752, %v3887
      %v3963 = vsub.f32 %v3754, %v3887
      %v3964 = vsub.f32 %v3758, %v3890
      %v3965 = vsub.f32 %v3760, %v3890
      %v3966 = vsub.f32 %v3764, %v3893
      %v3967 = vsub.f32 %v3766, %v3893
      %v3968 = vsub.f32 %v3770, %v3896
      %v3969 = vsub.f32 %v3772, %v3896
      %v3970 = vsub.f32 %v3776, %v3899
      %v3971 = vsub.f32 %v3778, %v3899
      %v3972 = vsub.f32 %v3782, %v3902
      %v3973 = vsub.f32 %v3784, %v3902
      %v3974 = vsub.f32 %v3788, %v3905
      %v3975 = vsub.f32 %v3790, %v3905
      %v3976 = vsub.f32 %v3794, %v3908
      %v3977 = vsub.f32 %v3796, %v3908
      %v3978 = vsub.f32 %v3800, %v3911
      %v3979 = vsub.f32 %v3802, %v3911
      %v3980 = vsub.f32 %v3806, %v3914
      %v3981 = vsub.f32 %v3808, %v3914
      %v3982 = vsub.f32 %v3812, %v3917
      %v3983 = vsub.f32 %v3814, %v3917
      %v3984 = vsub.f32 %v3818, %v3920
      %v3985 = vsub.f32 %v3820, %v3920
      %v3986 = vsub.f32 %v3824, %v3923
      %v3987 = vsub.f32 %v3826, %v3923
      %v3988 = vmul.f32 %v3924, 1.442695
      %v3989 = vpow.pop %v3988
      %v3990 = vmul.f32 %v3925, 1.442695
      %v3991 = vpow.pop %v3990
      %v3992 = vmul.f32 %v3926, 1.442695
      %v3993 = vpow.pop %v3992
      %v3994 = vmul.f32 %v3927, 1.442695
      %v3995 = vpow.pop %v3994
      %v3996 = vmul.f32 %v3928, 1.442695
      %v3997 = vpow.pop %v3996
      %v3998 = vmul.f32 %v3929, 1.442695
      %v3999 = vpow.pop %v3998
      %v4000 = vmul.f32 %v3930, 1.442695
      %v4001 = vpow.pop %v4000
      %v4002 = vmul.f32 %v3931, 1.442695
      %v4003 = vpow.pop %v4002
      %v4004 = vmul.f32 %v3932, 1.442695
      %v4005 = vpow.pop %v4004
      %v4006 = vmul.f32 %v3933, 1.442695
      %v4007 = vpow.pop %v4006
      %v4008 = vmul.f32 %v3934, 1.442695
      %v4009 = vpow.pop %v4008
      %v4010 = vmul.f32 %v3935, 1.442695
      %v4011 = vpow.pop %v4010
      %v4012 = vmul.f32 %v3936, 1.442695
      %v4013 = vpow.pop %v4012
      %v4014 = vmul.f32 %v3937, 1.442695
      %v4015 = vpow.pop %v4014
      %v4016 = vmul.f32 %v3938, 1.442695
      %v4017 = vpow.pop %v4016
      %v4018 = vmul.f32 %v3939, 1.442695
      %v4019 = vpow.pop %v4018
      %v4020 = vmul.f32 %v3940, 1.442695
      %v4021 = vpow.pop %v4020
      %v4022 = vmul.f32 %v3941, 1.442695
      %v4023 = vpow.pop %v4022
      %v4024 = vmul.f32 %v3942, 1.442695
      %v4025 = vpow.pop %v4024
      %v4026 = vmul.f32 %v3943, 1.442695
      %v4027 = vpow.pop %v4026
      %v4028 = vmul.f32 %v3944, 1.442695
      %v4029 = vpow.pop %v4028
      %v4030 = vmul.f32 %v3945, 1.442695
      %v4031 = vpow.pop %v4030
      %v4032 = vmul.f32 %v3946, 1.442695
      %v4033 = vpow.pop %v4032
      %v4034 = vmul.f32 %v3947, 1.442695
      %v4035 = vpow.pop %v4034
      %v4036 = vmul.f32 %v3948, 1.442695
      %v4037 = vpow.pop %v4036
      %v4038 = vmul.f32 %v3949, 1.442695
      %v4039 = vpow.pop %v4038
      %v4040 = vmul.f32 %v3950, 1.442695
      %v4041 = vpow.pop %v4040
      %v4042 = vmul.f32 %v3951, 1.442695
      %v4043 = vpow.pop %v4042
      %v4044 = vmul.f32 %v3952, 1.442695
      %v4045 = vpow.pop %v4044
      %v4046 = vmul.f32 %v3953, 1.442695
      %v4047 = vpow.pop %v4046
      %v4048 = vmul.f32 %v3954, 1.442695
      %v4049 = vpow.pop %v4048
      %v4050 = vmul.f32 %v3955, 1.442695
      %v4051 = vpow.pop %v4050
      %v4052 = vmul.f32 %v3956, 1.442695
      %v4053 = vpow.pop %v4052
      %v4054 = vmul.f32 %v3957, 1.442695
      %v4055 = vpow.pop %v4054
      %v4056 = vmul.f32 %v3958, 1.442695
      %v4057 = vpow.pop %v4056
      %v4058 = vmul.f32 %v3959, 1.442695
      %v4059 = vpow.pop %v4058
      %v4060 = vmul.f32 %v3960, 1.442695
      %v4061 = vpow.pop %v4060
      %v4062 = vmul.f32 %v3961, 1.442695
      %v4063 = vpow.pop %v4062
      %v4064 = vmul.f32 %v3962, 1.442695
      %v4065 = vpow.pop %v4064
      %v4066 = vmul.f32 %v3963, 1.442695
      %v4067 = vpow.pop %v4066
      %v4068 = vmul.f32 %v3964, 1.442695
      %v4069 = vpow.pop %v4068
      %v4070 = vmul.f32 %v3965, 1.442695
      %v4071 = vpow.pop %v4070
      %v4072 = vmul.f32 %v3966, 1.442695
      %v4073 = vpow.pop %v4072
      %v4074 = vmul.f32 %v3967, 1.442695
      %v4075 = vpow.pop %v4074
      %v4076 = vmul.f32 %v3968, 1.442695
      %v4077 = vpow.pop %v4076
      %v4078 = vmul.f32 %v3969, 1.442695
      %v4079 = vpow.pop %v4078
      %v4080 = vmul.f32 %v3970, 1.442695
      %v4081 = vpow.pop %v4080
      %v4082 = vmul.f32 %v3971, 1.442695
      %v4083 = vpow.pop %v4082
      %v4084 = vmul.f32 %v3972, 1.442695
      %v4085 = vpow.pop %v4084
      %v4086 = vmul.f32 %v3973, 1.442695
      %v4087 = vpow.pop %v4086
      %v4088 = vmul.f32 %v3974, 1.442695
      %v4089 = vpow.pop %v4088
      %v4090 = vmul.f32 %v3975, 1.442695
      %v4091 = vpow.pop %v4090
      %v4092 = vmul.f32 %v3976, 1.442695
      %v4093 = vpow.pop %v4092
      %v4094 = vmul.f32 %v3977, 1.442695
      %v4095 = vpow.pop %v4094
      %v4096 = vmul.f32 %v3978, 1.442695
      %v4097 = vpow.pop %v4096
      %v4098 = vmul.f32 %v3979, 1.442695
      %v4099 = vpow.pop %v4098
      %v4100 = vmul.f32 %v3980, 1.442695
      %v4101 = vpow.pop %v4100
      %v4102 = vmul.f32 %v3981, 1.442695
      %v4103 = vpow.pop %v4102
      %v4104 = vmul.f32 %v3982, 1.442695
      %v4105 = vpow.pop %v4104
      %v4106 = vmul.f32 %v3983, 1.442695
      %v4107 = vpow.pop %v4106
      %v4108 = vmul.f32 %v3984, 1.442695
      %v4109 = vpow.pop %v4108
      %v4110 = vmul.f32 %v3985, 1.442695
      %v4111 = vpow.pop %v4110
      %v4112 = vmul.f32 %v3986, 1.442695
      %v4113 = vpow.pop %v4112
      %v4114 = vmul.f32 %v3987, 1.442695
      %v4115 = vpow.pop %v4114
      %v4116 = vadd.f32 %v3989, %v3991
      %4117 = vadd.xlane.f32.xlu0 %v4116
      %v4118 = vpop.xlane.xlu0 %4117
      %v4119 = vadd.f32 %v3993, %v3995
      %4120 = vadd.xlane.f32.xlu0 %v4119
      %v4121 = vpop.xlane.xlu0 %4120
      %v4122 = vadd.f32 %v3997, %v3999
      %4123 = vadd.xlane.f32.xlu0 %v4122
      %v4124 = vpop.xlane.xlu0 %4123
      %v4125 = vadd.f32 %v4001, %v4003
      %4126 = vadd.xlane.f32.xlu0 %v4125
      %v4127 = vpop.xlane.xlu0 %4126
      %v4128 = vadd.f32 %v4005, %v4007
      %4129 = vadd.xlane.f32.xlu0 %v4128
      %v4130 = vpop.xlane.xlu0 %4129
      %v4131 = vadd.f32 %v4009, %v4011
      %4132 = vadd.xlane.f32.xlu0 %v4131
      %v4133 = vpop.xlane.xlu0 %4132
      %v4134 = vadd.f32 %v4013, %v4015
      %4135 = vadd.xlane.f32.xlu0 %v4134
      %v4136 = vpop.xlane.xlu0 %4135
      %v4137 = vadd.f32 %v4017, %v4019
      %4138 = vadd.xlane.f32.xlu0 %v4137
      %v4139 = vpop.xlane.xlu0 %4138
      %v4140 = vadd.f32 %v4021, %v4023
      %4141 = vadd.xlane.f32.xlu0 %v4140
      %v4142 = vpop.xlane.xlu0 %4141
      %v4143 = vadd.f32 %v4025, %v4027
      %4144 = vadd.xlane.f32.xlu0 %v4143
      %v4145 = vpop.xlane.xlu0 %4144
      %v4146 = vadd.f32 %v4029, %v4031
      %4147 = vadd.xlane.f32.xlu0 %v4146
      %v4148 = vpop.xlane.xlu0 %4147
      %v4149 = vadd.f32 %v4033, %v4035
      %4150 = vadd.xlane.f32.xlu0 %v4149
      %v4151 = vpop.xlane.xlu0 %4150
      %v4152 = vadd.f32 %v4037, %v4039
      %4153 = vadd.xlane.f32.xlu0 %v4152
      %v4154 = vpop.xlane.xlu0 %4153
      %v4155 = vadd.f32 %v4041, %v4043
      %4156 = vadd.xlane.f32.xlu0 %v4155
      %v4157 = vpop.xlane.xlu0 %4156
      %v4158 = vadd.f32 %v4045, %v4047
      %4159 = vadd.xlane.f32.xlu0 %v4158
      %v4160 = vpop.xlane.xlu0 %4159
      %v4161 = vadd.f32 %v4049, %v4051
      %4162 = vadd.xlane.f32.xlu0 %v4161
      %v4163 = vpop.xlane.xlu0 %4162
      %v4164 = vadd.f32 %v4053, %v4055
      %4165 = vadd.xlane.f32.xlu0 %v4164
      %v4166 = vpop.xlane.xlu0 %4165
      %v4167 = vadd.f32 %v4057, %v4059
      %4168 = vadd.xlane.f32.xlu0 %v4167
      %v4169 = vpop.xlane.xlu0 %4168
      %v4170 = vadd.f32 %v4061, %v4063
      %4171 = vadd.xlane.f32.xlu0 %v4170
      %v4172 = vpop.xlane.xlu0 %4171
      %v4173 = vadd.f32 %v4065, %v4067
      %4174 = vadd.xlane.f32.xlu0 %v4173
      %v4175 = vpop.xlane.xlu0 %4174
      %v4176 = vadd.f32 %v4069, %v4071
      %4177 = vadd.xlane.f32.xlu0 %v4176
      %v4178 = vpop.xlane.xlu0 %4177
      %v4179 = vadd.f32 %v4073, %v4075
      %4180 = vadd.xlane.f32.xlu0 %v4179
      %v4181 = vpop.xlane.xlu0 %4180
      %v4182 = vadd.f32 %v4077, %v4079
      %4183 = vadd.xlane.f32.xlu0 %v4182
      %v4184 = vpop.xlane.xlu0 %4183
      %v4185 = vadd.f32 %v4081, %v4083
      %4186 = vadd.xlane.f32.xlu0 %v4185
      %v4187 = vpop.xlane.xlu0 %4186
      %v4188 = vadd.f32 %v4085, %v4087
      %4189 = vadd.xlane.f32.xlu0 %v4188
      %v4190 = vpop.xlane.xlu0 %4189
      %v4191 = vadd.f32 %v4089, %v4091
      %4192 = vadd.xlane.f32.xlu0 %v4191
      %v4193 = vpop.xlane.xlu0 %4192
      %v4194 = vadd.f32 %v4093, %v4095
      %4195 = vadd.xlane.f32.xlu0 %v4194
      %v4196 = vpop.xlane.xlu0 %4195
      %v4197 = vadd.f32 %v4097, %v4099
      %4198 = vadd.xlane.f32.xlu0 %v4197
      %v4199 = vpop.xlane.xlu0 %4198
      %v4200 = vadd.f32 %v4101, %v4103
      %4201 = vadd.xlane.f32.xlu0 %v4200
      %v4202 = vpop.xlane.xlu0 %4201
      %v4203 = vadd.f32 %v4105, %v4107
      %4204 = vadd.xlane.f32.xlu0 %v4203
      %v4205 = vpop.xlane.xlu0 %4204
      %v4206 = vadd.f32 %v4109, %v4111
      %4207 = vadd.xlane.f32.xlu0 %v4206
      %v4208 = vpop.xlane.xlu0 %4207
      %v4209 = vadd.f32 %v4113, %v4115
      %4210 = vadd.xlane.f32.xlu0 %v4209
      %v4211 = vpop.xlane.xlu0 %4210
      %v4212 = vrcp.pop %v4118
      %v4213 = vrcp.pop %v4121
      %v4214 = vrcp.pop %v4124
      %v4215 = vrcp.pop %v4127
      %v4216 = vrcp.pop %v4130
      %v4217 = vrcp.pop %v4133
      %v4218 = vrcp.pop %v4136
      %v4219 = vrcp.pop %v4139
      %v4220 = vrcp.pop %v4142
      %v4221 = vrcp.pop %v4145
      %v4222 = vrcp.pop %v4148
      %v4223 = vrcp.pop %v4151
      %v4224 = vrcp.pop %v4154
      %v4225 = vrcp.pop %v4157
      %v4226 = vrcp.pop %v4160
      %v4227 = vrcp.pop %v4163
      %v4228 = vrcp.pop %v4166
      %v4229 = vrcp.pop %v4169
      %v4230 = vrcp.pop %v4172
      %v4231 = vrcp.pop %v4175
      %v4232 = vrcp.pop %v4178
      %v4233 = vrcp.pop %v4181
      %v4234 = vrcp.pop %v4184
      %v4235 = vrcp.pop %v4187
      %v4236 = vrcp.pop %v4190
      %v4237 = vrcp.pop %v4193
      %v4238 = vrcp.pop %v4196
      %v4239 = vrcp.pop %v4199
      %v4240 = vrcp.pop %v4202
      %v4241 = vrcp.pop %v4205
      %v4242 = vrcp.pop %v4208
      %v4243 = vrcp.pop %v4211
      %v4244 = vmul.f32 %v3989, %v4212
      %v4245 = vmul.f32 %v3991, %v4212
      %v4246 = vmul.f32 %v3993, %v4213
      %v4247 = vmul.f32 %v3995, %v4213
      %v4248 = vmul.f32 %v3997, %v4214
      %v4249 = vmul.f32 %v3999, %v4214
      %v4250 = vmul.f32 %v4001, %v4215
      %v4251 = vmul.f32 %v4003, %v4215
      %v4252 = vmul.f32 %v4005, %v4216
      %v4253 = vmul.f32 %v4007, %v4216
      %v4254 = vmul.f32 %v4009, %v4217
      %v4255 = vmul.f32 %v4011, %v4217
      %v4256 = vmul.f32 %v4013, %v4218
      %v4257 = vmul.f32 %v4015, %v4218
      %v4258 = vmul.f32 %v4017, %v4219
      %v4259 = vmul.f32 %v4019, %v4219
      %v4260 = vmul.f32 %v4021, %v4220
      %v4261 = vmul.f32 %v4023, %v4220
      %v4262 = vmul.f32 %v4025, %v4221
      %v4263 = vmul.f32 %v4027, %v4221
      %v4264 = vmul.f32 %v4029, %v4222
      %v4265 = vmul.f32 %v4031, %v4222
      %v4266 = vmul.f32 %v4033, %v4223
      %v4267 = vmul.f32 %v4035, %v4223
      %v4268 = vmul.f32 %v4037, %v4224
      %v4269 = vmul.f32 %v4039, %v4224
      %v4270 = vmul.f32 %v4041, %v4225
      %v4271 = vmul.f32 %v4043, %v4225
      %v4272 = vmul.f32 %v4045, %v4226
      %v4273 = vmul.f32 %v4047, %v4226
      %v4274 = vmul.f32 %v4049, %v4227
      %v4275 = vmul.f32 %v4051, %v4227
      %v4276 = vmul.f32 %v4053, %v4228
      %v4277 = vmul.f32 %v4055, %v4228
      %v4278 = vmul.f32 %v4057, %v4229
      %v4279 = vmul.f32 %v4059, %v4229
      %v4280 = vmul.f32 %v4061, %v4230
      %v4281 = vmul.f32 %v4063, %v4230
      %v4282 = vmul.f32 %v4065, %v4231
      %v4283 = vmul.f32 %v4067, %v4231
      %v4284 = vmul.f32 %v4069, %v4232
      %v4285 = vmul.f32 %v4071, %v4232
      %v4286 = vmul.f32 %v4073, %v4233
      %v4287 = vmul.f32 %v4075, %v4233
      %v4288 = vmul.f32 %v4077, %v4234
      %v4289 = vmul.f32 %v4079, %v4234
      %v4290 = vmul.f32 %v4081, %v4235
      %v4291 = vmul.f32 %v4083, %v4235
      %v4292 = vmul.f32 %v4085, %v4236
      %v4293 = vmul.f32 %v4087, %v4236
      %v4294 = vmul.f32 %v4089, %v4237
      %v4295 = vmul.f32 %v4091, %v4237
      %v4296 = vmul.f32 %v4093, %v4238
      %v4297 = vmul.f32 %v4095, %v4238
      %v4298 = vmul.f32 %v4097, %v4239
      %v4299 = vmul.f32 %v4099, %v4239
      %v4300 = vmul.f32 %v4101, %v4240
      %v4301 = vmul.f32 %v4103, %v4240
      %v4302 = vmul.f32 %v4105, %v4241
      %v4303 = vmul.f32 %v4107, %v4241
      %v4304 = vmul.f32 %v4109, %v4242
      %v4305 = vmul.f32 %v4111, %v4242
      %v4306 = vmul.f32 %v4113, %v4243
      %v4307 = vmul.f32 %v4115, %v4243
      %v4308 = vrot.slane %v408, 6
      %v4309 = vrot.slane %v410, 6
      %4312 = vmatprep.subr.mxu0 %v4245
      %4313 = vmatpush1.xpose.msra.mxu0 %v4244
      %4314 = vmatprep.subr.mxu0 %v4247
      %4315 = vmatpush1.xpose.msra.mxu0 %v4246
      %4316 = vmatprep.subr.mxu0 %v4249
      %4317 = vmatpush1.xpose.msra.mxu0 %v4248
      %4318 = vmatprep.subr.mxu0 %v4251
      %4319 = vmatpush1.xpose.msra.mxu0 %v4250
      %4320 = vmatprep.subr.mxu0 %v4253
      %4321 = vmatpush1.xpose.msra.mxu0 %v4252
      %4322 = vmatprep.subr.mxu0 %v4255
      %4323 = vmatpush1.xpose.msra.mxu0 %v4254
      %4324 = vmatprep.subr.mxu0 %v4257
      %4325 = vmatpush1.xpose.msra.mxu0 %v4256
      %4326 = vmatprep.subr.mxu0 %v4259
      %4327 = vmatpush1.xpose.msra.mxu0 %v4258
      %4328 = vmatprep.subr.mxu0 %v4261
      %4329 = vmatpush1.xpose.msra.mxu0 %v4260
      %4330 = vmatprep.subr.mxu0 %v4263
      %4331 = vmatpush1.xpose.msra.mxu0 %v4262
      %4332 = vmatprep.subr.mxu0 %v4265
      %4333 = vmatpush1.xpose.msra.mxu0 %v4264
      %4334 = vmatprep.subr.mxu0 %v4267
      %4335 = vmatpush1.xpose.msra.mxu0 %v4266
      %4336 = vmatprep.subr.mxu0 %v4269
      %4337 = vmatpush1.xpose.msra.mxu0 %v4268
      %4338 = vmatprep.subr.mxu0 %v4271
      %4339 = vmatpush1.xpose.msra.mxu0 %v4270
      %4340 = vmatprep.subr.mxu0 %v4273
      %4341 = vmatpush1.xpose.msra.mxu0 %v4272
      %4342 = vmatprep.subr.mxu0 %v4275
      %4343 = vmatpush1.xpose.msra.mxu0 %v4274
      %4344 = vmatprep.subr.mxu0 %v4277
      %4345 = vmatpush1.xpose.msra.mxu0 %v4276
      %4346 = vmatprep.subr.mxu0 %v4279
      %4347 = vmatpush1.xpose.msra.mxu0 %v4278
      %4348 = vmatprep.subr.mxu0 %v4281
      %4349 = vmatpush1.xpose.msra.mxu0 %v4280
      %4350 = vmatprep.subr.mxu0 %v4283
      %4351 = vmatpush1.xpose.msra.mxu0 %v4282
      %4352 = vmatprep.subr.mxu0 %v4285
      %4353 = vmatpush1.xpose.msra.mxu0 %v4284
      %4354 = vmatprep.subr.mxu0 %v4287
      %4355 = vmatpush1.xpose.msra.mxu0 %v4286
      %4356 = vmatprep.subr.mxu0 %v4289
      %4357 = vmatpush1.xpose.msra.mxu0 %v4288
      %4358 = vmatprep.subr.mxu0 %v4291
      %4359 = vmatpush1.xpose.msra.mxu0 %v4290
      %4360 = vmatprep.subr.mxu0 %v4293
      %4361 = vmatpush1.xpose.msra.mxu0 %v4292
      %4362 = vmatprep.subr.mxu0 %v4295
      %4363 = vmatpush1.xpose.msra.mxu0 %v4294
      %4364 = vmatprep.subr.mxu0 %v4297
      %4365 = vmatpush1.xpose.msra.mxu0 %v4296
      %4366 = vmatprep.subr.mxu0 %v4299
      %4367 = vmatpush1.xpose.msra.mxu0 %v4298
      %4368 = vmatprep.subr.mxu0 %v4301
      %4369 = vmatpush1.xpose.msra.mxu0 %v4300
      %4370 = vmatprep.subr.mxu0 %v4303
      %4371 = vmatpush1.xpose.msra.mxu0 %v4302
      %4372 = vmatprep.subr.mxu0 %v4305
      %4373 = vmatpush1.xpose.msra.mxu0 %v4304
      %4374 = vmatprep.subr.mxu0 %v4307
      %4375 = vmatpush1.xpose.msra.mxu0 %v4306
      %4376 = vmatprep.mubr.f32.mxu0 %v4309
      %4377 = vmatmul.mubr.f32.gmra.mrb[0].mxu0 %v4308
      %v4378 = vpop.f32.mrb[0].mxu0
      %v4379 = vadd.f32 0.0, %v4378
      %v4380 = vpop.f32.mrb[0].mxu0
      %v4381 = vadd.f32 0.0, %v4380
      %4382 = vdwg.mxu0
      %v4385 = vrot.slane %v2395, 6
      %v4386 = vrot.slane %v2397, 6
      %v4391 = vrot.slane %v3389, 4
      %v4392 = vrot.slane %v3391, 4
      %v4397 = vrot.slane %v4379, 2
      %v4398 = vrot.slane %v4381, 2
      %v4401 = vsel %vm418, %v1401, %v4385
      %v4402 = vsel %vm418, %v1403, %v4386
      %v4403 = vsel %vm590, %v4401, %v4391
      %v4404 = vsel %vm590, %v4402, %v4392
      %vm4405 = vcmask 1045504
      %v4406 = vsel %vm4405, %v4403, %v4397
      %v4407 = vsel %vm4405, %v4404, %v4398
      %4408 = vst [vmem:[%s293] sm:$0xff] %v4406
      %4409 = vst [vmem:[%s293 + $0x8] sm:$0xff] %v4407
      %p4410 = scmp.lt.s32.totalorder %s20, 1
      %s4411 = scalar_select %p4410, %s20, 1
      %p4412 = scmp.lt.s32.totalorder %s19, 1
      %s4413 = scalar_select %p4412, %s19, 1
      %s4414 = smul.addr %s4413, 2
      %s4415 = smul.addr %s4411, 4
      %s4416 = sadd.s32 %s4414, %s4415
      %s4417 = smul.addr %s4416, 8
      %s4418 = scalar_lea.vmem %s4, %s4417
      // Predicated region
      $region37: #{mhsa_2g_forward.1} parent=35 // pred_check
        %p4419 = pneg %p153
      $region38: #{mhsa_2g_forward.1} parent=35 // pred_check_branch
        %4421 = sbr.rel (%p4419) target = $region40
      $region39: #{mhsa_2g_forward.1} parent=35 // pred_region
        _
      $region40: #{mhsa_2g_forward.1} parent=35 // pred_fallthru
        _
    $region36: #{mhsa_2g_forward.1} parent=5 // pred_fallthru
      _
    %p4422 = scmp.le.s32.totalorder 2, %s10
    // Predicated region
    $region41: #{mhsa_2g_forward.1} parent=5 // pred_check
      %p4423 = pneg %p4422
    $region42: #{mhsa_2g_forward.1} parent=5 // pred_check_branch
      %4425 = sbr.rel (%p4423) target = $region44
    $region43: #{mhsa_2g_forward.1} parent=5 // pred_region
      %s4426 = ssub.s32 %s10, 2
      // Predicated region
      $region45: #{mhsa_2g_forward.1} parent=43 // pred_check
        %p4427 = pneg %p159
      $region46: #{mhsa_2g_forward.1} parent=43 // pred_check_branch
        %4429 = sbr.rel (%p4427) target = $region48
      $region47: #{mhsa_2g_forward.1} parent=43 // pred_region
        %p4430 = scmp.lt.s32.totalorder %s22, 1
        %s4431 = scalar_select %p4430, %s22, 1
        %p4432 = scmp.lt.s32.totalorder %s21, 1
        %s4433 = scalar_select %p4432, %s21, 1
        %s4434 = smul.addr %s4433, 2
        %s4435 = smul.addr %s4431, 4
        %s4436 = sadd.s32 %s4434, %s4435
        %s4437 = smul.addr %s4436, 8
        %s4438 = scalar_lea.vmem %s4, %s4437
      $region48: #{mhsa_2g_forward.1} parent=43 // pred_fallthru
        _
    $region44: #{mhsa_2g_forward.1} parent=5 // pred_fallthru
      _
  $region6: #{mhsa_2g_forward.1} parent=0 // loop_footer
    %s14 = sadd.s32 1, %s10
  $region7: #{mhsa_2g_forward.1} parent=0 // loop_footer_branch
    %9 = sbr.rel target = $region3
  $region8: #{mhsa_2g_forward.1} parent=0 // loop_exit
    _

</llo_original>
